<compile_context>
chip_gen: v5e
topology: v5e:2x2
jax: 0.10.0
libtpu: 0.0.40
codegen_flags: <defaults>
</compile_context>

<pallas_src>
import functools
import math

import jax
import jax.numpy as jnp
from jax.experimental import pallas as pl
from jax.experimental.pallas import tpu as pltpu


CONFIG = dict(
    vocab_size=100,
    type_vocab_size=2,
    max_position_embeddings=64,
    embedding_size=16,
    hidden_size=32,
    num_attention_heads=4,
    intermediate_size=64,
    num_hidden_layers=2,     # all layers share the same parameters (ALBERT)
)

_GELU_C = 0.7978845608028654   # sqrt(2/pi)
_LN_EPS = 1e-12
_MASK_NEG = -10000.0


# --------------------------- in-kernel helpers ------------------------------

def _layernorm(x, g, b, eps):
    mean = jnp.mean(x, axis=-1, keepdims=True)
    var = jnp.mean((x - mean) ** 2, axis=-1, keepdims=True)
    return (x - mean) * jax.lax.rsqrt(var + eps) * g + b


def _gelu_new(x):
    return 0.5 * x * (1.0 + jnp.tanh(_GELU_C * (x + 0.044715 * x * x * x)))


# ---------------------------- fused model kernel ----------------------------

def _pair_model_kernel(emb_ref, mask_ref,
                       eln_g_ref, eln_b_ref, emap_w_ref, emap_b_ref,
                       qkv_w_ref, qkv_b_ref, ao_w_ref, ao_b_ref,
                       aln_g_ref, aln_b_ref,
                       ffn_w_ref, ffn_b_ref, fo_w_ref, fo_b_ref,
                       fln_g_ref, fln_b_ref,
                       pool_w_ref, pool_b_ref, clf_w_ref, clf_b_ref,
                       out_ref,
                       ctx_ref,
                       *, B, S, n_heads, n_layers):
    H = emap_w_ref.shape[1]
    D = H // n_heads
    scale = 1.0 / math.sqrt(D)

    # ---- embeddings: LayerNorm (no residual) + E -> H projection ----
    emb = _layernorm(emb_ref[...], eln_g_ref[...], eln_b_ref[...], _LN_EPS)
    h = jnp.dot(emb, emap_w_ref[...],
                preferred_element_type=jnp.float32) + emap_b_ref[...]

    # additive attention bias: 0 where kept, -10000 where padded
    bias_full = (1.0 - mask_ref[...]) * _MASK_NEG          # (B, S)

    qkv_w = qkv_w_ref[...]
    qkv_b = qkv_b_ref[...]
    ao_w, ao_b = ao_w_ref[...], ao_b_ref[...]
    aln_g, aln_b = aln_g_ref[...], aln_b_ref[...]
    ffn_w, ffn_b = ffn_w_ref[...], ffn_b_ref[...]
    fo_w, fo_b = fo_w_ref[...], fo_b_ref[...]
    fln_g, fln_b = fln_g_ref[...], fln_b_ref[...]

    # ---- shared (ALBERT) encoder layers, fully unrolled, VMEM resident ----
    for _ in range(n_layers):
        # fused Q/K/V projection: one lane-dense (B*S, 3H) matmul
        qkv = jnp.dot(h, qkv_w, preferred_element_type=jnp.float32) + qkv_b

        for b in range(B):
            r0 = b * S
            bias = bias_full[b:b + 1, :]                    # (1, S)
            for hh in range(n_heads):
                c0 = hh * D
                q = qkv[r0:r0 + S, c0:c0 + D]               # (S, D) lane slice
                k = qkv[r0:r0 + S, H + c0:H + c0 + D]
                v = qkv[r0:r0 + S, 2 * H + c0:2 * H + c0 + D]
                s = jnp.einsum("qd,kd->qk", q, k,
                               preferred_element_type=jnp.float32) * scale + bias
                s = s - jnp.max(s, axis=-1, keepdims=True)
                p = jnp.exp(s)
                p = p * pl.reciprocal(jnp.sum(p, axis=-1, keepdims=True),
                                      approx=True)
                ctx_ref[r0:r0 + S, c0:c0 + D] = jnp.dot(
                    p, v, preferred_element_type=jnp.float32)

        ctx = ctx_ref[...]                                  # (B*S, H)

        attn_out = jnp.dot(ctx, ao_w,
                           preferred_element_type=jnp.float32) + ao_b
        h = _layernorm(attn_out + h, aln_g, aln_b, _LN_EPS)

        ffn = _gelu_new(jnp.dot(h, ffn_w,
                                preferred_element_type=jnp.float32) + ffn_b)
        ffn_out = jnp.dot(ffn, fo_w,
                          preferred_element_type=jnp.float32) + fo_b
        h = _layernorm(ffn_out + h, fln_g, fln_b, _LN_EPS)

    # ---- pooler on token 0 of each sequence + classification head ----
    pool_w, pool_b = pool_w_ref[...], pool_b_ref[...]
    clf_w_row, clf_b = clf_w_ref[...], clf_b_ref[...]       # (1, H), (1, 1)
    for b in range(B):
        h0 = h[b * S:b * S + 1, :]                          # (1, H) first token
        pooled = jnp.tanh(jnp.dot(h0, pool_w,
                                  preferred_element_type=jnp.float32) + pool_b)
        # TODO(synk): dropout omitted (inference / eval mode).
        out_ref[b:b + 1, :] = (jnp.sum(pooled * clf_w_row, axis=-1,
                                       keepdims=True) + clf_b)


# ------------------------------ parameters ----------------------------------

def init_params(key, cfg):
    ks = iter(jax.random.split(key, 32))

    def w(shape):
        return jax.random.normal(next(ks), shape, jnp.float32) * 0.02

    E, H, I = cfg["embedding_size"], cfg["hidden_size"], cfg["intermediate_size"]
    p = {
        # embeddings
        "word_emb": w((cfg["vocab_size"], E)),
        "pos_emb": w((cfg["max_position_embeddings"], E)),
        "tok_type_emb": w((cfg["type_vocab_size"], E)),
        "emb_ln_g": jnp.ones((E,), jnp.float32),
        "emb_ln_b": jnp.zeros((E,), jnp.float32),
        # embedding -> hidden projection
        "emb_map_w": w((E, H)), "emb_map_b": jnp.zeros((H,), jnp.float32),
        # shared transformer layer (attention)
        "q_w": w((H, H)), "q_b": jnp.zeros((H,), jnp.float32),
        "k_w": w((H, H)), "k_b": jnp.zeros((H,), jnp.float32),
        "v_w": w((H, H)), "v_b": jnp.zeros((H,), jnp.float32),
        "attn_out_w": w((H, H)), "attn_out_b": jnp.zeros((H,), jnp.float32),
        "attn_ln_g": jnp.ones((H,), jnp.float32),
        "attn_ln_b": jnp.zeros((H,), jnp.float32),
        # shared transformer layer (FFN)
        "ffn_w": w((H, I)), "ffn_b": jnp.zeros((I,), jnp.float32),
        "ffn_out_w": w((I, H)), "ffn_out_b": jnp.zeros((H,), jnp.float32),
        "ffn_ln_g": jnp.ones((H,), jnp.float32),
        "ffn_ln_b": jnp.zeros((H,), jnp.float32),
        # pooler
        "pool_w": w((H, H)), "pool_b": jnp.zeros((H,), jnp.float32),
        # classification head: Linear(hidden_size, 1)
        "clf_w": w((H, 1)), "clf_b": jnp.zeros((1,), jnp.float32),
    }
    return p


# ------------------------------- forward ------------------------------------

def pair_model_forward(params, inputs, token_type, masks, cfg=CONFIG):
    """Mirrors PairModel.forward(inputs, token_type, masks) -> (B, 1)."""
    B, S = inputs.shape
    E, H = cfg["embedding_size"], cfg["hidden_size"]

    # embedding gathers (plain-JAX glue; data-dependent vocab lookups)
    emb = (jnp.take(params["word_emb"], inputs, axis=0)
           + jnp.take(params["tok_type_emb"], token_type, axis=0)
           + params["pos_emb"][None, :S, :])
    emb2d = emb.reshape(B * S, E).astype(jnp.float32)
    mask_f = masks.astype(jnp.float32)                      # (B, S), 1 = keep

    # fuse Q/K/V weights into one (H, 3H) slab for a single lane-dense matmul
    qkv_w = jnp.concatenate([params["q_w"], params["k_w"], params["v_w"]], axis=1)
    qkv_b = jnp.concatenate(
        [params["q_b"], params["k_b"], params["v_b"]]).reshape(1, 3 * H)

    row = lambda v: v.reshape(1, -1)

    operands = (
        emb2d, mask_f,
        row(params["emb_ln_g"]), row(params["emb_ln_b"]),
        params["emb_map_w"], row(params["emb_map_b"]),
        qkv_w, qkv_b,
        params["attn_out_w"], row(params["attn_out_b"]),
        row(params["attn_ln_g"]), row(params["attn_ln_b"]),
        params["ffn_w"], row(params["ffn_b"]),
        params["ffn_out_w"], row(params["ffn_out_b"]),
        row(params["ffn_ln_g"]), row(params["ffn_ln_b"]),
        params["pool_w"], row(params["pool_b"]),
        params["clf_w"].reshape(1, H), row(params["clf_b"]),
    )

    kernel = functools.partial(
        _pair_model_kernel, B=B, S=S,
        n_heads=cfg["num_attention_heads"],
        n_layers=cfg["num_hidden_layers"])

    return pl.pallas_call(
        kernel,
        out_shape=jax.ShapeDtypeStruct((B, 1), jnp.float32),
        scratch_shapes=[pltpu.VMEM((B * S, H), jnp.float32)],  # attention ctx
    )(*operands)


# --------------------------------- main --------------------------------------

if __name__ == "__main__":
    key = jax.random.PRNGKey(0)
    k_param, k_ids, k_tt = jax.random.split(key, 3)

    B, S = 2, 8
    params = init_params(k_param, CONFIG)

    inputs = jax.random.randint(k_ids, (B, S), 0, CONFIG["vocab_size"],
                                dtype=jnp.int32)
    token_type = jax.random.randint(k_tt, (B, S), 0, CONFIG["type_vocab_size"],
                                    dtype=jnp.int32)
    masks = jnp.ones((B, S), jnp.int32).at[:, S - 2:].set(0)   # last 2 tokens padded

    fwd = jax.jit(pair_model_forward)
    out = fwd(params, inputs, token_type, masks)
    out = jax.block_until_ready(out)
    assert out.shape == (B, 1) and out.dtype == jnp.float32
    print("KERNEL_OK")
</pallas_src>

<mosaic_0001>
module attributes {stable_mosaic.version = 11 : i64} {
  func.func @_pair_model_kernel(%arg0: memref<16x16xf32, #tpu.memory_space<vmem>>, %arg1: memref<2x8xf32, #tpu.memory_space<vmem>>, %arg2: memref<1x16xf32, #tpu.memory_space<vmem>>, %arg3: memref<1x16xf32, #tpu.memory_space<vmem>>, %arg4: memref<16x32xf32, #tpu.memory_space<vmem>>, %arg5: memref<1x32xf32, #tpu.memory_space<vmem>>, %arg6: memref<32x96xf32, #tpu.memory_space<vmem>>, %arg7: memref<1x96xf32, #tpu.memory_space<vmem>>, %arg8: memref<32x32xf32, #tpu.memory_space<vmem>>, %arg9: memref<1x32xf32, #tpu.memory_space<vmem>>, %arg10: memref<1x32xf32, #tpu.memory_space<vmem>>, %arg11: memref<1x32xf32, #tpu.memory_space<vmem>>, %arg12: memref<32x64xf32, #tpu.memory_space<vmem>>, %arg13: memref<1x64xf32, #tpu.memory_space<vmem>>, %arg14: memref<64x32xf32, #tpu.memory_space<vmem>>, %arg15: memref<1x32xf32, #tpu.memory_space<vmem>>, %arg16: memref<1x32xf32, #tpu.memory_space<vmem>>, %arg17: memref<1x32xf32, #tpu.memory_space<vmem>>, %arg18: memref<32x32xf32, #tpu.memory_space<vmem>>, %arg19: memref<1x32xf32, #tpu.memory_space<vmem>>, %arg20: memref<1x32xf32, #tpu.memory_space<vmem>>, %arg21: memref<1x1xf32, #tpu.memory_space<vmem>>, %arg22: memref<2x1xf32, #tpu.memory_space<vmem>>, %arg23: memref<16x32xf32, #tpu.memory_space<vmem>>) attributes {dimension_semantics = [], scalar_prefetch = 0 : i64, scratch_operands = 1 : i64, tpu.core_type = #tpu.core_type<tc>} {
    %c0 = arith.constant 0 : index
    %c0_0 = arith.constant 0 : index
    %0 = vector.load %arg0[%c0, %c0_0] : memref<16x16xf32, #tpu.memory_space<vmem>>, vector<16x16xf32>
    %c0_1 = arith.constant 0 : index
    %c0_2 = arith.constant 0 : index
    %1 = vector.load %arg2[%c0_1, %c0_2] : memref<1x16xf32, #tpu.memory_space<vmem>>, vector<1x16xf32>
    %c0_3 = arith.constant 0 : index
    %c0_4 = arith.constant 0 : index
    %2 = vector.load %arg3[%c0_3, %c0_4] : memref<1x16xf32, #tpu.memory_space<vmem>>, vector<1x16xf32>
    %cst = arith.constant dense<0.000000e+00> : vector<16xf32>
    %3 = vector.multi_reduction <add>, %0, %cst [1] : vector<16x16xf32> to vector<16xf32>
    %4 = vector.shape_cast %3 : vector<16xf32> to vector<16x1xf32>
    %cst_5 = arith.constant 1.600000e+01 : f32
    %5 = vector.broadcast %cst_5 : f32 to vector<16x1xf32>
    %6 = arith.divf %4, %5 : vector<16x1xf32>
    %7 = vector.broadcast %6 : vector<16x1xf32> to vector<16x16xf32>
    %8 = arith.subf %0, %7 : vector<16x16xf32>
    %9 = arith.mulf %8, %8 : vector<16x16xf32>
    %cst_6 = arith.constant dense<0.000000e+00> : vector<16xf32>
    %10 = vector.multi_reduction <add>, %9, %cst_6 [1] : vector<16x16xf32> to vector<16xf32>
    %11 = vector.shape_cast %10 : vector<16xf32> to vector<16x1xf32>
    %cst_7 = arith.constant 1.600000e+01 : f32
    %12 = vector.broadcast %cst_7 : f32 to vector<16x1xf32>
    %13 = arith.divf %11, %12 : vector<16x1xf32>
    %14 = vector.broadcast %6 : vector<16x1xf32> to vector<16x16xf32>
    %15 = arith.subf %0, %14 : vector<16x16xf32>
    %cst_8 = arith.constant 9.99999996E-13 : f32
    %16 = vector.broadcast %cst_8 : f32 to vector<16x1xf32>
    %17 = arith.addf %13, %16 : vector<16x1xf32>
    %18 = math.rsqrt %17 : vector<16x1xf32>
    %19 = vector.broadcast %18 : vector<16x1xf32> to vector<16x16xf32>
    %20 = arith.mulf %15, %19 : vector<16x16xf32>
    %21 = vector.broadcast %1 : vector<1x16xf32> to vector<16x16xf32>
    %22 = arith.mulf %20, %21 : vector<16x16xf32>
    %23 = vector.broadcast %2 : vector<1x16xf32> to vector<16x16xf32>
    %24 = arith.addf %22, %23 : vector<16x16xf32>
    %c0_9 = arith.constant 0 : index
    %c0_10 = arith.constant 0 : index
    %25 = vector.load %arg4[%c0_9, %c0_10] : memref<16x32xf32, #tpu.memory_space<vmem>>, vector<16x32xf32>
    %cst_11 = arith.constant dense<0.000000e+00> : vector<16x32xf32>
    %26 = tpu.matmul %24, %25, %cst_11 {dimension_numbers = #tpu.dot_dimension_numbers<[1], [0], [0], [1], [0, 0, 1, 1], [], []>} : vector<16x16xf32>, vector<16x32xf32>, vector<16x32xf32> -> vector<16x32xf32>
    %c0_12 = arith.constant 0 : index
    %c0_13 = arith.constant 0 : index
    %27 = vector.load %arg5[%c0_12, %c0_13] : memref<1x32xf32, #tpu.memory_space<vmem>>, vector<1x32xf32>
    %28 = vector.broadcast %27 : vector<1x32xf32> to vector<16x32xf32>
    %29 = arith.addf %26, %28 : vector<16x32xf32>
    %c0_14 = arith.constant 0 : index
    %c0_15 = arith.constant 0 : index
    %30 = vector.load %arg1[%c0_14, %c0_15] : memref<2x8xf32, #tpu.memory_space<vmem>>, vector<2x8xf32>
    %cst_16 = arith.constant 1.000000e+00 : f32
    %31 = vector.broadcast %cst_16 : f32 to vector<2x8xf32>
    %32 = arith.subf %31, %30 : vector<2x8xf32>
    %cst_17 = arith.constant -1.000000e+04 : f32
    %33 = vector.broadcast %cst_17 : f32 to vector<2x8xf32>
    %34 = arith.mulf %32, %33 : vector<2x8xf32>
    %c0_18 = arith.constant 0 : index
    %c0_19 = arith.constant 0 : index
    %35 = vector.load %arg6[%c0_18, %c0_19] : memref<32x96xf32, #tpu.memory_space<vmem>>, vector<32x96xf32>
    %c0_20 = arith.constant 0 : index
    %c0_21 = arith.constant 0 : index
    %36 = vector.load %arg7[%c0_20, %c0_21] : memref<1x96xf32, #tpu.memory_space<vmem>>, vector<1x96xf32>
    %c0_22 = arith.constant 0 : index
    %c0_23 = arith.constant 0 : index
    %37 = vector.load %arg8[%c0_22, %c0_23] : memref<32x32xf32, #tpu.memory_space<vmem>>, vector<32x32xf32>
    %c0_24 = arith.constant 0 : index
    %c0_25 = arith.constant 0 : index
    %38 = vector.load %arg9[%c0_24, %c0_25] : memref<1x32xf32, #tpu.memory_space<vmem>>, vector<1x32xf32>
    %c0_26 = arith.constant 0 : index
    %c0_27 = arith.constant 0 : index
    %39 = vector.load %arg10[%c0_26, %c0_27] : memref<1x32xf32, #tpu.memory_space<vmem>>, vector<1x32xf32>
    %c0_28 = arith.constant 0 : index
    %c0_29 = arith.constant 0 : index
    %40 = vector.load %arg11[%c0_28, %c0_29] : memref<1x32xf32, #tpu.memory_space<vmem>>, vector<1x32xf32>
    %c0_30 = arith.constant 0 : index
    %c0_31 = arith.constant 0 : index
    %41 = vector.load %arg12[%c0_30, %c0_31] : memref<32x64xf32, #tpu.memory_space<vmem>>, vector<32x64xf32>
    %c0_32 = arith.constant 0 : index
    %c0_33 = arith.constant 0 : index
    %42 = vector.load %arg13[%c0_32, %c0_33] : memref<1x64xf32, #tpu.memory_space<vmem>>, vector<1x64xf32>
    %c0_34 = arith.constant 0 : index
    %c0_35 = arith.constant 0 : index
    %43 = vector.load %arg14[%c0_34, %c0_35] : memref<64x32xf32, #tpu.memory_space<vmem>>, vector<64x32xf32>
    %c0_36 = arith.constant 0 : index
    %c0_37 = arith.constant 0 : index
    %44 = vector.load %arg15[%c0_36, %c0_37] : memref<1x32xf32, #tpu.memory_space<vmem>>, vector<1x32xf32>
    %c0_38 = arith.constant 0 : index
    %c0_39 = arith.constant 0 : index
    %45 = vector.load %arg16[%c0_38, %c0_39] : memref<1x32xf32, #tpu.memory_space<vmem>>, vector<1x32xf32>
    %c0_40 = arith.constant 0 : index
    %c0_41 = arith.constant 0 : index
    %46 = vector.load %arg17[%c0_40, %c0_41] : memref<1x32xf32, #tpu.memory_space<vmem>>, vector<1x32xf32>
    %cst_42 = arith.constant dense<0.000000e+00> : vector<16x96xf32>
    %47 = tpu.matmul %29, %35, %cst_42 {dimension_numbers = #tpu.dot_dimension_numbers<[1], [0], [0], [1], [0, 0, 1, 1], [], []>} : vector<16x32xf32>, vector<32x96xf32>, vector<16x96xf32> -> vector<16x96xf32>
    %48 = vector.broadcast %36 : vector<1x96xf32> to vector<16x96xf32>
    %49 = arith.addf %47, %48 : vector<16x96xf32>
    %50 = vector.extract_strided_slice %34 {offsets = [0, 0], sizes = [1, 8], strides = [1, 1]} : vector<2x8xf32> to vector<1x8xf32>
    %51 = vector.extract_strided_slice %49 {offsets = [0, 0], sizes = [8, 8], strides = [1, 1]} : vector<16x96xf32> to vector<8x8xf32>
    %52 = vector.extract_strided_slice %49 {offsets = [0, 32], sizes = [8, 8], strides = [1, 1]} : vector<16x96xf32> to vector<8x8xf32>
    %53 = vector.extract_strided_slice %49 {offsets = [0, 64], sizes = [8, 8], strides = [1, 1]} : vector<16x96xf32> to vector<8x8xf32>
    "tpu.trace_start"() <{level = 10 : i32, message = "qd,kd->qk"}> : () -> ()
    %cst_43 = arith.constant dense<0.000000e+00> : vector<8x8xf32>
    %54 = tpu.matmul %51, %52, %cst_43 {dimension_numbers = #tpu.dot_dimension_numbers<[1], [1], [0], [0], [0, 0, 1, 0], [], []>} : vector<8x8xf32>, vector<8x8xf32>, vector<8x8xf32> -> vector<8x8xf32>
    "tpu.trace_stop"() : () -> ()
    %cst_44 = arith.constant 0.353553385 : f32
    %55 = vector.broadcast %cst_44 : f32 to vector<8x8xf32>
    %56 = arith.mulf %54, %55 : vector<8x8xf32>
    %57 = vector.broadcast %50 : vector<1x8xf32> to vector<8x8xf32>
    %58 = arith.addf %56, %57 : vector<8x8xf32>
    %cst_45 = arith.constant dense<0xFF800000> : vector<8xf32>
    %59 = vector.multi_reduction <maximumf>, %58, %cst_45 [1] : vector<8x8xf32> to vector<8xf32>
    %60 = vector.shape_cast %59 : vector<8xf32> to vector<8x1xf32>
    %61 = vector.broadcast %60 : vector<8x1xf32> to vector<8x8xf32>
    %62 = arith.subf %58, %61 : vector<8x8xf32>
    %63 = math.exp %62 : vector<8x8xf32>
    %cst_46 = arith.constant dense<0.000000e+00> : vector<8xf32>
    %64 = vector.multi_reduction <add>, %63, %cst_46 [1] : vector<8x8xf32> to vector<8xf32>
    %65 = vector.shape_cast %64 : vector<8xf32> to vector<8x1xf32>
    %66 = tpu.reciprocal %65 {approx = true} : vector<8x1xf32> -> vector<8x1xf32>
    %67 = vector.broadcast %66 : vector<8x1xf32> to vector<8x8xf32>
    %68 = arith.mulf %63, %67 : vector<8x8xf32>
    %cst_47 = arith.constant dense<0.000000e+00> : vector<8x8xf32>
    %69 = tpu.matmul %68, %53, %cst_47 {dimension_numbers = #tpu.dot_dimension_numbers<[1], [0], [0], [1], [0, 0, 1, 1], [], []>} : vector<8x8xf32>, vector<8x8xf32>, vector<8x8xf32> -> vector<8x8xf32>
    %c0_48 = arith.constant 0 : index
    %c0_49 = arith.constant 0 : index
    %70 = vector.load %arg23[%c0_48, %c0_49] : memref<16x32xf32, #tpu.memory_space<vmem>>, vector<8x8xf32>
    tpu.vector_store %arg23[%c0_48, %c0_49], %69 {strides = array<i32>} : memref<16x32xf32, #tpu.memory_space<vmem>>, vector<8x8xf32>,
    %71 = vector.extract_strided_slice %49 {offsets = [0, 8], sizes = [8, 8], strides = [1, 1]} : vector<16x96xf32> to vector<8x8xf32>
    %72 = vector.extract_strided_slice %49 {offsets = [0, 40], sizes = [8, 8], strides = [1, 1]} : vector<16x96xf32> to vector<8x8xf32>
    %73 = vector.extract_strided_slice %49 {offsets = [0, 72], sizes = [8, 8], strides = [1, 1]} : vector<16x96xf32> to vector<8x8xf32>
    "tpu.trace_start"() <{level = 10 : i32, message = "qd,kd->qk"}> : () -> ()
    %cst_50 = arith.constant dense<0.000000e+00> : vector<8x8xf32>
    %74 = tpu.matmul %71, %72, %cst_50 {dimension_numbers = #tpu.dot_dimension_numbers<[1], [1], [0], [0], [0, 0, 1, 0], [], []>} : vector<8x8xf32>, vector<8x8xf32>, vector<8x8xf32> -> vector<8x8xf32>
    "tpu.trace_stop"() : () -> ()
    %cst_51 = arith.constant 0.353553385 : f32
    %75 = vector.broadcast %cst_51 : f32 to vector<8x8xf32>
    %76 = arith.mulf %74, %75 : vector<8x8xf32>
    %77 = vector.broadcast %50 : vector<1x8xf32> to vector<8x8xf32>
    %78 = arith.addf %76, %77 : vector<8x8xf32>
    %cst_52 = arith.constant dense<0xFF800000> : vector<8xf32>
    %79 = vector.multi_reduction <maximumf>, %78, %cst_52 [1] : vector<8x8xf32> to vector<8xf32>
    %80 = vector.shape_cast %79 : vector<8xf32> to vector<8x1xf32>
    %81 = vector.broadcast %80 : vector<8x1xf32> to vector<8x8xf32>
    %82 = arith.subf %78, %81 : vector<8x8xf32>
    %83 = math.exp %82 : vector<8x8xf32>
    %cst_53 = arith.constant dense<0.000000e+00> : vector<8xf32>
    %84 = vector.multi_reduction <add>, %83, %cst_53 [1] : vector<8x8xf32> to vector<8xf32>
    %85 = vector.shape_cast %84 : vector<8xf32> to vector<8x1xf32>
    %86 = tpu.reciprocal %85 {approx = true} : vector<8x1xf32> -> vector<8x1xf32>
    %87 = vector.broadcast %86 : vector<8x1xf32> to vector<8x8xf32>
    %88 = arith.mulf %83, %87 : vector<8x8xf32>
    %cst_54 = arith.constant dense<0.000000e+00> : vector<8x8xf32>
    %89 = tpu.matmul %88, %73, %cst_54 {dimension_numbers = #tpu.dot_dimension_numbers<[1], [0], [0], [1], [0, 0, 1, 1], [], []>} : vector<8x8xf32>, vector<8x8xf32>, vector<8x8xf32> -> vector<8x8xf32>
    %c0_55 = arith.constant 0 : index
    %c8 = arith.constant 8 : index
    %90 = vector.load %arg23[%c0_55, %c8] : memref<16x32xf32, #tpu.memory_space<vmem>>, vector<8x8xf32>
    tpu.vector_store %arg23[%c0_55, %c8], %89 {strides = array<i32>} : memref<16x32xf32, #tpu.memory_space<vmem>>, vector<8x8xf32>,
    %91 = vector.extract_strided_slice %49 {offsets = [0, 16], sizes = [8, 8], strides = [1, 1]} : vector<16x96xf32> to vector<8x8xf32>
    %92 = vector.extract_strided_slice %49 {offsets = [0, 48], sizes = [8, 8], strides = [1, 1]} : vector<16x96xf32> to vector<8x8xf32>
    %93 = vector.extract_strided_slice %49 {offsets = [0, 80], sizes = [8, 8], strides = [1, 1]} : vector<16x96xf32> to vector<8x8xf32>
    "tpu.trace_start"() <{level = 10 : i32, message = "qd,kd->qk"}> : () -> ()
    %cst_56 = arith.constant dense<0.000000e+00> : vector<8x8xf32>
    %94 = tpu.matmul %91, %92, %cst_56 {dimension_numbers = #tpu.dot_dimension_numbers<[1], [1], [0], [0], [0, 0, 1, 0], [], []>} : vector<8x8xf32>, vector<8x8xf32>, vector<8x8xf32> -> vector<8x8xf32>
    "tpu.trace_stop"() : () -> ()
    %cst_57 = arith.constant 0.353553385 : f32
    %95 = vector.broadcast %cst_57 : f32 to vector<8x8xf32>
    %96 = arith.mulf %94, %95 : vector<8x8xf32>
    %97 = vector.broadcast %50 : vector<1x8xf32> to vector<8x8xf32>
    %98 = arith.addf %96, %97 : vector<8x8xf32>
    %cst_58 = arith.constant dense<0xFF800000> : vector<8xf32>
    %99 = vector.multi_reduction <maximumf>, %98, %cst_58 [1] : vector<8x8xf32> to vector<8xf32>
    %100 = vector.shape_cast %99 : vector<8xf32> to vector<8x1xf32>
    %101 = vector.broadcast %100 : vector<8x1xf32> to vector<8x8xf32>
    %102 = arith.subf %98, %101 : vector<8x8xf32>
    %103 = math.exp %102 : vector<8x8xf32>
    %cst_59 = arith.constant dense<0.000000e+00> : vector<8xf32>
    %104 = vector.multi_reduction <add>, %103, %cst_59 [1] : vector<8x8xf32> to vector<8xf32>
    %105 = vector.shape_cast %104 : vector<8xf32> to vector<8x1xf32>
    %106 = tpu.reciprocal %105 {approx = true} : vector<8x1xf32> -> vector<8x1xf32>
    %107 = vector.broadcast %106 : vector<8x1xf32> to vector<8x8xf32>
    %108 = arith.mulf %103, %107 : vector<8x8xf32>
    %cst_60 = arith.constant dense<0.000000e+00> : vector<8x8xf32>
    %109 = tpu.matmul %108, %93, %cst_60 {dimension_numbers = #tpu.dot_dimension_numbers<[1], [0], [0], [1], [0, 0, 1, 1], [], []>} : vector<8x8xf32>, vector<8x8xf32>, vector<8x8xf32> -> vector<8x8xf32>
    %c0_61 = arith.constant 0 : index
    %c16 = arith.constant 16 : index
    %110 = vector.load %arg23[%c0_61, %c16] : memref<16x32xf32, #tpu.memory_space<vmem>>, vector<8x8xf32>
    tpu.vector_store %arg23[%c0_61, %c16], %109 {strides = array<i32>} : memref<16x32xf32, #tpu.memory_space<vmem>>, vector<8x8xf32>,
    %111 = vector.extract_strided_slice %49 {offsets = [0, 24], sizes = [8, 8], strides = [1, 1]} : vector<16x96xf32> to vector<8x8xf32>
    %112 = vector.extract_strided_slice %49 {offsets = [0, 56], sizes = [8, 8], strides = [1, 1]} : vector<16x96xf32> to vector<8x8xf32>
    %113 = vector.extract_strided_slice %49 {offsets = [0, 88], sizes = [8, 8], strides = [1, 1]} : vector<16x96xf32> to vector<8x8xf32>
    "tpu.trace_start"() <{level = 10 : i32, message = "qd,kd->qk"}> : () -> ()
    %cst_62 = arith.constant dense<0.000000e+00> : vector<8x8xf32>
    %114 = tpu.matmul %111, %112, %cst_62 {dimension_numbers = #tpu.dot_dimension_numbers<[1], [1], [0], [0], [0, 0, 1, 0], [], []>} : vector<8x8xf32>, vector<8x8xf32>, vector<8x8xf32> -> vector<8x8xf32>
    "tpu.trace_stop"() : () -> ()
    %cst_63 = arith.constant 0.353553385 : f32
    %115 = vector.broadcast %cst_63 : f32 to vector<8x8xf32>
    %116 = arith.mulf %114, %115 : vector<8x8xf32>
    %117 = vector.broadcast %50 : vector<1x8xf32> to vector<8x8xf32>
    %118 = arith.addf %116, %117 : vector<8x8xf32>
    %cst_64 = arith.constant dense<0xFF800000> : vector<8xf32>
    %119 = vector.multi_reduction <maximumf>, %118, %cst_64 [1] : vector<8x8xf32> to vector<8xf32>
    %120 = vector.shape_cast %119 : vector<8xf32> to vector<8x1xf32>
    %121 = vector.broadcast %120 : vector<8x1xf32> to vector<8x8xf32>
    %122 = arith.subf %118, %121 : vector<8x8xf32>
    %123 = math.exp %122 : vector<8x8xf32>
    %cst_65 = arith.constant dense<0.000000e+00> : vector<8xf32>
    %124 = vector.multi_reduction <add>, %123, %cst_65 [1] : vector<8x8xf32> to vector<8xf32>
    %125 = vector.shape_cast %124 : vector<8xf32> to vector<8x1xf32>
    %126 = tpu.reciprocal %125 {approx = true} : vector<8x1xf32> -> vector<8x1xf32>
    %127 = vector.broadcast %126 : vector<8x1xf32> to vector<8x8xf32>
    %128 = arith.mulf %123, %127 : vector<8x8xf32>
    %cst_66 = arith.constant dense<0.000000e+00> : vector<8x8xf32>
    %129 = tpu.matmul %128, %113, %cst_66 {dimension_numbers = #tpu.dot_dimension_numbers<[1], [0], [0], [1], [0, 0, 1, 1], [], []>} : vector<8x8xf32>, vector<8x8xf32>, vector<8x8xf32> -> vector<8x8xf32>
    %c0_67 = arith.constant 0 : index
    %c24 = arith.constant 24 : index
    %130 = vector.load %arg23[%c0_67, %c24] : memref<16x32xf32, #tpu.memory_space<vmem>>, vector<8x8xf32>
    tpu.vector_store %arg23[%c0_67, %c24], %129 {strides = array<i32>} : memref<16x32xf32, #tpu.memory_space<vmem>>, vector<8x8xf32>,
    %131 = vector.extract_strided_slice %34 {offsets = [1, 0], sizes = [1, 8], strides = [1, 1]} : vector<2x8xf32> to vector<1x8xf32>
    %132 = vector.extract_strided_slice %49 {offsets = [8, 0], sizes = [8, 8], strides = [1, 1]} : vector<16x96xf32> to vector<8x8xf32>
    %133 = vector.extract_strided_slice %49 {offsets = [8, 32], sizes = [8, 8], strides = [1, 1]} : vector<16x96xf32> to vector<8x8xf32>
    %134 = vector.extract_strided_slice %49 {offsets = [8, 64], sizes = [8, 8], strides = [1, 1]} : vector<16x96xf32> to vector<8x8xf32>
    "tpu.trace_start"() <{level = 10 : i32, message = "qd,kd->qk"}> : () -> ()
    %cst_68 = arith.constant dense<0.000000e+00> : vector<8x8xf32>
    %135 = tpu.matmul %132, %133, %cst_68 {dimension_numbers = #tpu.dot_dimension_numbers<[1], [1], [0], [0], [0, 0, 1, 0], [], []>} : vector<8x8xf32>, vector<8x8xf32>, vector<8x8xf32> -> vector<8x8xf32>
    "tpu.trace_stop"() : () -> ()
    %cst_69 = arith.constant 0.353553385 : f32
    %136 = vector.broadcast %cst_69 : f32 to vector<8x8xf32>
    %137 = arith.mulf %135, %136 : vector<8x8xf32>
    %138 = vector.broadcast %131 : vector<1x8xf32> to vector<8x8xf32>
    %139 = arith.addf %137, %138 : vector<8x8xf32>
    %cst_70 = arith.constant dense<0xFF800000> : vector<8xf32>
    %140 = vector.multi_reduction <maximumf>, %139, %cst_70 [1] : vector<8x8xf32> to vector<8xf32>
    %141 = vector.shape_cast %140 : vector<8xf32> to vector<8x1xf32>
    %142 = vector.broadcast %141 : vector<8x1xf32> to vector<8x8xf32>
    %143 = arith.subf %139, %142 : vector<8x8xf32>
    %144 = math.exp %143 : vector<8x8xf32>
    %cst_71 = arith.constant dense<0.000000e+00> : vector<8xf32>
    %145 = vector.multi_reduction <add>, %144, %cst_71 [1] : vector<8x8xf32> to vector<8xf32>
    %146 = vector.shape_cast %145 : vector<8xf32> to vector<8x1xf32>
    %147 = tpu.reciprocal %146 {approx = true} : vector<8x1xf32> -> vector<8x1xf32>
    %148 = vector.broadcast %147 : vector<8x1xf32> to vector<8x8xf32>
    %149 = arith.mulf %144, %148 : vector<8x8xf32>
    %cst_72 = arith.constant dense<0.000000e+00> : vector<8x8xf32>
    %150 = tpu.matmul %149, %134, %cst_72 {dimension_numbers = #tpu.dot_dimension_numbers<[1], [0], [0], [1], [0, 0, 1, 1], [], []>} : vector<8x8xf32>, vector<8x8xf32>, vector<8x8xf32> -> vector<8x8xf32>
    %c8_73 = arith.constant 8 : index
    %c0_74 = arith.constant 0 : index
    %151 = vector.load %arg23[%c8_73, %c0_74] : memref<16x32xf32, #tpu.memory_space<vmem>>, vector<8x8xf32>
    tpu.vector_store %arg23[%c8_73, %c0_74], %150 {strides = array<i32>} : memref<16x32xf32, #tpu.memory_space<vmem>>, vector<8x8xf32>,
    %152 = vector.extract_strided_slice %49 {offsets = [8, 8], sizes = [8, 8], strides = [1, 1]} : vector<16x96xf32> to vector<8x8xf32>
    %153 = vector.extract_strided_slice %49 {offsets = [8, 40], sizes = [8, 8], strides = [1, 1]} : vector<16x96xf32> to vector<8x8xf32>
    %154 = vector.extract_strided_slice %49 {offsets = [8, 72], sizes = [8, 8], strides = [1, 1]} : vector<16x96xf32> to vector<8x8xf32>
    "tpu.trace_start"() <{level = 10 : i32, message = "qd,kd->qk"}> : () -> ()
    %cst_75 = arith.constant dense<0.000000e+00> : vector<8x8xf32>
    %155 = tpu.matmul %152, %153, %cst_75 {dimension_numbers = #tpu.dot_dimension_numbers<[1], [1], [0], [0], [0, 0, 1, 0], [], []>} : vector<8x8xf32>, vector<8x8xf32>, vector<8x8xf32> -> vector<8x8xf32>
    "tpu.trace_stop"() : () -> ()
    %cst_76 = arith.constant 0.353553385 : f32
    %156 = vector.broadcast %cst_76 : f32 to vector<8x8xf32>
    %157 = arith.mulf %155, %156 : vector<8x8xf32>
    %158 = vector.broadcast %131 : vector<1x8xf32> to vector<8x8xf32>
    %159 = arith.addf %157, %158 : vector<8x8xf32>
    %cst_77 = arith.constant dense<0xFF800000> : vector<8xf32>
    %160 = vector.multi_reduction <maximumf>, %159, %cst_77 [1] : vector<8x8xf32> to vector<8xf32>
    %161 = vector.shape_cast %160 : vector<8xf32> to vector<8x1xf32>
    %162 = vector.broadcast %161 : vector<8x1xf32> to vector<8x8xf32>
    %163 = arith.subf %159, %162 : vector<8x8xf32>
    %164 = math.exp %163 : vector<8x8xf32>
    %cst_78 = arith.constant dense<0.000000e+00> : vector<8xf32>
    %165 = vector.multi_reduction <add>, %164, %cst_78 [1] : vector<8x8xf32> to vector<8xf32>
    %166 = vector.shape_cast %165 : vector<8xf32> to vector<8x1xf32>
    %167 = tpu.reciprocal %166 {approx = true} : vector<8x1xf32> -> vector<8x1xf32>
    %168 = vector.broadcast %167 : vector<8x1xf32> to vector<8x8xf32>
    %169 = arith.mulf %164, %168 : vector<8x8xf32>
    %cst_79 = arith.constant dense<0.000000e+00> : vector<8x8xf32>
    %170 = tpu.matmul %169, %154, %cst_79 {dimension_numbers = #tpu.dot_dimension_numbers<[1], [0], [0], [1], [0, 0, 1, 1], [], []>} : vector<8x8xf32>, vector<8x8xf32>, vector<8x8xf32> -> vector<8x8xf32>
    %c8_80 = arith.constant 8 : index
    %c8_81 = arith.constant 8 : index
    %171 = vector.load %arg23[%c8_80, %c8_81] : memref<16x32xf32, #tpu.memory_space<vmem>>, vector<8x8xf32>
    tpu.vector_store %arg23[%c8_80, %c8_81], %170 {strides = array<i32>} : memref<16x32xf32, #tpu.memory_space<vmem>>, vector<8x8xf32>,
    %172 = vector.extract_strided_slice %49 {offsets = [8, 16], sizes = [8, 8], strides = [1, 1]} : vector<16x96xf32> to vector<8x8xf32>
    %173 = vector.extract_strided_slice %49 {offsets = [8, 48], sizes = [8, 8], strides = [1, 1]} : vector<16x96xf32> to vector<8x8xf32>
    %174 = vector.extract_strided_slice %49 {offsets = [8, 80], sizes = [8, 8], strides = [1, 1]} : vector<16x96xf32> to vector<8x8xf32>
    "tpu.trace_start"() <{level = 10 : i32, message = "qd,kd->qk"}> : () -> ()
    %cst_82 = arith.constant dense<0.000000e+00> : vector<8x8xf32>
    %175 = tpu.matmul %172, %173, %cst_82 {dimension_numbers = #tpu.dot_dimension_numbers<[1], [1], [0], [0], [0, 0, 1, 0], [], []>} : vector<8x8xf32>, vector<8x8xf32>, vector<8x8xf32> -> vector<8x8xf32>
    "tpu.trace_stop"() : () -> ()
    %cst_83 = arith.constant 0.353553385 : f32
    %176 = vector.broadcast %cst_83 : f32 to vector<8x8xf32>
    %177 = arith.mulf %175, %176 : vector<8x8xf32>
    %178 = vector.broadcast %131 : vector<1x8xf32> to vector<8x8xf32>
    %179 = arith.addf %177, %178 : vector<8x8xf32>
    %cst_84 = arith.constant dense<0xFF800000> : vector<8xf32>
    %180 = vector.multi_reduction <maximumf>, %179, %cst_84 [1] : vector<8x8xf32> to vector<8xf32>
    %181 = vector.shape_cast %180 : vector<8xf32> to vector<8x1xf32>
    %182 = vector.broadcast %181 : vector<8x1xf32> to vector<8x8xf32>
    %183 = arith.subf %179, %182 : vector<8x8xf32>
    %184 = math.exp %183 : vector<8x8xf32>
    %cst_85 = arith.constant dense<0.000000e+00> : vector<8xf32>
    %185 = vector.multi_reduction <add>, %184, %cst_85 [1] : vector<8x8xf32> to vector<8xf32>
    %186 = vector.shape_cast %185 : vector<8xf32> to vector<8x1xf32>
    %187 = tpu.reciprocal %186 {approx = true} : vector<8x1xf32> -> vector<8x1xf32>
    %188 = vector.broadcast %187 : vector<8x1xf32> to vector<8x8xf32>
    %189 = arith.mulf %184, %188 : vector<8x8xf32>
    %cst_86 = arith.constant dense<0.000000e+00> : vector<8x8xf32>
    %190 = tpu.matmul %189, %174, %cst_86 {dimension_numbers = #tpu.dot_dimension_numbers<[1], [0], [0], [1], [0, 0, 1, 1], [], []>} : vector<8x8xf32>, vector<8x8xf32>, vector<8x8xf32> -> vector<8x8xf32>
    %c8_87 = arith.constant 8 : index
    %c16_88 = arith.constant 16 : index
    %191 = vector.load %arg23[%c8_87, %c16_88] : memref<16x32xf32, #tpu.memory_space<vmem>>, vector<8x8xf32>
    tpu.vector_store %arg23[%c8_87, %c16_88], %190 {strides = array<i32>} : memref<16x32xf32, #tpu.memory_space<vmem>>, vector<8x8xf32>,
    %192 = vector.extract_strided_slice %49 {offsets = [8, 24], sizes = [8, 8], strides = [1, 1]} : vector<16x96xf32> to vector<8x8xf32>
    %193 = vector.extract_strided_slice %49 {offsets = [8, 56], sizes = [8, 8], strides = [1, 1]} : vector<16x96xf32> to vector<8x8xf32>
    %194 = vector.extract_strided_slice %49 {offsets = [8, 88], sizes = [8, 8], strides = [1, 1]} : vector<16x96xf32> to vector<8x8xf32>
    "tpu.trace_start"() <{level = 10 : i32, message = "qd,kd->qk"}> : () -> ()
    %cst_89 = arith.constant dense<0.000000e+00> : vector<8x8xf32>
    %195 = tpu.matmul %192, %193, %cst_89 {dimension_numbers = #tpu.dot_dimension_numbers<[1], [1], [0], [0], [0, 0, 1, 0], [], []>} : vector<8x8xf32>, vector<8x8xf32>, vector<8x8xf32> -> vector<8x8xf32>
    "tpu.trace_stop"() : () -> ()
    %cst_90 = arith.constant 0.353553385 : f32
    %196 = vector.broadcast %cst_90 : f32 to vector<8x8xf32>
    %197 = arith.mulf %195, %196 : vector<8x8xf32>
    %198 = vector.broadcast %131 : vector<1x8xf32> to vector<8x8xf32>
    %199 = arith.addf %197, %198 : vector<8x8xf32>
    %cst_91 = arith.constant dense<0xFF800000> : vector<8xf32>
    %200 = vector.multi_reduction <maximumf>, %199, %cst_91 [1] : vector<8x8xf32> to vector<8xf32>
    %201 = vector.shape_cast %200 : vector<8xf32> to vector<8x1xf32>
    %202 = vector.broadcast %201 : vector<8x1xf32> to vector<8x8xf32>
    %203 = arith.subf %199, %202 : vector<8x8xf32>
    %204 = math.exp %203 : vector<8x8xf32>
    %cst_92 = arith.constant dense<0.000000e+00> : vector<8xf32>
    %205 = vector.multi_reduction <add>, %204, %cst_92 [1] : vector<8x8xf32> to vector<8xf32>
    %206 = vector.shape_cast %205 : vector<8xf32> to vector<8x1xf32>
    %207 = tpu.reciprocal %206 {approx = true} : vector<8x1xf32> -> vector<8x1xf32>
    %208 = vector.broadcast %207 : vector<8x1xf32> to vector<8x8xf32>
    %209 = arith.mulf %204, %208 : vector<8x8xf32>
    %cst_93 = arith.constant dense<0.000000e+00> : vector<8x8xf32>
    %210 = tpu.matmul %209, %194, %cst_93 {dimension_numbers = #tpu.dot_dimension_numbers<[1], [0], [0], [1], [0, 0, 1, 1], [], []>} : vector<8x8xf32>, vector<8x8xf32>, vector<8x8xf32> -> vector<8x8xf32>
    %c8_94 = arith.constant 8 : index
    %c24_95 = arith.constant 24 : index
    %211 = vector.load %arg23[%c8_94, %c24_95] : memref<16x32xf32, #tpu.memory_space<vmem>>, vector<8x8xf32>
    tpu.vector_store %arg23[%c8_94, %c24_95], %210 {strides = array<i32>} : memref<16x32xf32, #tpu.memory_space<vmem>>, vector<8x8xf32>,
    %c0_96 = arith.constant 0 : index
    %c0_97 = arith.constant 0 : index
    %212 = vector.load %arg23[%c0_96, %c0_97] : memref<16x32xf32, #tpu.memory_space<vmem>>, vector<16x32xf32>
    %cst_98 = arith.constant dense<0.000000e+00> : vector<16x32xf32>
    %213 = tpu.matmul %212, %37, %cst_98 {dimension_numbers = #tpu.dot_dimension_numbers<[1], [0], [0], [1], [0, 0, 1, 1], [], []>} : vector<16x32xf32>, vector<32x32xf32>, vector<16x32xf32> -> vector<16x32xf32>
    %214 = vector.broadcast %38 : vector<1x32xf32> to vector<16x32xf32>
    %215 = arith.addf %213, %214 : vector<16x32xf32>
    %216 = arith.addf %215, %29 : vector<16x32xf32>
    %cst_99 = arith.constant dense<0.000000e+00> : vector<16xf32>
    %217 = vector.multi_reduction <add>, %216, %cst_99 [1] : vector<16x32xf32> to vector<16xf32>
    %218 = vector.shape_cast %217 : vector<16xf32> to vector<16x1xf32>
    %cst_100 = arith.constant 3.200000e+01 : f32
    %219 = vector.broadcast %cst_100 : f32 to vector<16x1xf32>
    %220 = arith.divf %218, %219 : vector<16x1xf32>
    %221 = vector.broadcast %220 : vector<16x1xf32> to vector<16x32xf32>
    %222 = arith.subf %216, %221 : vector<16x32xf32>
    %223 = arith.mulf %222, %222 : vector<16x32xf32>
    %cst_101 = arith.constant dense<0.000000e+00> : vector<16xf32>
    %224 = vector.multi_reduction <add>, %223, %cst_101 [1] : vector<16x32xf32> to vector<16xf32>
    %225 = vector.shape_cast %224 : vector<16xf32> to vector<16x1xf32>
    %cst_102 = arith.constant 3.200000e+01 : f32
    %226 = vector.broadcast %cst_102 : f32 to vector<16x1xf32>
    %227 = arith.divf %225, %226 : vector<16x1xf32>
    %228 = vector.broadcast %220 : vector<16x1xf32> to vector<16x32xf32>
    %229 = arith.subf %216, %228 : vector<16x32xf32>
    %cst_103 = arith.constant 9.99999996E-13 : f32
    %230 = vector.broadcast %cst_103 : f32 to vector<16x1xf32>
    %231 = arith.addf %227, %230 : vector<16x1xf32>
    %232 = math.rsqrt %231 : vector<16x1xf32>
    %233 = vector.broadcast %232 : vector<16x1xf32> to vector<16x32xf32>
    %234 = arith.mulf %229, %233 : vector<16x32xf32>
    %235 = vector.broadcast %39 : vector<1x32xf32> to vector<16x32xf32>
    %236 = arith.mulf %234, %235 : vector<16x32xf32>
    %237 = vector.broadcast %40 : vector<1x32xf32> to vector<16x32xf32>
    %238 = arith.addf %236, %237 : vector<16x32xf32>
    %cst_104 = arith.constant dense<0.000000e+00> : vector<16x64xf32>
    %239 = tpu.matmul %238, %41, %cst_104 {dimension_numbers = #tpu.dot_dimension_numbers<[1], [0], [0], [1], [0, 0, 1, 1], [], []>} : vector<16x32xf32>, vector<32x64xf32>, vector<16x64xf32> -> vector<16x64xf32>
    %240 = vector.broadcast %42 : vector<1x64xf32> to vector<16x64xf32>
    %241 = arith.addf %239, %240 : vector<16x64xf32>
    %cst_105 = arith.constant 5.000000e-01 : f32
    %242 = vector.broadcast %cst_105 : f32 to vector<16x64xf32>
    %243 = arith.mulf %242, %241 : vector<16x64xf32>
    %cst_106 = arith.constant 4.471500e-02 : f32
    %244 = vector.broadcast %cst_106 : f32 to vector<16x64xf32>
    %245 = arith.mulf %244, %241 : vector<16x64xf32>
    %246 = arith.mulf %245, %241 : vector<16x64xf32>
    %247 = arith.mulf %246, %241 : vector<16x64xf32>
    %248 = arith.addf %241, %247 : vector<16x64xf32>
    %cst_107 = arith.constant 0.797884583 : f32
    %249 = vector.broadcast %cst_107 : f32 to vector<16x64xf32>
    %250 = arith.mulf %249, %248 : vector<16x64xf32>
    %251 = math.tanh %250 : vector<16x64xf32>
    %cst_108 = arith.constant 1.000000e+00 : f32
    %252 = vector.broadcast %cst_108 : f32 to vector<16x64xf32>
    %253 = arith.addf %252, %251 : vector<16x64xf32>
    %254 = arith.mulf %243, %253 : vector<16x64xf32>
    %cst_109 = arith.constant dense<0.000000e+00> : vector<16x32xf32>
    %255 = tpu.matmul %254, %43, %cst_109 {dimension_numbers = #tpu.dot_dimension_numbers<[1], [0], [0], [1], [0, 0, 1, 1], [], []>} : vector<16x64xf32>, vector<64x32xf32>, vector<16x32xf32> -> vector<16x32xf32>
    %256 = vector.broadcast %44 : vector<1x32xf32> to vector<16x32xf32>
    %257 = arith.addf %255, %256 : vector<16x32xf32>
    %258 = arith.addf %257, %238 : vector<16x32xf32>
    %cst_110 = arith.constant dense<0.000000e+00> : vector<16xf32>
    %259 = vector.multi_reduction <add>, %258, %cst_110 [1] : vector<16x32xf32> to vector<16xf32>
    %260 = vector.shape_cast %259 : vector<16xf32> to vector<16x1xf32>
    %cst_111 = arith.constant 3.200000e+01 : f32
    %261 = vector.broadcast %cst_111 : f32 to vector<16x1xf32>
    %262 = arith.divf %260, %261 : vector<16x1xf32>
    %263 = vector.broadcast %262 : vector<16x1xf32> to vector<16x32xf32>
    %264 = arith.subf %258, %263 : vector<16x32xf32>
    %265 = arith.mulf %264, %264 : vector<16x32xf32>
    %cst_112 = arith.constant dense<0.000000e+00> : vector<16xf32>
    %266 = vector.multi_reduction <add>, %265, %cst_112 [1] : vector<16x32xf32> to vector<16xf32>
    %267 = vector.shape_cast %266 : vector<16xf32> to vector<16x1xf32>
    %cst_113 = arith.constant 3.200000e+01 : f32
    %268 = vector.broadcast %cst_113 : f32 to vector<16x1xf32>
    %269 = arith.divf %267, %268 : vector<16x1xf32>
    %270 = vector.broadcast %262 : vector<16x1xf32> to vector<16x32xf32>
    %271 = arith.subf %258, %270 : vector<16x32xf32>
    %cst_114 = arith.constant 9.99999996E-13 : f32
    %272 = vector.broadcast %cst_114 : f32 to vector<16x1xf32>
    %273 = arith.addf %269, %272 : vector<16x1xf32>
    %274 = math.rsqrt %273 : vector<16x1xf32>
    %275 = vector.broadcast %274 : vector<16x1xf32> to vector<16x32xf32>
    %276 = arith.mulf %271, %275 : vector<16x32xf32>
    %277 = vector.broadcast %45 : vector<1x32xf32> to vector<16x32xf32>
    %278 = arith.mulf %276, %277 : vector<16x32xf32>
    %279 = vector.broadcast %46 : vector<1x32xf32> to vector<16x32xf32>
    %280 = arith.addf %278, %279 : vector<16x32xf32>
    %cst_115 = arith.constant dense<0.000000e+00> : vector<16x96xf32>
    %281 = tpu.matmul %280, %35, %cst_115 {dimension_numbers = #tpu.dot_dimension_numbers<[1], [0], [0], [1], [0, 0, 1, 1], [], []>} : vector<16x32xf32>, vector<32x96xf32>, vector<16x96xf32> -> vector<16x96xf32>
    %282 = vector.broadcast %36 : vector<1x96xf32> to vector<16x96xf32>
    %283 = arith.addf %281, %282 : vector<16x96xf32>
    %284 = vector.extract_strided_slice %34 {offsets = [0, 0], sizes = [1, 8], strides = [1, 1]} : vector<2x8xf32> to vector<1x8xf32>
    %285 = vector.extract_strided_slice %283 {offsets = [0, 0], sizes = [8, 8], strides = [1, 1]} : vector<16x96xf32> to vector<8x8xf32>
    %286 = vector.extract_strided_slice %283 {offsets = [0, 32], sizes = [8, 8], strides = [1, 1]} : vector<16x96xf32> to vector<8x8xf32>
    %287 = vector.extract_strided_slice %283 {offsets = [0, 64], sizes = [8, 8], strides = [1, 1]} : vector<16x96xf32> to vector<8x8xf32>
    "tpu.trace_start"() <{level = 10 : i32, message = "qd,kd->qk"}> : () -> ()
    %cst_116 = arith.constant dense<0.000000e+00> : vector<8x8xf32>
    %288 = tpu.matmul %285, %286, %cst_116 {dimension_numbers = #tpu.dot_dimension_numbers<[1], [1], [0], [0], [0, 0, 1, 0], [], []>} : vector<8x8xf32>, vector<8x8xf32>, vector<8x8xf32> -> vector<8x8xf32>
    "tpu.trace_stop"() : () -> ()
    %cst_117 = arith.constant 0.353553385 : f32
    %289 = vector.broadcast %cst_117 : f32 to vector<8x8xf32>
    %290 = arith.mulf %288, %289 : vector<8x8xf32>
    %291 = vector.broadcast %284 : vector<1x8xf32> to vector<8x8xf32>
    %292 = arith.addf %290, %291 : vector<8x8xf32>
    %cst_118 = arith.constant dense<0xFF800000> : vector<8xf32>
    %293 = vector.multi_reduction <maximumf>, %292, %cst_118 [1] : vector<8x8xf32> to vector<8xf32>
    %294 = vector.shape_cast %293 : vector<8xf32> to vector<8x1xf32>
    %295 = vector.broadcast %294 : vector<8x1xf32> to vector<8x8xf32>
    %296 = arith.subf %292, %295 : vector<8x8xf32>
    %297 = math.exp %296 : vector<8x8xf32>
    %cst_119 = arith.constant dense<0.000000e+00> : vector<8xf32>
    %298 = vector.multi_reduction <add>, %297, %cst_119 [1] : vector<8x8xf32> to vector<8xf32>
    %299 = vector.shape_cast %298 : vector<8xf32> to vector<8x1xf32>
    %300 = tpu.reciprocal %299 {approx = true} : vector<8x1xf32> -> vector<8x1xf32>
    %301 = vector.broadcast %300 : vector<8x1xf32> to vector<8x8xf32>
    %302 = arith.mulf %297, %301 : vector<8x8xf32>
    %cst_120 = arith.constant dense<0.000000e+00> : vector<8x8xf32>
    %303 = tpu.matmul %302, %287, %cst_120 {dimension_numbers = #tpu.dot_dimension_numbers<[1], [0], [0], [1], [0, 0, 1, 1], [], []>} : vector<8x8xf32>, vector<8x8xf32>, vector<8x8xf32> -> vector<8x8xf32>
    %c0_121 = arith.constant 0 : index
    %c0_122 = arith.constant 0 : index
    %304 = vector.load %arg23[%c0_121, %c0_122] : memref<16x32xf32, #tpu.memory_space<vmem>>, vector<8x8xf32>
    tpu.vector_store %arg23[%c0_121, %c0_122], %303 {strides = array<i32>} : memref<16x32xf32, #tpu.memory_space<vmem>>, vector<8x8xf32>,
    %305 = vector.extract_strided_slice %283 {offsets = [0, 8], sizes = [8, 8], strides = [1, 1]} : vector<16x96xf32> to vector<8x8xf32>
    %306 = vector.extract_strided_slice %283 {offsets = [0, 40], sizes = [8, 8], strides = [1, 1]} : vector<16x96xf32> to vector<8x8xf32>
    %307 = vector.extract_strided_slice %283 {offsets = [0, 72], sizes = [8, 8], strides = [1, 1]} : vector<16x96xf32> to vector<8x8xf32>
    "tpu.trace_start"() <{level = 10 : i32, message = "qd,kd->qk"}> : () -> ()
    %cst_123 = arith.constant dense<0.000000e+00> : vector<8x8xf32>
    %308 = tpu.matmul %305, %306, %cst_123 {dimension_numbers = #tpu.dot_dimension_numbers<[1], [1], [0], [0], [0, 0, 1, 0], [], []>} : vector<8x8xf32>, vector<8x8xf32>, vector<8x8xf32> -> vector<8x8xf32>
    "tpu.trace_stop"() : () -> ()
    %cst_124 = arith.constant 0.353553385 : f32
    %309 = vector.broadcast %cst_124 : f32 to vector<8x8xf32>
    %310 = arith.mulf %308, %309 : vector<8x8xf32>
    %311 = vector.broadcast %284 : vector<1x8xf32> to vector<8x8xf32>
    %312 = arith.addf %310, %311 : vector<8x8xf32>
    %cst_125 = arith.constant dense<0xFF800000> : vector<8xf32>
    %313 = vector.multi_reduction <maximumf>, %312, %cst_125 [1] : vector<8x8xf32> to vector<8xf32>
    %314 = vector.shape_cast %313 : vector<8xf32> to vector<8x1xf32>
    %315 = vector.broadcast %314 : vector<8x1xf32> to vector<8x8xf32>
    %316 = arith.subf %312, %315 : vector<8x8xf32>
    %317 = math.exp %316 : vector<8x8xf32>
    %cst_126 = arith.constant dense<0.000000e+00> : vector<8xf32>
    %318 = vector.multi_reduction <add>, %317, %cst_126 [1] : vector<8x8xf32> to vector<8xf32>
    %319 = vector.shape_cast %318 : vector<8xf32> to vector<8x1xf32>
    %320 = tpu.reciprocal %319 {approx = true} : vector<8x1xf32> -> vector<8x1xf32>
    %321 = vector.broadcast %320 : vector<8x1xf32> to vector<8x8xf32>
    %322 = arith.mulf %317, %321 : vector<8x8xf32>
    %cst_127 = arith.constant dense<0.000000e+00> : vector<8x8xf32>
    %323 = tpu.matmul %322, %307, %cst_127 {dimension_numbers = #tpu.dot_dimension_numbers<[1], [0], [0], [1], [0, 0, 1, 1], [], []>} : vector<8x8xf32>, vector<8x8xf32>, vector<8x8xf32> -> vector<8x8xf32>
    %c0_128 = arith.constant 0 : index
    %c8_129 = arith.constant 8 : index
    %324 = vector.load %arg23[%c0_128, %c8_129] : memref<16x32xf32, #tpu.memory_space<vmem>>, vector<8x8xf32>
    tpu.vector_store %arg23[%c0_128, %c8_129], %323 {strides = array<i32>} : memref<16x32xf32, #tpu.memory_space<vmem>>, vector<8x8xf32>,
    %325 = vector.extract_strided_slice %283 {offsets = [0, 16], sizes = [8, 8], strides = [1, 1]} : vector<16x96xf32> to vector<8x8xf32>
    %326 = vector.extract_strided_slice %283 {offsets = [0, 48], sizes = [8, 8], strides = [1, 1]} : vector<16x96xf32> to vector<8x8xf32>
    %327 = vector.extract_strided_slice %283 {offsets = [0, 80], sizes = [8, 8], strides = [1, 1]} : vector<16x96xf32> to vector<8x8xf32>
    "tpu.trace_start"() <{level = 10 : i32, message = "qd,kd->qk"}> : () -> ()
    %cst_130 = arith.constant dense<0.000000e+00> : vector<8x8xf32>
    %328 = tpu.matmul %325, %326, %cst_130 {dimension_numbers = #tpu.dot_dimension_numbers<[1], [1], [0], [0], [0, 0, 1, 0], [], []>} : vector<8x8xf32>, vector<8x8xf32>, vector<8x8xf32> -> vector<8x8xf32>
    "tpu.trace_stop"() : () -> ()
    %cst_131 = arith.constant 0.353553385 : f32
    %329 = vector.broadcast %cst_131 : f32 to vector<8x8xf32>
    %330 = arith.mulf %328, %329 : vector<8x8xf32>
    %331 = vector.broadcast %284 : vector<1x8xf32> to vector<8x8xf32>
    %332 = arith.addf %330, %331 : vector<8x8xf32>
    %cst_132 = arith.constant dense<0xFF800000> : vector<8xf32>
    %333 = vector.multi_reduction <maximumf>, %332, %cst_132 [1] : vector<8x8xf32> to vector<8xf32>
    %334 = vector.shape_cast %333 : vector<8xf32> to vector<8x1xf32>
    %335 = vector.broadcast %334 : vector<8x1xf32> to vector<8x8xf32>
    %336 = arith.subf %332, %335 : vector<8x8xf32>
    %337 = math.exp %336 : vector<8x8xf32>
    %cst_133 = arith.constant dense<0.000000e+00> : vector<8xf32>
    %338 = vector.multi_reduction <add>, %337, %cst_133 [1] : vector<8x8xf32> to vector<8xf32>
    %339 = vector.shape_cast %338 : vector<8xf32> to vector<8x1xf32>
    %340 = tpu.reciprocal %339 {approx = true} : vector<8x1xf32> -> vector<8x1xf32>
    %341 = vector.broadcast %340 : vector<8x1xf32> to vector<8x8xf32>
    %342 = arith.mulf %337, %341 : vector<8x8xf32>
    %cst_134 = arith.constant dense<0.000000e+00> : vector<8x8xf32>
    %343 = tpu.matmul %342, %327, %cst_134 {dimension_numbers = #tpu.dot_dimension_numbers<[1], [0], [0], [1], [0, 0, 1, 1], [], []>} : vector<8x8xf32>, vector<8x8xf32>, vector<8x8xf32> -> vector<8x8xf32>
    %c0_135 = arith.constant 0 : index
    %c16_136 = arith.constant 16 : index
    %344 = vector.load %arg23[%c0_135, %c16_136] : memref<16x32xf32, #tpu.memory_space<vmem>>, vector<8x8xf32>
    tpu.vector_store %arg23[%c0_135, %c16_136], %343 {strides = array<i32>} : memref<16x32xf32, #tpu.memory_space<vmem>>, vector<8x8xf32>,
    %345 = vector.extract_strided_slice %283 {offsets = [0, 24], sizes = [8, 8], strides = [1, 1]} : vector<16x96xf32> to vector<8x8xf32>
    %346 = vector.extract_strided_slice %283 {offsets = [0, 56], sizes = [8, 8], strides = [1, 1]} : vector<16x96xf32> to vector<8x8xf32>
    %347 = vector.extract_strided_slice %283 {offsets = [0, 88], sizes = [8, 8], strides = [1, 1]} : vector<16x96xf32> to vector<8x8xf32>
    "tpu.trace_start"() <{level = 10 : i32, message = "qd,kd->qk"}> : () -> ()
    %cst_137 = arith.constant dense<0.000000e+00> : vector<8x8xf32>
    %348 = tpu.matmul %345, %346, %cst_137 {dimension_numbers = #tpu.dot_dimension_numbers<[1], [1], [0], [0], [0, 0, 1, 0], [], []>} : vector<8x8xf32>, vector<8x8xf32>, vector<8x8xf32> -> vector<8x8xf32>
    "tpu.trace_stop"() : () -> ()
    %cst_138 = arith.constant 0.353553385 : f32
    %349 = vector.broadcast %cst_138 : f32 to vector<8x8xf32>
    %350 = arith.mulf %348, %349 : vector<8x8xf32>
    %351 = vector.broadcast %284 : vector<1x8xf32> to vector<8x8xf32>
    %352 = arith.addf %350, %351 : vector<8x8xf32>
    %cst_139 = arith.constant dense<0xFF800000> : vector<8xf32>
    %353 = vector.multi_reduction <maximumf>, %352, %cst_139 [1] : vector<8x8xf32> to vector<8xf32>
    %354 = vector.shape_cast %353 : vector<8xf32> to vector<8x1xf32>
    %355 = vector.broadcast %354 : vector<8x1xf32> to vector<8x8xf32>
    %356 = arith.subf %352, %355 : vector<8x8xf32>
    %357 = math.exp %356 : vector<8x8xf32>
    %cst_140 = arith.constant dense<0.000000e+00> : vector<8xf32>
    %358 = vector.multi_reduction <add>, %357, %cst_140 [1] : vector<8x8xf32> to vector<8xf32>
    %359 = vector.shape_cast %358 : vector<8xf32> to vector<8x1xf32>
    %360 = tpu.reciprocal %359 {approx = true} : vector<8x1xf32> -> vector<8x1xf32>
    %361 = vector.broadcast %360 : vector<8x1xf32> to vector<8x8xf32>
    %362 = arith.mulf %357, %361 : vector<8x8xf32>
    %cst_141 = arith.constant dense<0.000000e+00> : vector<8x8xf32>
    %363 = tpu.matmul %362, %347, %cst_141 {dimension_numbers = #tpu.dot_dimension_numbers<[1], [0], [0], [1], [0, 0, 1, 1], [], []>} : vector<8x8xf32>, vector<8x8xf32>, vector<8x8xf32> -> vector<8x8xf32>
    %c0_142 = arith.constant 0 : index
    %c24_143 = arith.constant 24 : index
    %364 = vector.load %arg23[%c0_142, %c24_143] : memref<16x32xf32, #tpu.memory_space<vmem>>, vector<8x8xf32>
    tpu.vector_store %arg23[%c0_142, %c24_143], %363 {strides = array<i32>} : memref<16x32xf32, #tpu.memory_space<vmem>>, vector<8x8xf32>,
    %365 = vector.extract_strided_slice %34 {offsets = [1, 0], sizes = [1, 8], strides = [1, 1]} : vector<2x8xf32> to vector<1x8xf32>
    %366 = vector.extract_strided_slice %283 {offsets = [8, 0], sizes = [8, 8], strides = [1, 1]} : vector<16x96xf32> to vector<8x8xf32>
    %367 = vector.extract_strided_slice %283 {offsets = [8, 32], sizes = [8, 8], strides = [1, 1]} : vector<16x96xf32> to vector<8x8xf32>
    %368 = vector.extract_strided_slice %283 {offsets = [8, 64], sizes = [8, 8], strides = [1, 1]} : vector<16x96xf32> to vector<8x8xf32>
    "tpu.trace_start"() <{level = 10 : i32, message = "qd,kd->qk"}> : () -> ()
    %cst_144 = arith.constant dense<0.000000e+00> : vector<8x8xf32>
    %369 = tpu.matmul %366, %367, %cst_144 {dimension_numbers = #tpu.dot_dimension_numbers<[1], [1], [0], [0], [0, 0, 1, 0], [], []>} : vector<8x8xf32>, vector<8x8xf32>, vector<8x8xf32> -> vector<8x8xf32>
    "tpu.trace_stop"() : () -> ()
    %cst_145 = arith.constant 0.353553385 : f32
    %370 = vector.broadcast %cst_145 : f32 to vector<8x8xf32>
    %371 = arith.mulf %369, %370 : vector<8x8xf32>
    %372 = vector.broadcast %365 : vector<1x8xf32> to vector<8x8xf32>
    %373 = arith.addf %371, %372 : vector<8x8xf32>
    %cst_146 = arith.constant dense<0xFF800000> : vector<8xf32>
    %374 = vector.multi_reduction <maximumf>, %373, %cst_146 [1] : vector<8x8xf32> to vector<8xf32>
    %375 = vector.shape_cast %374 : vector<8xf32> to vector<8x1xf32>
    %376 = vector.broadcast %375 : vector<8x1xf32> to vector<8x8xf32>
    %377 = arith.subf %373, %376 : vector<8x8xf32>
    %378 = math.exp %377 : vector<8x8xf32>
    %cst_147 = arith.constant dense<0.000000e+00> : vector<8xf32>
    %379 = vector.multi_reduction <add>, %378, %cst_147 [1] : vector<8x8xf32> to vector<8xf32>
    %380 = vector.shape_cast %379 : vector<8xf32> to vector<8x1xf32>
    %381 = tpu.reciprocal %380 {approx = true} : vector<8x1xf32> -> vector<8x1xf32>
    %382 = vector.broadcast %381 : vector<8x1xf32> to vector<8x8xf32>
    %383 = arith.mulf %378, %382 : vector<8x8xf32>
    %cst_148 = arith.constant dense<0.000000e+00> : vector<8x8xf32>
    %384 = tpu.matmul %383, %368, %cst_148 {dimension_numbers = #tpu.dot_dimension_numbers<[1], [0], [0], [1], [0, 0, 1, 1], [], []>} : vector<8x8xf32>, vector<8x8xf32>, vector<8x8xf32> -> vector<8x8xf32>
    %c8_149 = arith.constant 8 : index
    %c0_150 = arith.constant 0 : index
    %385 = vector.load %arg23[%c8_149, %c0_150] : memref<16x32xf32, #tpu.memory_space<vmem>>, vector<8x8xf32>
    tpu.vector_store %arg23[%c8_149, %c0_150], %384 {strides = array<i32>} : memref<16x32xf32, #tpu.memory_space<vmem>>, vector<8x8xf32>,
    %386 = vector.extract_strided_slice %283 {offsets = [8, 8], sizes = [8, 8], strides = [1, 1]} : vector<16x96xf32> to vector<8x8xf32>
    %387 = vector.extract_strided_slice %283 {offsets = [8, 40], sizes = [8, 8], strides = [1, 1]} : vector<16x96xf32> to vector<8x8xf32>
    %388 = vector.extract_strided_slice %283 {offsets = [8, 72], sizes = [8, 8], strides = [1, 1]} : vector<16x96xf32> to vector<8x8xf32>
    "tpu.trace_start"() <{level = 10 : i32, message = "qd,kd->qk"}> : () -> ()
    %cst_151 = arith.constant dense<0.000000e+00> : vector<8x8xf32>
    %389 = tpu.matmul %386, %387, %cst_151 {dimension_numbers = #tpu.dot_dimension_numbers<[1], [1], [0], [0], [0, 0, 1, 0], [], []>} : vector<8x8xf32>, vector<8x8xf32>, vector<8x8xf32> -> vector<8x8xf32>
    "tpu.trace_stop"() : () -> ()
    %cst_152 = arith.constant 0.353553385 : f32
    %390 = vector.broadcast %cst_152 : f32 to vector<8x8xf32>
    %391 = arith.mulf %389, %390 : vector<8x8xf32>
    %392 = vector.broadcast %365 : vector<1x8xf32> to vector<8x8xf32>
    %393 = arith.addf %391, %392 : vector<8x8xf32>
    %cst_153 = arith.constant dense<0xFF800000> : vector<8xf32>
    %394 = vector.multi_reduction <maximumf>, %393, %cst_153 [1] : vector<8x8xf32> to vector<8xf32>
    %395 = vector.shape_cast %394 : vector<8xf32> to vector<8x1xf32>
    %396 = vector.broadcast %395 : vector<8x1xf32> to vector<8x8xf32>
    %397 = arith.subf %393, %396 : vector<8x8xf32>
    %398 = math.exp %397 : vector<8x8xf32>
    %cst_154 = arith.constant dense<0.000000e+00> : vector<8xf32>
    %399 = vector.multi_reduction <add>, %398, %cst_154 [1] : vector<8x8xf32> to vector<8xf32>
    %400 = vector.shape_cast %399 : vector<8xf32> to vector<8x1xf32>
    %401 = tpu.reciprocal %400 {approx = true} : vector<8x1xf32> -> vector<8x1xf32>
    %402 = vector.broadcast %401 : vector<8x1xf32> to vector<8x8xf32>
    %403 = arith.mulf %398, %402 : vector<8x8xf32>
    %cst_155 = arith.constant dense<0.000000e+00> : vector<8x8xf32>
    %404 = tpu.matmul %403, %388, %cst_155 {dimension_numbers = #tpu.dot_dimension_numbers<[1], [0], [0], [1], [0, 0, 1, 1], [], []>} : vector<8x8xf32>, vector<8x8xf32>, vector<8x8xf32> -> vector<8x8xf32>
    %c8_156 = arith.constant 8 : index
    %c8_157 = arith.constant 8 : index
    %405 = vector.load %arg23[%c8_156, %c8_157] : memref<16x32xf32, #tpu.memory_space<vmem>>, vector<8x8xf32>
    tpu.vector_store %arg23[%c8_156, %c8_157], %404 {strides = array<i32>} : memref<16x32xf32, #tpu.memory_space<vmem>>, vector<8x8xf32>,
    %406 = vector.extract_strided_slice %283 {offsets = [8, 16], sizes = [8, 8], strides = [1, 1]} : vector<16x96xf32> to vector<8x8xf32>
    %407 = vector.extract_strided_slice %283 {offsets = [8, 48], sizes = [8, 8], strides = [1, 1]} : vector<16x96xf32> to vector<8x8xf32>
    %408 = vector.extract_strided_slice %283 {offsets = [8, 80], sizes = [8, 8], strides = [1, 1]} : vector<16x96xf32> to vector<8x8xf32>
    "tpu.trace_start"() <{level = 10 : i32, message = "qd,kd->qk"}> : () -> ()
    %cst_158 = arith.constant dense<0.000000e+00> : vector<8x8xf32>
    %409 = tpu.matmul %406, %407, %cst_158 {dimension_numbers = #tpu.dot_dimension_numbers<[1], [1], [0], [0], [0, 0, 1, 0], [], []>} : vector<8x8xf32>, vector<8x8xf32>, vector<8x8xf32> -> vector<8x8xf32>
    "tpu.trace_stop"() : () -> ()
    %cst_159 = arith.constant 0.353553385 : f32
    %410 = vector.broadcast %cst_159 : f32 to vector<8x8xf32>
    %411 = arith.mulf %409, %410 : vector<8x8xf32>
    %412 = vector.broadcast %365 : vector<1x8xf32> to vector<8x8xf32>
    %413 = arith.addf %411, %412 : vector<8x8xf32>
    %cst_160 = arith.constant dense<0xFF800000> : vector<8xf32>
    %414 = vector.multi_reduction <maximumf>, %413, %cst_160 [1] : vector<8x8xf32> to vector<8xf32>
    %415 = vector.shape_cast %414 : vector<8xf32> to vector<8x1xf32>
    %416 = vector.broadcast %415 : vector<8x1xf32> to vector<8x8xf32>
    %417 = arith.subf %413, %416 : vector<8x8xf32>
    %418 = math.exp %417 : vector<8x8xf32>
    %cst_161 = arith.constant dense<0.000000e+00> : vector<8xf32>
    %419 = vector.multi_reduction <add>, %418, %cst_161 [1] : vector<8x8xf32> to vector<8xf32>
    %420 = vector.shape_cast %419 : vector<8xf32> to vector<8x1xf32>
    %421 = tpu.reciprocal %420 {approx = true} : vector<8x1xf32> -> vector<8x1xf32>
    %422 = vector.broadcast %421 : vector<8x1xf32> to vector<8x8xf32>
    %423 = arith.mulf %418, %422 : vector<8x8xf32>
    %cst_162 = arith.constant dense<0.000000e+00> : vector<8x8xf32>
    %424 = tpu.matmul %423, %408, %cst_162 {dimension_numbers = #tpu.dot_dimension_numbers<[1], [0], [0], [1], [0, 0, 1, 1], [], []>} : vector<8x8xf32>, vector<8x8xf32>, vector<8x8xf32> -> vector<8x8xf32>
    %c8_163 = arith.constant 8 : index
    %c16_164 = arith.constant 16 : index
    %425 = vector.load %arg23[%c8_163, %c16_164] : memref<16x32xf32, #tpu.memory_space<vmem>>, vector<8x8xf32>
    tpu.vector_store %arg23[%c8_163, %c16_164], %424 {strides = array<i32>} : memref<16x32xf32, #tpu.memory_space<vmem>>, vector<8x8xf32>,
    %426 = vector.extract_strided_slice %283 {offsets = [8, 24], sizes = [8, 8], strides = [1, 1]} : vector<16x96xf32> to vector<8x8xf32>
    %427 = vector.extract_strided_slice %283 {offsets = [8, 56], sizes = [8, 8], strides = [1, 1]} : vector<16x96xf32> to vector<8x8xf32>
    %428 = vector.extract_strided_slice %283 {offsets = [8, 88], sizes = [8, 8], strides = [1, 1]} : vector<16x96xf32> to vector<8x8xf32>
    "tpu.trace_start"() <{level = 10 : i32, message = "qd,kd->qk"}> : () -> ()
    %cst_165 = arith.constant dense<0.000000e+00> : vector<8x8xf32>
    %429 = tpu.matmul %426, %427, %cst_165 {dimension_numbers = #tpu.dot_dimension_numbers<[1], [1], [0], [0], [0, 0, 1, 0], [], []>} : vector<8x8xf32>, vector<8x8xf32>, vector<8x8xf32> -> vector<8x8xf32>
    "tpu.trace_stop"() : () -> ()
    %cst_166 = arith.constant 0.353553385 : f32
    %430 = vector.broadcast %cst_166 : f32 to vector<8x8xf32>
    %431 = arith.mulf %429, %430 : vector<8x8xf32>
    %432 = vector.broadcast %365 : vector<1x8xf32> to vector<8x8xf32>
    %433 = arith.addf %431, %432 : vector<8x8xf32>
    %cst_167 = arith.constant dense<0xFF800000> : vector<8xf32>
    %434 = vector.multi_reduction <maximumf>, %433, %cst_167 [1] : vector<8x8xf32> to vector<8xf32>
    %435 = vector.shape_cast %434 : vector<8xf32> to vector<8x1xf32>
    %436 = vector.broadcast %435 : vector<8x1xf32> to vector<8x8xf32>
    %437 = arith.subf %433, %436 : vector<8x8xf32>
    %438 = math.exp %437 : vector<8x8xf32>
    %cst_168 = arith.constant dense<0.000000e+00> : vector<8xf32>
    %439 = vector.multi_reduction <add>, %438, %cst_168 [1] : vector<8x8xf32> to vector<8xf32>
    %440 = vector.shape_cast %439 : vector<8xf32> to vector<8x1xf32>
    %441 = tpu.reciprocal %440 {approx = true} : vector<8x1xf32> -> vector<8x1xf32>
    %442 = vector.broadcast %441 : vector<8x1xf32> to vector<8x8xf32>
    %443 = arith.mulf %438, %442 : vector<8x8xf32>
    %cst_169 = arith.constant dense<0.000000e+00> : vector<8x8xf32>
    %444 = tpu.matmul %443, %428, %cst_169 {dimension_numbers = #tpu.dot_dimension_numbers<[1], [0], [0], [1], [0, 0, 1, 1], [], []>} : vector<8x8xf32>, vector<8x8xf32>, vector<8x8xf32> -> vector<8x8xf32>
    %c8_170 = arith.constant 8 : index
    %c24_171 = arith.constant 24 : index
    %445 = vector.load %arg23[%c8_170, %c24_171] : memref<16x32xf32, #tpu.memory_space<vmem>>, vector<8x8xf32>
    tpu.vector_store %arg23[%c8_170, %c24_171], %444 {strides = array<i32>} : memref<16x32xf32, #tpu.memory_space<vmem>>, vector<8x8xf32>,
    %c0_172 = arith.constant 0 : index
    %c0_173 = arith.constant 0 : index
    %446 = vector.load %arg23[%c0_172, %c0_173] : memref<16x32xf32, #tpu.memory_space<vmem>>, vector<16x32xf32>
    %cst_174 = arith.constant dense<0.000000e+00> : vector<16x32xf32>
    %447 = tpu.matmul %446, %37, %cst_174 {dimension_numbers = #tpu.dot_dimension_numbers<[1], [0], [0], [1], [0, 0, 1, 1], [], []>} : vector<16x32xf32>, vector<32x32xf32>, vector<16x32xf32> -> vector<16x32xf32>
    %448 = vector.broadcast %38 : vector<1x32xf32> to vector<16x32xf32>
    %449 = arith.addf %447, %448 : vector<16x32xf32>
    %450 = arith.addf %449, %280 : vector<16x32xf32>
    %cst_175 = arith.constant dense<0.000000e+00> : vector<16xf32>
    %451 = vector.multi_reduction <add>, %450, %cst_175 [1] : vector<16x32xf32> to vector<16xf32>
    %452 = vector.shape_cast %451 : vector<16xf32> to vector<16x1xf32>
    %cst_176 = arith.constant 3.200000e+01 : f32
    %453 = vector.broadcast %cst_176 : f32 to vector<16x1xf32>
    %454 = arith.divf %452, %453 : vector<16x1xf32>
    %455 = vector.broadcast %454 : vector<16x1xf32> to vector<16x32xf32>
    %456 = arith.subf %450, %455 : vector<16x32xf32>
    %457 = arith.mulf %456, %456 : vector<16x32xf32>
    %cst_177 = arith.constant dense<0.000000e+00> : vector<16xf32>
    %458 = vector.multi_reduction <add>, %457, %cst_177 [1] : vector<16x32xf32> to vector<16xf32>
    %459 = vector.shape_cast %458 : vector<16xf32> to vector<16x1xf32>
    %cst_178 = arith.constant 3.200000e+01 : f32
    %460 = vector.broadcast %cst_178 : f32 to vector<16x1xf32>
    %461 = arith.divf %459, %460 : vector<16x1xf32>
    %462 = vector.broadcast %454 : vector<16x1xf32> to vector<16x32xf32>
    %463 = arith.subf %450, %462 : vector<16x32xf32>
    %cst_179 = arith.constant 9.99999996E-13 : f32
    %464 = vector.broadcast %cst_179 : f32 to vector<16x1xf32>
    %465 = arith.addf %461, %464 : vector<16x1xf32>
    %466 = math.rsqrt %465 : vector<16x1xf32>
    %467 = vector.broadcast %466 : vector<16x1xf32> to vector<16x32xf32>
    %468 = arith.mulf %463, %467 : vector<16x32xf32>
    %469 = vector.broadcast %39 : vector<1x32xf32> to vector<16x32xf32>
    %470 = arith.mulf %468, %469 : vector<16x32xf32>
    %471 = vector.broadcast %40 : vector<1x32xf32> to vector<16x32xf32>
    %472 = arith.addf %470, %471 : vector<16x32xf32>
    %cst_180 = arith.constant dense<0.000000e+00> : vector<16x64xf32>
    %473 = tpu.matmul %472, %41, %cst_180 {dimension_numbers = #tpu.dot_dimension_numbers<[1], [0], [0], [1], [0, 0, 1, 1], [], []>} : vector<16x32xf32>, vector<32x64xf32>, vector<16x64xf32> -> vector<16x64xf32>
    %474 = vector.broadcast %42 : vector<1x64xf32> to vector<16x64xf32>
    %475 = arith.addf %473, %474 : vector<16x64xf32>
    %cst_181 = arith.constant 5.000000e-01 : f32
    %476 = vector.broadcast %cst_181 : f32 to vector<16x64xf32>
    %477 = arith.mulf %476, %475 : vector<16x64xf32>
    %cst_182 = arith.constant 4.471500e-02 : f32
    %478 = vector.broadcast %cst_182 : f32 to vector<16x64xf32>
    %479 = arith.mulf %478, %475 : vector<16x64xf32>
    %480 = arith.mulf %479, %475 : vector<16x64xf32>
    %481 = arith.mulf %480, %475 : vector<16x64xf32>
    %482 = arith.addf %475, %481 : vector<16x64xf32>
    %cst_183 = arith.constant 0.797884583 : f32
    %483 = vector.broadcast %cst_183 : f32 to vector<16x64xf32>
    %484 = arith.mulf %483, %482 : vector<16x64xf32>
    %485 = math.tanh %484 : vector<16x64xf32>
    %cst_184 = arith.constant 1.000000e+00 : f32
    %486 = vector.broadcast %cst_184 : f32 to vector<16x64xf32>
    %487 = arith.addf %486, %485 : vector<16x64xf32>
    %488 = arith.mulf %477, %487 : vector<16x64xf32>
    %cst_185 = arith.constant dense<0.000000e+00> : vector<16x32xf32>
    %489 = tpu.matmul %488, %43, %cst_185 {dimension_numbers = #tpu.dot_dimension_numbers<[1], [0], [0], [1], [0, 0, 1, 1], [], []>} : vector<16x64xf32>, vector<64x32xf32>, vector<16x32xf32> -> vector<16x32xf32>
    %490 = vector.broadcast %44 : vector<1x32xf32> to vector<16x32xf32>
    %491 = arith.addf %489, %490 : vector<16x32xf32>
    %492 = arith.addf %491, %472 : vector<16x32xf32>
    %cst_186 = arith.constant dense<0.000000e+00> : vector<16xf32>
    %493 = vector.multi_reduction <add>, %492, %cst_186 [1] : vector<16x32xf32> to vector<16xf32>
    %494 = vector.shape_cast %493 : vector<16xf32> to vector<16x1xf32>
    %cst_187 = arith.constant 3.200000e+01 : f32
    %495 = vector.broadcast %cst_187 : f32 to vector<16x1xf32>
    %496 = arith.divf %494, %495 : vector<16x1xf32>
    %497 = vector.broadcast %496 : vector<16x1xf32> to vector<16x32xf32>
    %498 = arith.subf %492, %497 : vector<16x32xf32>
    %499 = arith.mulf %498, %498 : vector<16x32xf32>
    %cst_188 = arith.constant dense<0.000000e+00> : vector<16xf32>
    %500 = vector.multi_reduction <add>, %499, %cst_188 [1] : vector<16x32xf32> to vector<16xf32>
    %501 = vector.shape_cast %500 : vector<16xf32> to vector<16x1xf32>
    %cst_189 = arith.constant 3.200000e+01 : f32
    %502 = vector.broadcast %cst_189 : f32 to vector<16x1xf32>
    %503 = arith.divf %501, %502 : vector<16x1xf32>
    %504 = vector.broadcast %496 : vector<16x1xf32> to vector<16x32xf32>
    %505 = arith.subf %492, %504 : vector<16x32xf32>
    %cst_190 = arith.constant 9.99999996E-13 : f32
    %506 = vector.broadcast %cst_190 : f32 to vector<16x1xf32>
    %507 = arith.addf %503, %506 : vector<16x1xf32>
    %508 = math.rsqrt %507 : vector<16x1xf32>
    %509 = vector.broadcast %508 : vector<16x1xf32> to vector<16x32xf32>
    %510 = arith.mulf %505, %509 : vector<16x32xf32>
    %511 = vector.broadcast %45 : vector<1x32xf32> to vector<16x32xf32>
    %512 = arith.mulf %510, %511 : vector<16x32xf32>
    %513 = vector.broadcast %46 : vector<1x32xf32> to vector<16x32xf32>
    %514 = arith.addf %512, %513 : vector<16x32xf32>
    %c0_191 = arith.constant 0 : index
    %c0_192 = arith.constant 0 : index
    %515 = vector.load %arg18[%c0_191, %c0_192] : memref<32x32xf32, #tpu.memory_space<vmem>>, vector<32x32xf32>
    %c0_193 = arith.constant 0 : index
    %c0_194 = arith.constant 0 : index
    %516 = vector.load %arg19[%c0_193, %c0_194] : memref<1x32xf32, #tpu.memory_space<vmem>>, vector<1x32xf32>
    %c0_195 = arith.constant 0 : index
    %c0_196 = arith.constant 0 : index
    %517 = vector.load %arg20[%c0_195, %c0_196] : memref<1x32xf32, #tpu.memory_space<vmem>>, vector<1x32xf32>
    %c0_197 = arith.constant 0 : index
    %c0_198 = arith.constant 0 : index
    %518 = vector.load %arg21[%c0_197, %c0_198] : memref<1x1xf32, #tpu.memory_space<vmem>>, vector<1x1xf32>
    %519 = vector.extract_strided_slice %514 {offsets = [0, 0], sizes = [1, 32], strides = [1, 1]} : vector<16x32xf32> to vector<1x32xf32>
    %cst_199 = arith.constant dense<0.000000e+00> : vector<1x32xf32>
    %520 = tpu.matmul %519, %515, %cst_199 {dimension_numbers = #tpu.dot_dimension_numbers<[1], [0], [0], [1], [0, 0, 1, 1], [], []>} : vector<1x32xf32>, vector<32x32xf32>, vector<1x32xf32> -> vector<1x32xf32>
    %521 = arith.addf %520, %516 : vector<1x32xf32>
    %522 = math.tanh %521 : vector<1x32xf32>
    %523 = arith.mulf %522, %517 : vector<1x32xf32>
    %cst_200 = arith.constant dense<0.000000e+00> : vector<1xf32>
    %524 = vector.multi_reduction <add>, %523, %cst_200 [1] : vector<1x32xf32> to vector<1xf32>
    %525 = vector.shape_cast %524 : vector<1xf32> to vector<1x1xf32>
    %526 = arith.addf %525, %518 : vector<1x1xf32>
    %c0_201 = arith.constant 0 : index
    %c0_202 = arith.constant 0 : index
    %527 = vector.load %arg22[%c0_201, %c0_202] : memref<2x1xf32, #tpu.memory_space<vmem>>, vector<1x1xf32>
    tpu.vector_store %arg22[%c0_201, %c0_202], %526 {strides = array<i32>} : memref<2x1xf32, #tpu.memory_space<vmem>>, vector<1x1xf32>,
    %528 = vector.extract_strided_slice %514 {offsets = [8, 0], sizes = [1, 32], strides = [1, 1]} : vector<16x32xf32> to vector<1x32xf32>
    %cst_203 = arith.constant dense<0.000000e+00> : vector<1x32xf32>
    %529 = tpu.matmul %528, %515, %cst_203 {dimension_numbers = #tpu.dot_dimension_numbers<[1], [0], [0], [1], [0, 0, 1, 1], [], []>} : vector<1x32xf32>, vector<32x32xf32>, vector<1x32xf32> -> vector<1x32xf32>
    %530 = arith.addf %529, %516 : vector<1x32xf32>
    %531 = math.tanh %530 : vector<1x32xf32>
    %532 = arith.mulf %531, %517 : vector<1x32xf32>
    %cst_204 = arith.constant dense<0.000000e+00> : vector<1xf32>
    %533 = vector.multi_reduction <add>, %532, %cst_204 [1] : vector<1x32xf32> to vector<1xf32>
    %534 = vector.shape_cast %533 : vector<1xf32> to vector<1x1xf32>
    %535 = arith.addf %534, %518 : vector<1x1xf32>
    %c1 = arith.constant 1 : index
    %c0_205 = arith.constant 0 : index
    %536 = vector.load %arg22[%c1, %c0_205] : memref<2x1xf32, #tpu.memory_space<vmem>>, vector<1x1xf32>
    tpu.vector_store %arg22[%c1, %c0_205], %535 {strides = array<i32>} : memref<2x1xf32, #tpu.memory_space<vmem>>, vector<1x1xf32>,
    return
  }
}

</mosaic_0001>

<llo_original>
// kernel: pair_model_forward.1
$region0: #{pair_model_forward.1}
  #allocation0 [shape = 'u32[]', space=smem, size = 0x4, offset = 0x4, fixed_abs, tag = 'smem constant byte address 0x4 - core index']
  #allocation1 [shape = 'u32[72,128]{1,0:T(1,128)}', space=vmem, size = 0x9000, scoped, tag = 'internal scratch']
  #allocation2 [shape = 'f32[16,32]{1,0:T(8,128)}', space=vmem, size = 0x2000, scoped, tag = 'scratch operand']
  #allocation3 [shape = 'f32[1,1]{1,0:T(1,128)S(1)}', space=vmem, size = 0x200, scoped, tag = 'scoped memory for pair_model_forward.1']
  %s0 = inlined_call_operand.vmem [shape: f32[16,16], index: 0, kind: input, shape index: {}]
  %s1 = inlined_call_operand.vmem [shape: f32[2,8], index: 1, kind: input, shape index: {}]
  %s2 = inlined_call_operand.vmem [shape: f32[1,16], index: 2, kind: input, shape index: {}]
  %s3 = inlined_call_operand.vmem [shape: f32[1,16], index: 3, kind: input, shape index: {}]
  %s4 = inlined_call_operand.vmem [shape: f32[16,32], index: 4, kind: input, shape index: {}]
  %s5 = inlined_call_operand.vmem [shape: f32[1,32], index: 5, kind: input, shape index: {}]
  %s6 = inlined_call_operand.vmem [shape: f32[32,96], index: 6, kind: input, shape index: {}]
  %s7 = inlined_call_operand.vmem [shape: f32[1,96], index: 7, kind: input, shape index: {}]
  %s8 = inlined_call_operand.vmem [shape: f32[32,32], index: 8, kind: input, shape index: {}]
  %s9 = inlined_call_operand.vmem [shape: f32[1,32], index: 9, kind: input, shape index: {}]
  %s10 = inlined_call_operand.vmem [shape: f32[1,32], index: 10, kind: input, shape index: {}]
  %s11 = inlined_call_operand.vmem [shape: f32[1,32], index: 11, kind: input, shape index: {}]
  %s12 = inlined_call_operand.vmem [shape: f32[32,64], index: 12, kind: input, shape index: {}]
  %s13 = inlined_call_operand.vmem [shape: f32[1,64], index: 13, kind: input, shape index: {}]
  %s14 = inlined_call_operand.vmem [shape: f32[64,32], index: 14, kind: input, shape index: {}]
  %s15 = inlined_call_operand.vmem [shape: f32[1,32], index: 15, kind: input, shape index: {}]
  %s16 = inlined_call_operand.vmem [shape: f32[1,32], index: 16, kind: input, shape index: {}]
  %s17 = inlined_call_operand.vmem [shape: f32[1,32], index: 17, kind: input, shape index: {}]
  %s18 = inlined_call_operand.vmem [shape: f32[32,32], index: 18, kind: input, shape index: {}]
  %s19 = inlined_call_operand.vmem [shape: f32[1,32], index: 19, kind: input, shape index: {}]
  %s20 = inlined_call_operand.vmem [shape: f32[1,32], index: 20, kind: input, shape index: {}]
  %s21 = inlined_call_operand.<no memory space> [shape: f32[1,1], index: 21, kind: input, shape index: {}]
  %s22 = inlined_call_operand.vmem [shape: f32[2,1], index: 22, kind: output, shape index: {}]
  %s23 = sld [smem:[#allocation0]]
  $region98: #{pair_model_forward.1} parent=0
    _
  %s25 = ssub.s32 1, %s23
  %s26 = scalar_select 0, %s25, %s23
  %v27 = vstv %s21
  %28 = vst [vmem:[#allocation3] sm:$0x1] %v27
  // Predicated region
  $region2: #{pair_model_forward.1} parent=0 // pred_check
    _
  $region3: #{pair_model_forward.1} parent=0 // pred_check_branch
    %30 = sbr.rel (0) target = $region5
  $region4: #{pair_model_forward.1} parent=0 // pred_region
    _
  $region5: #{pair_model_forward.1} parent=0 // pred_fallthru
    _
  // Predicated region
  $region6: #{pair_model_forward.1} parent=0 // pred_check
    _
  $region7: #{pair_model_forward.1} parent=0 // pred_check_branch
    %32 = sbr.rel (0) target = $region9
  $region8: #{pair_model_forward.1} parent=0 // pred_region
    _
  $region9: #{pair_model_forward.1} parent=0 // pred_fallthru
    _
  // Predicated region
  $region10: #{pair_model_forward.1} parent=0 // pred_check
    _
  $region11: #{pair_model_forward.1} parent=0 // pred_check_branch
    %34 = sbr.rel (0) target = $region13
  $region12: #{pair_model_forward.1} parent=0 // pred_region
    _
  $region13: #{pair_model_forward.1} parent=0 // pred_fallthru
    _
  // Predicated region
  $region14: #{pair_model_forward.1} parent=0 // pred_check
    _
  $region15: #{pair_model_forward.1} parent=0 // pred_check_branch
    %36 = sbr.rel (0) target = $region17
  $region16: #{pair_model_forward.1} parent=0 // pred_region
    _
  $region17: #{pair_model_forward.1} parent=0 // pred_fallthru
    _
  // Predicated region
  $region18: #{pair_model_forward.1} parent=0 // pred_check
    _
  $region19: #{pair_model_forward.1} parent=0 // pred_check_branch
    %38 = sbr.rel (0) target = $region21
  $region20: #{pair_model_forward.1} parent=0 // pred_region
    _
  $region21: #{pair_model_forward.1} parent=0 // pred_fallthru
    _
  // Predicated region
  $region22: #{pair_model_forward.1} parent=0 // pred_check
    _
  $region23: #{pair_model_forward.1} parent=0 // pred_check_branch
    %40 = sbr.rel (0) target = $region25
  $region24: #{pair_model_forward.1} parent=0 // pred_region
    _
  $region25: #{pair_model_forward.1} parent=0 // pred_fallthru
    _
  // Predicated region
  $region26: #{pair_model_forward.1} parent=0 // pred_check
    _
  $region27: #{pair_model_forward.1} parent=0 // pred_check_branch
    %42 = sbr.rel (0) target = $region29
  $region28: #{pair_model_forward.1} parent=0 // pred_region
    _
  $region29: #{pair_model_forward.1} parent=0 // pred_fallthru
    _
  // Predicated region
  $region30: #{pair_model_forward.1} parent=0 // pred_check
    _
  $region31: #{pair_model_forward.1} parent=0 // pred_check_branch
    %44 = sbr.rel (0) target = $region33
  $region32: #{pair_model_forward.1} parent=0 // pred_region
    _
  $region33: #{pair_model_forward.1} parent=0 // pred_fallthru
    _
  // Predicated region
  $region34: #{pair_model_forward.1} parent=0 // pred_check
    _
  $region35: #{pair_model_forward.1} parent=0 // pred_check_branch
    %46 = sbr.rel (0) target = $region37
  $region36: #{pair_model_forward.1} parent=0 // pred_region
    _
  $region37: #{pair_model_forward.1} parent=0 // pred_fallthru
    _
  // Predicated region
  $region38: #{pair_model_forward.1} parent=0 // pred_check
    _
  $region39: #{pair_model_forward.1} parent=0 // pred_check_branch
    %48 = sbr.rel (0) target = $region41
  $region40: #{pair_model_forward.1} parent=0 // pred_region
    _
  $region41: #{pair_model_forward.1} parent=0 // pred_fallthru
    _
  // Predicated region
  $region42: #{pair_model_forward.1} parent=0 // pred_check
    _
  $region43: #{pair_model_forward.1} parent=0 // pred_check_branch
    %50 = sbr.rel (0) target = $region45
  $region44: #{pair_model_forward.1} parent=0 // pred_region
    _
  $region45: #{pair_model_forward.1} parent=0 // pred_fallthru
    _
  // Predicated region
  $region46: #{pair_model_forward.1} parent=0 // pred_check
    _
  $region47: #{pair_model_forward.1} parent=0 // pred_check_branch
    %52 = sbr.rel (0) target = $region49
  $region48: #{pair_model_forward.1} parent=0 // pred_region
    _
  $region49: #{pair_model_forward.1} parent=0 // pred_fallthru
    _
  // Predicated region
  $region50: #{pair_model_forward.1} parent=0 // pred_check
    _
  $region51: #{pair_model_forward.1} parent=0 // pred_check_branch
    %54 = sbr.rel (0) target = $region53
  $region52: #{pair_model_forward.1} parent=0 // pred_region
    _
  $region53: #{pair_model_forward.1} parent=0 // pred_fallthru
    _
  // Predicated region
  $region54: #{pair_model_forward.1} parent=0 // pred_check
    _
  $region55: #{pair_model_forward.1} parent=0 // pred_check_branch
    %56 = sbr.rel (0) target = $region57
  $region56: #{pair_model_forward.1} parent=0 // pred_region
    _
  $region57: #{pair_model_forward.1} parent=0 // pred_fallthru
    _
  // Predicated region
  $region58: #{pair_model_forward.1} parent=0 // pred_check
    _
  $region59: #{pair_model_forward.1} parent=0 // pred_check_branch
    %58 = sbr.rel (0) target = $region61
  $region60: #{pair_model_forward.1} parent=0 // pred_region
    _
  $region61: #{pair_model_forward.1} parent=0 // pred_fallthru
    _
  // Predicated region
  $region62: #{pair_model_forward.1} parent=0 // pred_check
    _
  $region63: #{pair_model_forward.1} parent=0 // pred_check_branch
    %60 = sbr.rel (0) target = $region65
  $region64: #{pair_model_forward.1} parent=0 // pred_region
    _
  $region65: #{pair_model_forward.1} parent=0 // pred_fallthru
    _
  // Predicated region
  $region66: #{pair_model_forward.1} parent=0 // pred_check
    _
  $region67: #{pair_model_forward.1} parent=0 // pred_check_branch
    %62 = sbr.rel (0) target = $region69
  $region68: #{pair_model_forward.1} parent=0 // pred_region
    _
  $region69: #{pair_model_forward.1} parent=0 // pred_fallthru
    _
  // Predicated region
  $region70: #{pair_model_forward.1} parent=0 // pred_check
    _
  $region71: #{pair_model_forward.1} parent=0 // pred_check_branch
    %64 = sbr.rel (0) target = $region73
  $region72: #{pair_model_forward.1} parent=0 // pred_region
    _
  $region73: #{pair_model_forward.1} parent=0 // pred_fallthru
    _
  // Predicated region
  $region74: #{pair_model_forward.1} parent=0 // pred_check
    _
  $region75: #{pair_model_forward.1} parent=0 // pred_check_branch
    %66 = sbr.rel (0) target = $region77
  $region76: #{pair_model_forward.1} parent=0 // pred_region
    _
  $region77: #{pair_model_forward.1} parent=0 // pred_fallthru
    _
  // Predicated region
  $region78: #{pair_model_forward.1} parent=0 // pred_check
    _
  $region79: #{pair_model_forward.1} parent=0 // pred_check_branch
    %68 = sbr.rel (0) target = $region81
  $region80: #{pair_model_forward.1} parent=0 // pred_region
    _
  $region81: #{pair_model_forward.1} parent=0 // pred_fallthru
    _
  // Predicated region
  $region82: #{pair_model_forward.1} parent=0 // pred_check
    _
  $region83: #{pair_model_forward.1} parent=0 // pred_check_branch
    %70 = sbr.rel (0) target = $region85
  $region84: #{pair_model_forward.1} parent=0 // pred_region
    _
  $region85: #{pair_model_forward.1} parent=0 // pred_fallthru
    _
  // Predicated region
  $region86: #{pair_model_forward.1} parent=0 // pred_check
    _
  $region87: #{pair_model_forward.1} parent=0 // pred_check_branch
    %72 = sbr.rel (0) target = $region89
  $region88: #{pair_model_forward.1} parent=0 // pred_region
    _
  $region89: #{pair_model_forward.1} parent=0 // pred_fallthru
    _
  %v73 = vld [vmem:[%s0] sm:$0xff]
  %v74 = vld [vmem:[%s0 + $0x8] sm:$0xff]
  %v75 = vld [vmem:[%s2] sm:$0x1]
  %v76 = vld [vmem:[%s3] sm:$0x1]
  %vm77 = vcmask 130048
  %v78 = vsel %vm77, %v73, 0.0
  %79 = vadd.xlane.f32.xlu0 %v78
  %v80 = vpop.xlane.xlu0 %79
  %v81 = vsel %vm77, %v74, 0.0
  %82 = vadd.xlane.f32.xlu0 %v81
  %v83 = vpop.xlane.xlu0 %82
  %v84 = vrcp.pop 16.0
  %v85 = vmul.f32 16.0, %v84
  %v86 = vsub.f32 1.0, %v85
  %v87 = vmul.f32 %v84, %v86
  %v88 = vadd.f32 %v84, %v87
  %vm89 = vweird.f32 %v84
  %v90 = vsel %vm89, %v84, %v88
  %v91 = vmul.f32 %v80, %v90
  %v92 = vmul.f32 %v83, %v90
  %v93 = vsub.f32 %v73, %v91
  %v94 = vsub.f32 %v74, %v92
  %v95 = vmul.f32 %v93, %v93
  %v96 = vmul.f32 %v94, %v94
  %v97 = vsel %vm77, %v95, 0.0
  %98 = vadd.xlane.f32.xlu0 %v97
  %v99 = vpop.xlane.xlu0 %98
  %v100 = vsel %vm77, %v96, 0.0
  %101 = vadd.xlane.f32.xlu0 %v100
  %v102 = vpop.xlane.xlu0 %101
  %v103 = vmul.f32 %v99, %v90
  %v104 = vmul.f32 %v102, %v90
  %v105 = vadd.f32 %v103, 1e-12
  %v106 = vadd.f32 %v104, 1e-12
  %v107 = vrsqrt.pop %v105
  %v108 = vmul.f32 %v107, %v105
  %v109 = vmul.f32 %v108, %v107
  %v110 = vmul.f32 0.5, %v109
  %v111 = vsub.f32 1.5, %v110
  %v112 = vmul.f32 %v107, %v111
  %vm113 = vweird.f32 %v105
  %vm114 = vweird.f32 %v107
  %vm115 = vmor %vm113, %vm114
  %v116 = vsel %vm115, %v107, %v112
  %v117 = vrsqrt.pop %v106
  %v118 = vmul.f32 %v117, %v106
  %v119 = vmul.f32 %v118, %v117
  %v120 = vmul.f32 0.5, %v119
  %v121 = vsub.f32 1.5, %v120
  %v122 = vmul.f32 %v117, %v121
  %vm123 = vweird.f32 %v106
  %vm124 = vweird.f32 %v117
  %vm125 = vmor %vm123, %vm124
  %v126 = vsel %vm125, %v117, %v122
  %v127 = vmul.f32 %v93, %v116
  %v128 = vmul.f32 %v94, %v126
  %v130 = vperm.slane %v75, 0
  %v132 = vmul.f32 %v127, %v130
  %v133 = vmul.f32 %v128, %v130
  %v135 = vperm.slane %v76, 0
  %v137 = vadd.f32 %v132, %v135
  %v138 = vadd.f32 %v133, %v135
  %v139 = vld [vmem:[%s4] sm:$0xff]
  %v140 = vld [vmem:[%s4 + $0x8] sm:$0xff]
  %v141 = vld [vmem:[%s5] sm:$0x1]
  %v143 = vperm.slane %v141, 0
  %v146 = vsel %vm77, %v137, 0
  %v149 = vsel %vm77, %v138, 0
  %151 = vmatpush.msra.mxu0 0.0
  %152 = vmatpush.msra.mxu0 0.0
  %153 = vmatpush.msra.mxu0 0.0
  %154 = vmatpush.msra.mxu0 0.0
  %155 = vmatpush.msra.mxu0 0.0
  %156 = vmatpush.msra.mxu0 0.0
  %157 = vmatpush.msra.mxu0 0.0
  %158 = vmatpush.msra.mxu0 0.0
  %159 = vmatpush.msra.mxu0 0.0
  %160 = vmatpush.msra.mxu0 0.0
  %161 = vmatpush.msra.mxu0 0.0
  %162 = vmatpush.msra.mxu0 0.0
  %163 = vmatpush.msra.mxu0 0.0
  %164 = vmatpush.msra.mxu0 0.0
  %165 = vmatpush.msra.mxu0 %v140
  %166 = vmatpush.msra.mxu0 %v139
  %167 = vmatmul.f32.gmra.mxu0 %v146
  %v168 = vpop.f32.mrf.mxu0
  %v169 = vadd.f32 %v143, %v168
  %170 = vmatmul.f32.gmra.mxu0 %v149
  %v171 = vpop.f32.mrf.mxu0
  %v172 = vadd.f32 %v143, %v171
  %173 = vdwg.mxu0
  %v174 = vld [vmem:[%s1] sm:$0x3]
  %v175 = vsub.f32 1.0, %v174
  %v176 = vmul.f32 %v175, -10000.0
  %v177 = vld [vmem:[%s6] sm:$0xff]
  %v178 = vld [vmem:[%s6 + $0x8] sm:$0xff]
  %v179 = vld [vmem:[%s6 + $0x10] sm:$0xff]
  %v180 = vld [vmem:[%s6 + $0x18] sm:$0xff]
  %v181 = vld [vmem:[%s7] sm:$0x1]
  %v182 = vld [vmem:[%s8] sm:$0xff]
  %v183 = vld [vmem:[%s8 + $0x8] sm:$0xff]
  %v184 = vld [vmem:[%s8 + $0x10] sm:$0xff]
  %v185 = vld [vmem:[%s8 + $0x18] sm:$0xff]
  %v186 = vld [vmem:[%s9] sm:$0x1]
  %v187 = vld [vmem:[%s10] sm:$0x1]
  %v188 = vld [vmem:[%s11] sm:$0x1]
  %v189 = vld [vmem:[%s12] sm:$0xff]
  %v190 = vld [vmem:[%s12 + $0x8] sm:$0xff]
  %v191 = vld [vmem:[%s12 + $0x10] sm:$0xff]
  %v192 = vld [vmem:[%s12 + $0x18] sm:$0xff]
  %v193 = vld [vmem:[%s13] sm:$0x1]
  %v194 = vld [vmem:[%s14] sm:$0xff]
  %v195 = vld [vmem:[%s14 + $0x8] sm:$0xff]
  %v196 = vld [vmem:[%s14 + $0x10] sm:$0xff]
  %v197 = vld [vmem:[%s14 + $0x18] sm:$0xff]
  %v198 = vld [vmem:[%s14 + $0x20] sm:$0xff]
  %v199 = vld [vmem:[%s14 + $0x28] sm:$0xff]
  %v200 = vld [vmem:[%s14 + $0x30] sm:$0xff]
  %v201 = vld [vmem:[%s14 + $0x38] sm:$0xff]
  %v202 = vld [vmem:[%s15] sm:$0x1]
  %v203 = vld [vmem:[%s16] sm:$0x1]
  %v204 = vld [vmem:[%s17] sm:$0x1]
  %v206 = vperm.slane %v181, 0
  %vm208 = vcmask 261120
  %v210 = vsel %vm208, %v169, 0
  %v213 = vsel %vm208, %v172, 0
  %215 = vmatpush.msra.mxu0 0.0
  %216 = vmatpush.msra.mxu0 0.0
  %217 = vmatpush.msra.mxu0 0.0
  %218 = vmatpush.msra.mxu0 0.0
  %219 = vmatpush.msra.mxu0 0.0
  %220 = vmatpush.msra.mxu0 0.0
  %221 = vmatpush.msra.mxu0 0.0
  %222 = vmatpush.msra.mxu0 0.0
  %223 = vmatpush.msra.mxu0 0.0
  %224 = vmatpush.msra.mxu0 0.0
  %225 = vmatpush.msra.mxu0 0.0
  %226 = vmatpush.msra.mxu0 0.0
  %227 = vmatpush.msra.mxu0 %v180
  %228 = vmatpush.msra.mxu0 %v179
  %229 = vmatpush.msra.mxu0 %v178
  %230 = vmatpush.msra.mxu0 %v177
  %231 = vmatmul.f32.gmra.mxu0 %v210
  %v232 = vpop.f32.mrf.mxu0
  %v233 = vadd.f32 %v206, %v232
  %234 = vmatmul.f32.gmra.mxu0 %v213
  %v235 = vpop.f32.mrf.mxu0
  %v236 = vadd.f32 %v206, %v235
  %237 = vdwg.mxu0
  %239 = vrot.lane.b32.xlu0 %v233, 96
  %v240 = vpop.permute.xlu0 %239
  %vm241 = vcmask 64512
  %v242 = vsel %vm241, %v233, 0
  %v244 = vsel %vm241, %v240, 0
  %246 = vmatpush.xpose.msra.mxu0 0.0
  %247 = vmatpush.xpose.msra.mxu0 0.0
  %248 = vmatpush.xpose.msra.mxu0 0.0
  %249 = vmatpush.xpose.msra.mxu0 0.0
  %250 = vmatpush.xpose.msra.mxu0 0.0
  %251 = vmatpush.xpose.msra.mxu0 0.0
  %252 = vmatpush.xpose.msra.mxu0 0.0
  %253 = vmatpush.xpose.msra.mxu0 0.0
  %254 = vmatpush.xpose.msra.mxu0 0.0
  %255 = vmatpush.xpose.msra.mxu0 0.0
  %256 = vmatpush.xpose.msra.mxu0 0.0
  %257 = vmatpush.xpose.msra.mxu0 0.0
  %258 = vmatpush.xpose.msra.mxu0 0.0
  %259 = vmatpush.xpose.msra.mxu0 0.0
  %260 = vmatpush.xpose.msra.mxu0 0.0
  %261 = vmatpush.xpose.msra.mxu0 %v244
  %262 = vmatmul.f32.gmra.mxu0 %v242
  %v263 = vpop.f32.mrf.mxu0
  %v264 = vadd.f32 0.0, %v263
  %265 = vdwg.mxu0
  %v266 = vmul.f32 %v264, 0.35355338
  %v267 = vperm.slane %v176, 0
  %v268 = vadd.f32 %v266, %v267
  %v269 = vsel %vm241, %v268, -inf
  %270 = vmax.xlane.f32.xlu0 %v269
  %v271 = vpop.xlane.xlu0 %270
  %v272 = vsub.f32 %v268, %v271
  %v273 = vmul.f32 %v272, 1.442695
  %v274 = vpow.pop %v273
  %v275 = vsel %vm241, %v274, 0.0
  %276 = vadd.xlane.f32.xlu0 %v275
  %v277 = vpop.xlane.xlu0 %276
  %v278 = vrcp.pop %v277
  %v279 = vmul.f32 %v274, %v278
  %280 = vrot.lane.b32.xlu0 %v233, 64
  %v281 = vpop.permute.xlu0 %280
  %v284 = vsel %vm241, %v279, 0
  %286 = vmatpush.msra.mxu0 0.0
  %287 = vmatpush.msra.mxu0 0.0
  %288 = vmatpush.msra.mxu0 0.0
  %289 = vmatpush.msra.mxu0 0.0
  %290 = vmatpush.msra.mxu0 0.0
  %291 = vmatpush.msra.mxu0 0.0
  %292 = vmatpush.msra.mxu0 0.0
  %293 = vmatpush.msra.mxu0 0.0
  %294 = vmatpush.msra.mxu0 0.0
  %295 = vmatpush.msra.mxu0 0.0
  %296 = vmatpush.msra.mxu0 0.0
  %297 = vmatpush.msra.mxu0 0.0
  %298 = vmatpush.msra.mxu0 0.0
  %299 = vmatpush.msra.mxu0 0.0
  %300 = vmatpush.msra.mxu0 0.0
  %301 = vmatpush.msra.mxu0 %v281
  %302 = vmatmul.f32.gmra.mxu0 %v284
  %v303 = vpop.f32.mrf.mxu0
  %v304 = vadd.f32 0.0, %v303
  %305 = vdwg.mxu0
  %306 = vst.msk [vmem:[#allocation2] sm:$0xff] %vm241, %v304
  %307 = vrot.lane.b32.xlu0 %v233, 120
  %v308 = vpop.permute.xlu0 %307
  %309 = vrot.lane.b32.xlu0 %v233, 88
  %v310 = vpop.permute.xlu0 %309
  %v311 = vsel %vm241, %v308, 0
  %v313 = vsel %vm241, %v310, 0
  %315 = vmatpush.xpose.msra.mxu0 0.0
  %316 = vmatpush.xpose.msra.mxu0 0.0
  %317 = vmatpush.xpose.msra.mxu0 0.0
  %318 = vmatpush.xpose.msra.mxu0 0.0
  %319 = vmatpush.xpose.msra.mxu0 0.0
  %320 = vmatpush.xpose.msra.mxu0 0.0
  %321 = vmatpush.xpose.msra.mxu0 0.0
  %322 = vmatpush.xpose.msra.mxu0 0.0
  %323 = vmatpush.xpose.msra.mxu0 0.0
  %324 = vmatpush.xpose.msra.mxu0 0.0
  %325 = vmatpush.xpose.msra.mxu0 0.0
  %326 = vmatpush.xpose.msra.mxu0 0.0
  %327 = vmatpush.xpose.msra.mxu0 0.0
  %328 = vmatpush.xpose.msra.mxu0 0.0
  %329 = vmatpush.xpose.msra.mxu0 0.0
  %330 = vmatpush.xpose.msra.mxu0 %v313
  %331 = vmatmul.f32.gmra.mxu0 %v311
  %v332 = vpop.f32.mrf.mxu0
  %v333 = vadd.f32 0.0, %v332
  %334 = vdwg.mxu0
  %v335 = vmul.f32 %v333, 0.35355338
  %v336 = vadd.f32 %v335, %v267
  %v337 = vsel %vm241, %v336, -inf
  %338 = vmax.xlane.f32.xlu0 %v337
  %v339 = vpop.xlane.xlu0 %338
  %v340 = vsub.f32 %v336, %v339
  %v341 = vmul.f32 %v340, 1.442695
  %v342 = vpow.pop %v341
  %v343 = vsel %vm241, %v342, 0.0
  %344 = vadd.xlane.f32.xlu0 %v343
  %v345 = vpop.xlane.xlu0 %344
  %v346 = vrcp.pop %v345
  %v347 = vmul.f32 %v342, %v346
  %348 = vrot.lane.b32.xlu0 %v233, 56
  %v349 = vpop.permute.xlu0 %348
  %v352 = vsel %vm241, %v347, 0
  %354 = vmatpush.msra.mxu0 0.0
  %355 = vmatpush.msra.mxu0 0.0
  %356 = vmatpush.msra.mxu0 0.0
  %357 = vmatpush.msra.mxu0 0.0
  %358 = vmatpush.msra.mxu0 0.0
  %359 = vmatpush.msra.mxu0 0.0
  %360 = vmatpush.msra.mxu0 0.0
  %361 = vmatpush.msra.mxu0 0.0
  %362 = vmatpush.msra.mxu0 0.0
  %363 = vmatpush.msra.mxu0 0.0
  %364 = vmatpush.msra.mxu0 0.0
  %365 = vmatpush.msra.mxu0 0.0
  %366 = vmatpush.msra.mxu0 0.0
  %367 = vmatpush.msra.mxu0 0.0
  %368 = vmatpush.msra.mxu0 0.0
  %369 = vmatpush.msra.mxu0 %v349
  %370 = vmatmul.f32.gmra.mxu0 %v352
  %v371 = vpop.f32.mrf.mxu0
  %v372 = vadd.f32 0.0, %v371
  %373 = vdwg.mxu0
  %375 = vrot.lane.b32.xlu0 %v372, 8
  %v376 = vpop.permute.xlu0 %375
  %vm378 = vcmask 130112
  %379 = vst.msk [vmem:[#allocation2] sm:$0xff] %vm378, %v376
  %380 = vrot.lane.b32.xlu0 %v233, 112
  %v381 = vpop.permute.xlu0 %380
  %382 = vrot.lane.b32.xlu0 %v233, 80
  %v383 = vpop.permute.xlu0 %382
  %v384 = vsel %vm241, %v381, 0
  %v386 = vsel %vm241, %v383, 0
  %388 = vmatpush.xpose.msra.mxu0 0.0
  %389 = vmatpush.xpose.msra.mxu0 0.0
  %390 = vmatpush.xpose.msra.mxu0 0.0
  %391 = vmatpush.xpose.msra.mxu0 0.0
  %392 = vmatpush.xpose.msra.mxu0 0.0
  %393 = vmatpush.xpose.msra.mxu0 0.0
  %394 = vmatpush.xpose.msra.mxu0 0.0
  %395 = vmatpush.xpose.msra.mxu0 0.0
  %396 = vmatpush.xpose.msra.mxu0 0.0
  %397 = vmatpush.xpose.msra.mxu0 0.0
  %398 = vmatpush.xpose.msra.mxu0 0.0
  %399 = vmatpush.xpose.msra.mxu0 0.0
  %400 = vmatpush.xpose.msra.mxu0 0.0
  %401 = vmatpush.xpose.msra.mxu0 0.0
  %402 = vmatpush.xpose.msra.mxu0 0.0
  %403 = vmatpush.xpose.msra.mxu0 %v386
  %404 = vmatmul.f32.gmra.mxu0 %v384
  %v405 = vpop.f32.mrf.mxu0
  %v406 = vadd.f32 0.0, %v405
  %407 = vdwg.mxu0
  %v408 = vmul.f32 %v406, 0.35355338
  %v409 = vadd.f32 %v408, %v267
  %v410 = vsel %vm241, %v409, -inf
  %411 = vmax.xlane.f32.xlu0 %v410
  %v412 = vpop.xlane.xlu0 %411
  %v413 = vsub.f32 %v409, %v412
  %v414 = vmul.f32 %v413, 1.442695
  %v415 = vpow.pop %v414
  %v416 = vsel %vm241, %v415, 0.0
  %417 = vadd.xlane.f32.xlu0 %v416
  %v418 = vpop.xlane.xlu0 %417
  %v419 = vrcp.pop %v418
  %v420 = vmul.f32 %v415, %v419
  %421 = vrot.lane.b32.xlu0 %v233, 48
  %v422 = vpop.permute.xlu0 %421
  %v425 = vsel %vm241, %v420, 0
  %427 = vmatpush.msra.mxu0 0.0
  %428 = vmatpush.msra.mxu0 0.0
  %429 = vmatpush.msra.mxu0 0.0
  %430 = vmatpush.msra.mxu0 0.0
  %431 = vmatpush.msra.mxu0 0.0
  %432 = vmatpush.msra.mxu0 0.0
  %433 = vmatpush.msra.mxu0 0.0
  %434 = vmatpush.msra.mxu0 0.0
  %435 = vmatpush.msra.mxu0 0.0
  %436 = vmatpush.msra.mxu0 0.0
  %437 = vmatpush.msra.mxu0 0.0
  %438 = vmatpush.msra.mxu0 0.0
  %439 = vmatpush.msra.mxu0 0.0
  %440 = vmatpush.msra.mxu0 0.0
  %441 = vmatpush.msra.mxu0 0.0
  %442 = vmatpush.msra.mxu0 %v422
  %443 = vmatmul.f32.gmra.mxu0 %v425
  %v444 = vpop.f32.mrf.mxu0
  %v445 = vadd.f32 0.0, %v444
  %446 = vdwg.mxu0
  %448 = vrot.lane.b32.xlu0 %v445, 16
  %v449 = vpop.permute.xlu0 %448
  %vm451 = vcmask 195712
  %452 = vst.msk [vmem:[#allocation2] sm:$0xff] %vm451, %v449
  %453 = vrot.lane.b32.xlu0 %v233, 104
  %v454 = vpop.permute.xlu0 %453
  %455 = vrot.lane.b32.xlu0 %v233, 72
  %v456 = vpop.permute.xlu0 %455
  %v457 = vsel %vm241, %v454, 0
  %v459 = vsel %vm241, %v456, 0
  %461 = vmatpush.xpose.msra.mxu0 0.0
  %462 = vmatpush.xpose.msra.mxu0 0.0
  %463 = vmatpush.xpose.msra.mxu0 0.0
  %464 = vmatpush.xpose.msra.mxu0 0.0
  %465 = vmatpush.xpose.msra.mxu0 0.0
  %466 = vmatpush.xpose.msra.mxu0 0.0
  %467 = vmatpush.xpose.msra.mxu0 0.0
  %468 = vmatpush.xpose.msra.mxu0 0.0
  %469 = vmatpush.xpose.msra.mxu0 0.0
  %470 = vmatpush.xpose.msra.mxu0 0.0
  %471 = vmatpush.xpose.msra.mxu0 0.0
  %472 = vmatpush.xpose.msra.mxu0 0.0
  %473 = vmatpush.xpose.msra.mxu0 0.0
  %474 = vmatpush.xpose.msra.mxu0 0.0
  %475 = vmatpush.xpose.msra.mxu0 0.0
  %476 = vmatpush.xpose.msra.mxu0 %v459
  %477 = vmatmul.f32.gmra.mxu0 %v457
  %v478 = vpop.f32.mrf.mxu0
  %v479 = vadd.f32 0.0, %v478
  %480 = vdwg.mxu0
  %v481 = vmul.f32 %v479, 0.35355338
  %v482 = vadd.f32 %v481, %v267
  %v483 = vsel %vm241, %v482, -inf
  %484 = vmax.xlane.f32.xlu0 %v483
  %v485 = vpop.xlane.xlu0 %484
  %v486 = vsub.f32 %v482, %v485
  %v487 = vmul.f32 %v486, 1.442695
  %v488 = vpow.pop %v487
  %v489 = vsel %vm241, %v488, 0.0
  %490 = vadd.xlane.f32.xlu0 %v489
  %v491 = vpop.xlane.xlu0 %490
  %v492 = vrcp.pop %v491
  %v493 = vmul.f32 %v488, %v492
  %494 = vrot.lane.b32.xlu0 %v233, 40
  %v495 = vpop.permute.xlu0 %494
  %v498 = vsel %vm241, %v493, 0
  %500 = vmatpush.msra.mxu0 0.0
  %501 = vmatpush.msra.mxu0 0.0
  %502 = vmatpush.msra.mxu0 0.0
  %503 = vmatpush.msra.mxu0 0.0
  %504 = vmatpush.msra.mxu0 0.0
  %505 = vmatpush.msra.mxu0 0.0
  %506 = vmatpush.msra.mxu0 0.0
  %507 = vmatpush.msra.mxu0 0.0
  %508 = vmatpush.msra.mxu0 0.0
  %509 = vmatpush.msra.mxu0 0.0
  %510 = vmatpush.msra.mxu0 0.0
  %511 = vmatpush.msra.mxu0 0.0
  %512 = vmatpush.msra.mxu0 0.0
  %513 = vmatpush.msra.mxu0 0.0
  %514 = vmatpush.msra.mxu0 0.0
  %515 = vmatpush.msra.mxu0 %v495
  %516 = vmatmul.f32.gmra.mxu0 %v498
  %v517 = vpop.f32.mrf.mxu0
  %v518 = vadd.f32 0.0, %v517
  %519 = vdwg.mxu0
  %521 = vrot.lane.b32.xlu0 %v518, 24
  %v522 = vpop.permute.xlu0 %521
  %vm524 = vcmask 261312
  %525 = vst.msk [vmem:[#allocation2] sm:$0xff] %vm524, %v522
  %527 = vrot.lane.b32.xlu0 %v236, 96
  %v528 = vpop.permute.xlu0 %527
  %v529 = vsel %vm241, %v236, 0
  %v531 = vsel %vm241, %v528, 0
  %533 = vmatpush.xpose.msra.mxu0 0.0
  %534 = vmatpush.xpose.msra.mxu0 0.0
  %535 = vmatpush.xpose.msra.mxu0 0.0
  %536 = vmatpush.xpose.msra.mxu0 0.0
  %537 = vmatpush.xpose.msra.mxu0 0.0
  %538 = vmatpush.xpose.msra.mxu0 0.0
  %539 = vmatpush.xpose.msra.mxu0 0.0
  %540 = vmatpush.xpose.msra.mxu0 0.0
  %541 = vmatpush.xpose.msra.mxu0 0.0
  %542 = vmatpush.xpose.msra.mxu0 0.0
  %543 = vmatpush.xpose.msra.mxu0 0.0
  %544 = vmatpush.xpose.msra.mxu0 0.0
  %545 = vmatpush.xpose.msra.mxu0 0.0
  %546 = vmatpush.xpose.msra.mxu0 0.0
  %547 = vmatpush.xpose.msra.mxu0 0.0
  %548 = vmatpush.xpose.msra.mxu0 %v531
  %549 = vmatmul.f32.gmra.mxu0 %v529
  %v550 = vpop.f32.mrf.mxu0
  %v551 = vadd.f32 0.0, %v550
  %552 = vdwg.mxu0
  %v553 = vmul.f32 %v551, 0.35355338
  %v554 = vperm.slane %v176, 1
  %v555 = vadd.f32 %v553, %v554
  %v556 = vsel %vm241, %v555, -inf
  %557 = vmax.xlane.f32.xlu0 %v556
  %v558 = vpop.xlane.xlu0 %557
  %v559 = vsub.f32 %v555, %v558
  %v560 = vmul.f32 %v559, 1.442695
  %v561 = vpow.pop %v560
  %v562 = vsel %vm241, %v561, 0.0
  %563 = vadd.xlane.f32.xlu0 %v562
  %v564 = vpop.xlane.xlu0 %563
  %v565 = vrcp.pop %v564
  %v566 = vmul.f32 %v561, %v565
  %567 = vrot.lane.b32.xlu0 %v236, 64
  %v568 = vpop.permute.xlu0 %567
  %v571 = vsel %vm241, %v566, 0
  %573 = vmatpush.msra.mxu0 0.0
  %574 = vmatpush.msra.mxu0 0.0
  %575 = vmatpush.msra.mxu0 0.0
  %576 = vmatpush.msra.mxu0 0.0
  %577 = vmatpush.msra.mxu0 0.0
  %578 = vmatpush.msra.mxu0 0.0
  %579 = vmatpush.msra.mxu0 0.0
  %580 = vmatpush.msra.mxu0 0.0
  %581 = vmatpush.msra.mxu0 0.0
  %582 = vmatpush.msra.mxu0 0.0
  %583 = vmatpush.msra.mxu0 0.0
  %584 = vmatpush.msra.mxu0 0.0
  %585 = vmatpush.msra.mxu0 0.0
  %586 = vmatpush.msra.mxu0 0.0
  %587 = vmatpush.msra.mxu0 0.0
  %588 = vmatpush.msra.mxu0 %v568
  %589 = vmatmul.f32.gmra.mxu0 %v571
  %v590 = vpop.f32.mrf.mxu0
  %v591 = vadd.f32 0.0, %v590
  %592 = vdwg.mxu0
  %593 = vst.msk [vmem:[#allocation2 + $0x8] sm:$0xff] %vm241, %v591
  %594 = vrot.lane.b32.xlu0 %v236, 120
  %v595 = vpop.permute.xlu0 %594
  %596 = vrot.lane.b32.xlu0 %v236, 88
  %v597 = vpop.permute.xlu0 %596
  %v598 = vsel %vm241, %v595, 0
  %v600 = vsel %vm241, %v597, 0
  %602 = vmatpush.xpose.msra.mxu0 0.0
  %603 = vmatpush.xpose.msra.mxu0 0.0
  %604 = vmatpush.xpose.msra.mxu0 0.0
  %605 = vmatpush.xpose.msra.mxu0 0.0
  %606 = vmatpush.xpose.msra.mxu0 0.0
  %607 = vmatpush.xpose.msra.mxu0 0.0
  %608 = vmatpush.xpose.msra.mxu0 0.0
  %609 = vmatpush.xpose.msra.mxu0 0.0
  %610 = vmatpush.xpose.msra.mxu0 0.0
  %611 = vmatpush.xpose.msra.mxu0 0.0
  %612 = vmatpush.xpose.msra.mxu0 0.0
  %613 = vmatpush.xpose.msra.mxu0 0.0
  %614 = vmatpush.xpose.msra.mxu0 0.0
  %615 = vmatpush.xpose.msra.mxu0 0.0
  %616 = vmatpush.xpose.msra.mxu0 0.0
  %617 = vmatpush.xpose.msra.mxu0 %v600
  %618 = vmatmul.f32.gmra.mxu0 %v598
  %v619 = vpop.f32.mrf.mxu0
  %v620 = vadd.f32 0.0, %v619
  %621 = vdwg.mxu0
  %v622 = vmul.f32 %v620, 0.35355338
  %v623 = vadd.f32 %v622, %v554
  %v624 = vsel %vm241, %v623, -inf
  %625 = vmax.xlane.f32.xlu0 %v624
  %v626 = vpop.xlane.xlu0 %625
  %v627 = vsub.f32 %v623, %v626
  %v628 = vmul.f32 %v627, 1.442695
  %v629 = vpow.pop %v628
  %v630 = vsel %vm241, %v629, 0.0
  %631 = vadd.xlane.f32.xlu0 %v630
  %v632 = vpop.xlane.xlu0 %631
  %v633 = vrcp.pop %v632
  %v634 = vmul.f32 %v629, %v633
  %635 = vrot.lane.b32.xlu0 %v236, 56
  %v636 = vpop.permute.xlu0 %635
  %v639 = vsel %vm241, %v634, 0
  %641 = vmatpush.msra.mxu0 0.0
  %642 = vmatpush.msra.mxu0 0.0
  %643 = vmatpush.msra.mxu0 0.0
  %644 = vmatpush.msra.mxu0 0.0
  %645 = vmatpush.msra.mxu0 0.0
  %646 = vmatpush.msra.mxu0 0.0
  %647 = vmatpush.msra.mxu0 0.0
  %648 = vmatpush.msra.mxu0 0.0
  %649 = vmatpush.msra.mxu0 0.0
  %650 = vmatpush.msra.mxu0 0.0
  %651 = vmatpush.msra.mxu0 0.0
  %652 = vmatpush.msra.mxu0 0.0
  %653 = vmatpush.msra.mxu0 0.0
  %654 = vmatpush.msra.mxu0 0.0
  %655 = vmatpush.msra.mxu0 0.0
  %656 = vmatpush.msra.mxu0 %v636
  %657 = vmatmul.f32.gmra.mxu0 %v639
  %v658 = vpop.f32.mrf.mxu0
  %v659 = vadd.f32 0.0, %v658
  %660 = vdwg.mxu0
  %662 = vrot.lane.b32.xlu0 %v659, 8
  %v663 = vpop.permute.xlu0 %662
  %665 = vst.msk [vmem:[#allocation2 + $0x8] sm:$0xff] %vm378, %v663
  %666 = vrot.lane.b32.xlu0 %v236, 112
  %v667 = vpop.permute.xlu0 %666
  %668 = vrot.lane.b32.xlu0 %v236, 80
  %v669 = vpop.permute.xlu0 %668
  %v670 = vsel %vm241, %v667, 0
  %v672 = vsel %vm241, %v669, 0
  %674 = vmatpush.xpose.msra.mxu0 0.0
  %675 = vmatpush.xpose.msra.mxu0 0.0
  %676 = vmatpush.xpose.msra.mxu0 0.0
  %677 = vmatpush.xpose.msra.mxu0 0.0
  %678 = vmatpush.xpose.msra.mxu0 0.0
  %679 = vmatpush.xpose.msra.mxu0 0.0
  %680 = vmatpush.xpose.msra.mxu0 0.0
  %681 = vmatpush.xpose.msra.mxu0 0.0
  %682 = vmatpush.xpose.msra.mxu0 0.0
  %683 = vmatpush.xpose.msra.mxu0 0.0
  %684 = vmatpush.xpose.msra.mxu0 0.0
  %685 = vmatpush.xpose.msra.mxu0 0.0
  %686 = vmatpush.xpose.msra.mxu0 0.0
  %687 = vmatpush.xpose.msra.mxu0 0.0
  %688 = vmatpush.xpose.msra.mxu0 0.0
  %689 = vmatpush.xpose.msra.mxu0 %v672
  %690 = vmatmul.f32.gmra.mxu0 %v670
  %v691 = vpop.f32.mrf.mxu0
  %v692 = vadd.f32 0.0, %v691
  %693 = vdwg.mxu0
  %v694 = vmul.f32 %v692, 0.35355338
  %v695 = vadd.f32 %v694, %v554
  %v696 = vsel %vm241, %v695, -inf
  %697 = vmax.xlane.f32.xlu0 %v696
  %v698 = vpop.xlane.xlu0 %697
  %v699 = vsub.f32 %v695, %v698
  %v700 = vmul.f32 %v699, 1.442695
  %v701 = vpow.pop %v700
  %v702 = vsel %vm241, %v701, 0.0
  %703 = vadd.xlane.f32.xlu0 %v702
  %v704 = vpop.xlane.xlu0 %703
  %v705 = vrcp.pop %v704
  %v706 = vmul.f32 %v701, %v705
  %707 = vrot.lane.b32.xlu0 %v236, 48
  %v708 = vpop.permute.xlu0 %707
  %v711 = vsel %vm241, %v706, 0
  %713 = vmatpush.msra.mxu0 0.0
  %714 = vmatpush.msra.mxu0 0.0
  %715 = vmatpush.msra.mxu0 0.0
  %716 = vmatpush.msra.mxu0 0.0
  %717 = vmatpush.msra.mxu0 0.0
  %718 = vmatpush.msra.mxu0 0.0
  %719 = vmatpush.msra.mxu0 0.0
  %720 = vmatpush.msra.mxu0 0.0
  %721 = vmatpush.msra.mxu0 0.0
  %722 = vmatpush.msra.mxu0 0.0
  %723 = vmatpush.msra.mxu0 0.0
  %724 = vmatpush.msra.mxu0 0.0
  %725 = vmatpush.msra.mxu0 0.0
  %726 = vmatpush.msra.mxu0 0.0
  %727 = vmatpush.msra.mxu0 0.0
  %728 = vmatpush.msra.mxu0 %v708
  %729 = vmatmul.f32.gmra.mxu0 %v711
  %v730 = vpop.f32.mrf.mxu0
  %v731 = vadd.f32 0.0, %v730
  %732 = vdwg.mxu0
  %734 = vrot.lane.b32.xlu0 %v731, 16
  %v735 = vpop.permute.xlu0 %734
  %737 = vst.msk [vmem:[#allocation2 + $0x8] sm:$0xff] %vm451, %v735
  %738 = vrot.lane.b32.xlu0 %v236, 104
  %v739 = vpop.permute.xlu0 %738
  %740 = vrot.lane.b32.xlu0 %v236, 72
  %v741 = vpop.permute.xlu0 %740
  %v742 = vsel %vm241, %v739, 0
  %v744 = vsel %vm241, %v741, 0
  %746 = vmatpush.xpose.msra.mxu0 0.0
  %747 = vmatpush.xpose.msra.mxu0 0.0
  %748 = vmatpush.xpose.msra.mxu0 0.0
  %749 = vmatpush.xpose.msra.mxu0 0.0
  %750 = vmatpush.xpose.msra.mxu0 0.0
  %751 = vmatpush.xpose.msra.mxu0 0.0
  %752 = vmatpush.xpose.msra.mxu0 0.0
  %753 = vmatpush.xpose.msra.mxu0 0.0
  %754 = vmatpush.xpose.msra.mxu0 0.0
  %755 = vmatpush.xpose.msra.mxu0 0.0
  %756 = vmatpush.xpose.msra.mxu0 0.0
  %757 = vmatpush.xpose.msra.mxu0 0.0
  %758 = vmatpush.xpose.msra.mxu0 0.0
  %759 = vmatpush.xpose.msra.mxu0 0.0
  %760 = vmatpush.xpose.msra.mxu0 0.0
  %761 = vmatpush.xpose.msra.mxu0 %v744
  %762 = vmatmul.f32.gmra.mxu0 %v742
  %v763 = vpop.f32.mrf.mxu0
  %v764 = vadd.f32 0.0, %v763
  %765 = vdwg.mxu0
  %v766 = vmul.f32 %v764, 0.35355338
  %v767 = vadd.f32 %v766, %v554
  %v768 = vsel %vm241, %v767, -inf
  %769 = vmax.xlane.f32.xlu0 %v768
  %v770 = vpop.xlane.xlu0 %769
  %v771 = vsub.f32 %v767, %v770
  %v772 = vmul.f32 %v771, 1.442695
  %v773 = vpow.pop %v772
  %v774 = vsel %vm241, %v773, 0.0
  %775 = vadd.xlane.f32.xlu0 %v774
  %v776 = vpop.xlane.xlu0 %775
  %v777 = vrcp.pop %v776
  %v778 = vmul.f32 %v773, %v777
  %779 = vrot.lane.b32.xlu0 %v236, 40
  %v780 = vpop.permute.xlu0 %779
  %v783 = vsel %vm241, %v778, 0
  %785 = vmatpush.msra.mxu0 0.0
  %786 = vmatpush.msra.mxu0 0.0
  %787 = vmatpush.msra.mxu0 0.0
  %788 = vmatpush.msra.mxu0 0.0
  %789 = vmatpush.msra.mxu0 0.0
  %790 = vmatpush.msra.mxu0 0.0
  %791 = vmatpush.msra.mxu0 0.0
  %792 = vmatpush.msra.mxu0 0.0
  %793 = vmatpush.msra.mxu0 0.0
  %794 = vmatpush.msra.mxu0 0.0
  %795 = vmatpush.msra.mxu0 0.0
  %796 = vmatpush.msra.mxu0 0.0
  %797 = vmatpush.msra.mxu0 0.0
  %798 = vmatpush.msra.mxu0 0.0
  %799 = vmatpush.msra.mxu0 0.0
  %800 = vmatpush.msra.mxu0 %v780
  %801 = vmatmul.f32.gmra.mxu0 %v783
  %v802 = vpop.f32.mrf.mxu0
  %v803 = vadd.f32 0.0, %v802
  %804 = vdwg.mxu0
  %806 = vrot.lane.b32.xlu0 %v803, 24
  %v807 = vpop.permute.xlu0 %806
  %809 = vst.msk [vmem:[#allocation2 + $0x8] sm:$0xff] %vm524, %v807
  %v810 = vld [vmem:[#allocation2] sm:$0xff]
  %v811 = vld [vmem:[#allocation2 + $0x8] sm:$0xff]
  %v813 = vperm.slane %v186, 0
  %v816 = vsel %vm208, %v810, 0
  %v819 = vsel %vm208, %v811, 0
  %821 = vmatpush.msra.mxu0 0.0
  %822 = vmatpush.msra.mxu0 0.0
  %823 = vmatpush.msra.mxu0 0.0
  %824 = vmatpush.msra.mxu0 0.0
  %825 = vmatpush.msra.mxu0 0.0
  %826 = vmatpush.msra.mxu0 0.0
  %827 = vmatpush.msra.mxu0 0.0
  %828 = vmatpush.msra.mxu0 0.0
  %829 = vmatpush.msra.mxu0 0.0
  %830 = vmatpush.msra.mxu0 0.0
  %831 = vmatpush.msra.mxu0 0.0
  %832 = vmatpush.msra.mxu0 0.0
  %833 = vmatpush.msra.mxu0 %v185
  %834 = vmatpush.msra.mxu0 %v184
  %835 = vmatpush.msra.mxu0 %v183
  %836 = vmatpush.msra.mxu0 %v182
  %837 = vmatmul.f32.gmra.mxu0 %v816
  %v838 = vpop.f32.mrf.mxu0
  %v839 = vadd.f32 %v813, %v838
  %840 = vmatmul.f32.gmra.mxu0 %v819
  %v841 = vpop.f32.mrf.mxu0
  %v842 = vadd.f32 %v813, %v841
  %843 = vdwg.mxu0
  %v844 = vadd.f32 %v839, %v169
  %v845 = vadd.f32 %v842, %v172
  %v846 = vsel %vm208, %v844, 0.0
  %847 = vadd.xlane.f32.xlu0 %v846
  %v848 = vpop.xlane.xlu0 %847
  %v849 = vsel %vm208, %v845, 0.0
  %850 = vadd.xlane.f32.xlu0 %v849
  %v851 = vpop.xlane.xlu0 %850
  %v852 = vrcp.pop 32.0
  %v853 = vmul.f32 32.0, %v852
  %v854 = vsub.f32 1.0, %v853
  %v855 = vmul.f32 %v852, %v854
  %v856 = vadd.f32 %v852, %v855
  %vm857 = vweird.f32 %v852
  %v858 = vsel %vm857, %v852, %v856
  %v859 = vmul.f32 %v848, %v858
  %v860 = vmul.f32 %v851, %v858
  %v861 = vsub.f32 %v844, %v859
  %v862 = vsub.f32 %v845, %v860
  %v863 = vmul.f32 %v861, %v861
  %v864 = vmul.f32 %v862, %v862
  %v865 = vsel %vm208, %v863, 0.0
  %866 = vadd.xlane.f32.xlu0 %v865
  %v867 = vpop.xlane.xlu0 %866
  %v868 = vsel %vm208, %v864, 0.0
  %869 = vadd.xlane.f32.xlu0 %v868
  %v870 = vpop.xlane.xlu0 %869
  %v871 = vmul.f32 %v867, %v858
  %v872 = vmul.f32 %v870, %v858
  %v873 = vadd.f32 %v871, 1e-12
  %v874 = vadd.f32 %v872, 1e-12
  %v875 = vrsqrt.pop %v873
  %v876 = vmul.f32 %v875, %v873
  %v877 = vmul.f32 %v876, %v875
  %v878 = vmul.f32 0.5, %v877
  %v879 = vsub.f32 1.5, %v878
  %v880 = vmul.f32 %v875, %v879
  %vm881 = vweird.f32 %v873
  %vm882 = vweird.f32 %v875
  %vm883 = vmor %vm881, %vm882
  %v884 = vsel %vm883, %v875, %v880
  %v885 = vrsqrt.pop %v874
  %v886 = vmul.f32 %v885, %v874
  %v887 = vmul.f32 %v886, %v885
  %v888 = vmul.f32 0.5, %v887
  %v889 = vsub.f32 1.5, %v888
  %v890 = vmul.f32 %v885, %v889
  %vm891 = vweird.f32 %v874
  %vm892 = vweird.f32 %v885
  %vm893 = vmor %vm891, %vm892
  %v894 = vsel %vm893, %v885, %v890
  %v895 = vmul.f32 %v861, %v884
  %v896 = vmul.f32 %v862, %v894
  %v898 = vperm.slane %v187, 0
  %v900 = vmul.f32 %v895, %v898
  %v901 = vmul.f32 %v896, %v898
  %v903 = vperm.slane %v188, 0
  %v905 = vadd.f32 %v900, %v903
  %v906 = vadd.f32 %v901, %v903
  %v908 = vperm.slane %v193, 0
  %v911 = vsel %vm208, %v905, 0
  %v914 = vsel %vm208, %v906, 0
  %916 = vmatpush.msra.mxu0 0.0
  %917 = vmatpush.msra.mxu0 0.0
  %918 = vmatpush.msra.mxu0 0.0
  %919 = vmatpush.msra.mxu0 0.0
  %920 = vmatpush.msra.mxu0 0.0
  %921 = vmatpush.msra.mxu0 0.0
  %922 = vmatpush.msra.mxu0 0.0
  %923 = vmatpush.msra.mxu0 0.0
  %924 = vmatpush.msra.mxu0 0.0
  %925 = vmatpush.msra.mxu0 0.0
  %926 = vmatpush.msra.mxu0 0.0
  %927 = vmatpush.msra.mxu0 0.0
  %928 = vmatpush.msra.mxu0 %v192
  %929 = vmatpush.msra.mxu0 %v191
  %930 = vmatpush.msra.mxu0 %v190
  %931 = vmatpush.msra.mxu0 %v189
  %932 = vmatmul.f32.gmra.mxu0 %v911
  %v933 = vpop.f32.mrf.mxu0
  %v934 = vadd.f32 %v908, %v933
  %935 = vmatmul.f32.gmra.mxu0 %v914
  %v936 = vpop.f32.mrf.mxu0
  %v937 = vadd.f32 %v908, %v936
  %938 = vdwg.mxu0
  %v939 = vmul.f32 %v934, 0.5
  %v940 = vmul.f32 %v937, 0.5
  %v941 = vmul.f32 %v934, 0.044715
  %v942 = vmul.f32 %v937, 0.044715
  %v943 = vmul.f32 %v941, %v934
  %v944 = vmul.f32 %v942, %v937
  %v945 = vmul.f32 %v943, %v934
  %v946 = vmul.f32 %v944, %v937
  %v947 = vadd.f32 %v934, %v945
  %v948 = vadd.f32 %v937, %v946
  %v949 = vmul.f32 %v947, 0.7978846
  %v950 = vmul.f32 %v948, 0.7978846
  %v951 = vtanh.pop %v949
  %v952 = vtanh.pop %v950
  %v953 = vadd.f32 %v951, 1.0
  %v954 = vadd.f32 %v952, 1.0
  %v955 = vmul.f32 %v939, %v953
  %v956 = vmul.f32 %v940, %v954
  %v958 = vperm.slane %v202, 0
  %vm960 = vcmask 523264
  %v962 = vsel %vm960, %v955, 0
  %v965 = vsel %vm960, %v956, 0
  %967 = vmatpush.msra.mxu0 0.0
  %968 = vmatpush.msra.mxu0 0.0
  %969 = vmatpush.msra.mxu0 0.0
  %970 = vmatpush.msra.mxu0 0.0
  %971 = vmatpush.msra.mxu0 0.0
  %972 = vmatpush.msra.mxu0 0.0
  %973 = vmatpush.msra.mxu0 0.0
  %974 = vmatpush.msra.mxu0 0.0
  %975 = vmatpush.msra.mxu0 %v201
  %976 = vmatpush.msra.mxu0 %v200
  %977 = vmatpush.msra.mxu0 %v199
  %978 = vmatpush.msra.mxu0 %v198
  %979 = vmatpush.msra.mxu0 %v197
  %980 = vmatpush.msra.mxu0 %v196
  %981 = vmatpush.msra.mxu0 %v195
  %982 = vmatpush.msra.mxu0 %v194
  %983 = vmatmul.f32.gmra.mxu0 %v962
  %v984 = vpop.f32.mrf.mxu0
  %v985 = vadd.f32 %v958, %v984
  %986 = vmatmul.f32.gmra.mxu0 %v965
  %v987 = vpop.f32.mrf.mxu0
  %v988 = vadd.f32 %v958, %v987
  %989 = vdwg.mxu0
  %v990 = vadd.f32 %v985, %v905
  %v991 = vadd.f32 %v988, %v906
  %v992 = vsel %vm208, %v990, 0.0
  %993 = vadd.xlane.f32.xlu0 %v992
  %v994 = vpop.xlane.xlu0 %993
  %v995 = vsel %vm208, %v991, 0.0
  %996 = vadd.xlane.f32.xlu0 %v995
  %v997 = vpop.xlane.xlu0 %996
  %v998 = vmul.f32 %v994, %v858
  %v999 = vmul.f32 %v997, %v858
  %v1000 = vsub.f32 %v990, %v998
  %v1001 = vsub.f32 %v991, %v999
  %v1002 = vmul.f32 %v1000, %v1000
  %v1003 = vmul.f32 %v1001, %v1001
  %v1004 = vsel %vm208, %v1002, 0.0
  %1005 = vadd.xlane.f32.xlu0 %v1004
  %v1006 = vpop.xlane.xlu0 %1005
  %v1007 = vsel %vm208, %v1003, 0.0
  %1008 = vadd.xlane.f32.xlu0 %v1007
  %v1009 = vpop.xlane.xlu0 %1008
  %v1010 = vmul.f32 %v1006, %v858
  %v1011 = vmul.f32 %v1009, %v858
  %v1012 = vadd.f32 %v1010, 1e-12
  %v1013 = vadd.f32 %v1011, 1e-12
  %v1014 = vrsqrt.pop %v1012
  %v1015 = vmul.f32 %v1014, %v1012
  %v1016 = vmul.f32 %v1015, %v1014
  %v1017 = vmul.f32 0.5, %v1016
  %v1018 = vsub.f32 1.5, %v1017
  %v1019 = vmul.f32 %v1014, %v1018
  %vm1020 = vweird.f32 %v1012
  %vm1021 = vweird.f32 %v1014
  %vm1022 = vmor %vm1020, %vm1021
  %v1023 = vsel %vm1022, %v1014, %v1019
  %v1024 = vrsqrt.pop %v1013
  %v1025 = vmul.f32 %v1024, %v1013
  %v1026 = vmul.f32 %v1025, %v1024
  %v1027 = vmul.f32 0.5, %v1026
  %v1028 = vsub.f32 1.5, %v1027
  %v1029 = vmul.f32 %v1024, %v1028
  %vm1030 = vweird.f32 %v1013
  %vm1031 = vweird.f32 %v1024
  %vm1032 = vmor %vm1030, %vm1031
  %v1033 = vsel %vm1032, %v1024, %v1029
  %v1034 = vmul.f32 %v1000, %v1023
  %v1035 = vmul.f32 %v1001, %v1033
  %v1037 = vperm.slane %v203, 0
  %v1039 = vmul.f32 %v1034, %v1037
  %v1040 = vmul.f32 %v1035, %v1037
  %v1042 = vperm.slane %v204, 0
  %v1044 = vadd.f32 %v1039, %v1042
  %v1045 = vadd.f32 %v1040, %v1042
  %v1047 = vsel %vm208, %v1044, 0
  %v1050 = vsel %vm208, %v1045, 0
  %1052 = vmatpush.msra.mxu0 0.0
  %1053 = vmatpush.msra.mxu0 0.0
  %1054 = vmatpush.msra.mxu0 0.0
  %1055 = vmatpush.msra.mxu0 0.0
  %1056 = vmatpush.msra.mxu0 0.0
  %1057 = vmatpush.msra.mxu0 0.0
  %1058 = vmatpush.msra.mxu0 0.0
  %1059 = vmatpush.msra.mxu0 0.0
  %1060 = vmatpush.msra.mxu0 0.0
  %1061 = vmatpush.msra.mxu0 0.0
  %1062 = vmatpush.msra.mxu0 0.0
  %1063 = vmatpush.msra.mxu0 0.0
  %1064 = vmatpush.msra.mxu0 %v180
  %1065 = vmatpush.msra.mxu0 %v179
  %1066 = vmatpush.msra.mxu0 %v178
  %1067 = vmatpush.msra.mxu0 %v177
  %1068 = vmatmul.f32.gmra.mxu0 %v1047
  %v1069 = vpop.f32.mrf.mxu0
  %v1070 = vadd.f32 %v206, %v1069
  %1071 = vmatmul.f32.gmra.mxu0 %v1050
  %v1072 = vpop.f32.mrf.mxu0
  %v1073 = vadd.f32 %v206, %v1072
  %1074 = vdwg.mxu0
  %1076 = vrot.lane.b32.xlu0 %v1070, 96
  %v1077 = vpop.permute.xlu0 %1076
  %v1078 = vsel %vm241, %v1070, 0
  %v1080 = vsel %vm241, %v1077, 0
  %1082 = vmatpush.xpose.msra.mxu0 0.0
  %1083 = vmatpush.xpose.msra.mxu0 0.0
  %1084 = vmatpush.xpose.msra.mxu0 0.0
  %1085 = vmatpush.xpose.msra.mxu0 0.0
  %1086 = vmatpush.xpose.msra.mxu0 0.0
  %1087 = vmatpush.xpose.msra.mxu0 0.0
  %1088 = vmatpush.xpose.msra.mxu0 0.0
  %1089 = vmatpush.xpose.msra.mxu0 0.0
  %1090 = vmatpush.xpose.msra.mxu0 0.0
  %1091 = vmatpush.xpose.msra.mxu0 0.0
  %1092 = vmatpush.xpose.msra.mxu0 0.0
  %1093 = vmatpush.xpose.msra.mxu0 0.0
  %1094 = vmatpush.xpose.msra.mxu0 0.0
  %1095 = vmatpush.xpose.msra.mxu0 0.0
  %1096 = vmatpush.xpose.msra.mxu0 0.0
  %1097 = vmatpush.xpose.msra.mxu0 %v1080
  %1098 = vmatmul.f32.gmra.mxu0 %v1078
  %v1099 = vpop.f32.mrf.mxu0
  %v1100 = vadd.f32 0.0, %v1099
  %1101 = vdwg.mxu0
  %v1102 = vmul.f32 %v1100, 0.35355338
  %v1103 = vadd.f32 %v1102, %v267
  %v1104 = vsel %vm241, %v1103, -inf
  %1105 = vmax.xlane.f32.xlu0 %v1104
  %v1106 = vpop.xlane.xlu0 %1105
  %v1107 = vsub.f32 %v1103, %v1106
  %v1108 = vmul.f32 %v1107, 1.442695
  %v1109 = vpow.pop %v1108
  %v1110 = vsel %vm241, %v1109, 0.0
  %1111 = vadd.xlane.f32.xlu0 %v1110
  %v1112 = vpop.xlane.xlu0 %1111
  %v1113 = vrcp.pop %v1112
  %v1114 = vmul.f32 %v1109, %v1113
  %1115 = vrot.lane.b32.xlu0 %v1070, 64
  %v1116 = vpop.permute.xlu0 %1115
  %v1119 = vsel %vm241, %v1114, 0
  %1121 = vmatpush.msra.mxu0 0.0
  %1122 = vmatpush.msra.mxu0 0.0
  %1123 = vmatpush.msra.mxu0 0.0
  %1124 = vmatpush.msra.mxu0 0.0
  %1125 = vmatpush.msra.mxu0 0.0
  %1126 = vmatpush.msra.mxu0 0.0
  %1127 = vmatpush.msra.mxu0 0.0
  %1128 = vmatpush.msra.mxu0 0.0
  %1129 = vmatpush.msra.mxu0 0.0
  %1130 = vmatpush.msra.mxu0 0.0
  %1131 = vmatpush.msra.mxu0 0.0
  %1132 = vmatpush.msra.mxu0 0.0
  %1133 = vmatpush.msra.mxu0 0.0
  %1134 = vmatpush.msra.mxu0 0.0
  %1135 = vmatpush.msra.mxu0 0.0
  %1136 = vmatpush.msra.mxu0 %v1116
  %1137 = vmatmul.f32.gmra.mxu0 %v1119
  %v1138 = vpop.f32.mrf.mxu0
  %v1139 = vadd.f32 0.0, %v1138
  %1140 = vdwg.mxu0
  %1141 = vst.msk [vmem:[#allocation2] sm:$0xff] %vm241, %v1139
  %1142 = vrot.lane.b32.xlu0 %v1070, 120
  %v1143 = vpop.permute.xlu0 %1142
  %1144 = vrot.lane.b32.xlu0 %v1070, 88
  %v1145 = vpop.permute.xlu0 %1144
  %v1146 = vsel %vm241, %v1143, 0
  %v1148 = vsel %vm241, %v1145, 0
  %1150 = vmatpush.xpose.msra.mxu0 0.0
  %1151 = vmatpush.xpose.msra.mxu0 0.0
  %1152 = vmatpush.xpose.msra.mxu0 0.0
  %1153 = vmatpush.xpose.msra.mxu0 0.0
  %1154 = vmatpush.xpose.msra.mxu0 0.0
  %1155 = vmatpush.xpose.msra.mxu0 0.0
  %1156 = vmatpush.xpose.msra.mxu0 0.0
  %1157 = vmatpush.xpose.msra.mxu0 0.0
  %1158 = vmatpush.xpose.msra.mxu0 0.0
  %1159 = vmatpush.xpose.msra.mxu0 0.0
  %1160 = vmatpush.xpose.msra.mxu0 0.0
  %1161 = vmatpush.xpose.msra.mxu0 0.0
  %1162 = vmatpush.xpose.msra.mxu0 0.0
  %1163 = vmatpush.xpose.msra.mxu0 0.0
  %1164 = vmatpush.xpose.msra.mxu0 0.0
  %1165 = vmatpush.xpose.msra.mxu0 %v1148
  %1166 = vmatmul.f32.gmra.mxu0 %v1146
  %v1167 = vpop.f32.mrf.mxu0
  %v1168 = vadd.f32 0.0, %v1167
  %1169 = vdwg.mxu0
  %v1170 = vmul.f32 %v1168, 0.35355338
  %v1171 = vadd.f32 %v1170, %v267
  %v1172 = vsel %vm241, %v1171, -inf
  %1173 = vmax.xlane.f32.xlu0 %v1172
  %v1174 = vpop.xlane.xlu0 %1173
  %v1175 = vsub.f32 %v1171, %v1174
  %v1176 = vmul.f32 %v1175, 1.442695
  %v1177 = vpow.pop %v1176
  %v1178 = vsel %vm241, %v1177, 0.0
  %1179 = vadd.xlane.f32.xlu0 %v1178
  %v1180 = vpop.xlane.xlu0 %1179
  %v1181 = vrcp.pop %v1180
  %v1182 = vmul.f32 %v1177, %v1181
  %1183 = vrot.lane.b32.xlu0 %v1070, 56
  %v1184 = vpop.permute.xlu0 %1183
  %v1187 = vsel %vm241, %v1182, 0
  %1189 = vmatpush.msra.mxu0 0.0
  %1190 = vmatpush.msra.mxu0 0.0
  %1191 = vmatpush.msra.mxu0 0.0
  %1192 = vmatpush.msra.mxu0 0.0
  %1193 = vmatpush.msra.mxu0 0.0
  %1194 = vmatpush.msra.mxu0 0.0
  %1195 = vmatpush.msra.mxu0 0.0
  %1196 = vmatpush.msra.mxu0 0.0
  %1197 = vmatpush.msra.mxu0 0.0
  %1198 = vmatpush.msra.mxu0 0.0
  %1199 = vmatpush.msra.mxu0 0.0
  %1200 = vmatpush.msra.mxu0 0.0
  %1201 = vmatpush.msra.mxu0 0.0
  %1202 = vmatpush.msra.mxu0 0.0
  %1203 = vmatpush.msra.mxu0 0.0
  %1204 = vmatpush.msra.mxu0 %v1184
  %1205 = vmatmul.f32.gmra.mxu0 %v1187
  %v1206 = vpop.f32.mrf.mxu0
  %v1207 = vadd.f32 0.0, %v1206
  %1208 = vdwg.mxu0
  %1210 = vrot.lane.b32.xlu0 %v1207, 8
  %v1211 = vpop.permute.xlu0 %1210
  %1213 = vst.msk [vmem:[#allocation2] sm:$0xff] %vm378, %v1211
  %1214 = vrot.lane.b32.xlu0 %v1070, 112
  %v1215 = vpop.permute.xlu0 %1214
  %1216 = vrot.lane.b32.xlu0 %v1070, 80
  %v1217 = vpop.permute.xlu0 %1216
  %v1218 = vsel %vm241, %v1215, 0
  %v1220 = vsel %vm241, %v1217, 0
  %1222 = vmatpush.xpose.msra.mxu0 0.0
  %1223 = vmatpush.xpose.msra.mxu0 0.0
  %1224 = vmatpush.xpose.msra.mxu0 0.0
  %1225 = vmatpush.xpose.msra.mxu0 0.0
  %1226 = vmatpush.xpose.msra.mxu0 0.0
  %1227 = vmatpush.xpose.msra.mxu0 0.0
  %1228 = vmatpush.xpose.msra.mxu0 0.0
  %1229 = vmatpush.xpose.msra.mxu0 0.0
  %1230 = vmatpush.xpose.msra.mxu0 0.0
  %1231 = vmatpush.xpose.msra.mxu0 0.0
  %1232 = vmatpush.xpose.msra.mxu0 0.0
  %1233 = vmatpush.xpose.msra.mxu0 0.0
  %1234 = vmatpush.xpose.msra.mxu0 0.0
  %1235 = vmatpush.xpose.msra.mxu0 0.0
  %1236 = vmatpush.xpose.msra.mxu0 0.0
  %1237 = vmatpush.xpose.msra.mxu0 %v1220
  %1238 = vmatmul.f32.gmra.mxu0 %v1218
  %v1239 = vpop.f32.mrf.mxu0
  %v1240 = vadd.f32 0.0, %v1239
  %1241 = vdwg.mxu0
  %v1242 = vmul.f32 %v1240, 0.35355338
  %v1243 = vadd.f32 %v1242, %v267
  %v1244 = vsel %vm241, %v1243, -inf
  %1245 = vmax.xlane.f32.xlu0 %v1244
  %v1246 = vpop.xlane.xlu0 %1245
  %v1247 = vsub.f32 %v1243, %v1246
  %v1248 = vmul.f32 %v1247, 1.442695
  %v1249 = vpow.pop %v1248
  %v1250 = vsel %vm241, %v1249, 0.0
  %1251 = vadd.xlane.f32.xlu0 %v1250
  %v1252 = vpop.xlane.xlu0 %1251
  %v1253 = vrcp.pop %v1252
  %v1254 = vmul.f32 %v1249, %v1253
  %1255 = vrot.lane.b32.xlu0 %v1070, 48
  %v1256 = vpop.permute.xlu0 %1255
  %v1259 = vsel %vm241, %v1254, 0
  %1261 = vmatpush.msra.mxu0 0.0
  %1262 = vmatpush.msra.mxu0 0.0
  %1263 = vmatpush.msra.mxu0 0.0
  %1264 = vmatpush.msra.mxu0 0.0
  %1265 = vmatpush.msra.mxu0 0.0
  %1266 = vmatpush.msra.mxu0 0.0
  %1267 = vmatpush.msra.mxu0 0.0
  %1268 = vmatpush.msra.mxu0 0.0
  %1269 = vmatpush.msra.mxu0 0.0
  %1270 = vmatpush.msra.mxu0 0.0
  %1271 = vmatpush.msra.mxu0 0.0
  %1272 = vmatpush.msra.mxu0 0.0
  %1273 = vmatpush.msra.mxu0 0.0
  %1274 = vmatpush.msra.mxu0 0.0
  %1275 = vmatpush.msra.mxu0 0.0
  %1276 = vmatpush.msra.mxu0 %v1256
  %1277 = vmatmul.f32.gmra.mxu0 %v1259
  %v1278 = vpop.f32.mrf.mxu0
  %v1279 = vadd.f32 0.0, %v1278
  %1280 = vdwg.mxu0
  %1282 = vrot.lane.b32.xlu0 %v1279, 16
  %v1283 = vpop.permute.xlu0 %1282
  %1285 = vst.msk [vmem:[#allocation2] sm:$0xff] %vm451, %v1283
  %1286 = vrot.lane.b32.xlu0 %v1070, 104
  %v1287 = vpop.permute.xlu0 %1286
  %1288 = vrot.lane.b32.xlu0 %v1070, 72
  %v1289 = vpop.permute.xlu0 %1288
  %v1290 = vsel %vm241, %v1287, 0
  %v1292 = vsel %vm241, %v1289, 0
  %1294 = vmatpush.xpose.msra.mxu0 0.0
  %1295 = vmatpush.xpose.msra.mxu0 0.0
  %1296 = vmatpush.xpose.msra.mxu0 0.0
  %1297 = vmatpush.xpose.msra.mxu0 0.0
  %1298 = vmatpush.xpose.msra.mxu0 0.0
  %1299 = vmatpush.xpose.msra.mxu0 0.0
  %1300 = vmatpush.xpose.msra.mxu0 0.0
  %1301 = vmatpush.xpose.msra.mxu0 0.0
  %1302 = vmatpush.xpose.msra.mxu0 0.0
  %1303 = vmatpush.xpose.msra.mxu0 0.0
  %1304 = vmatpush.xpose.msra.mxu0 0.0
  %1305 = vmatpush.xpose.msra.mxu0 0.0
  %1306 = vmatpush.xpose.msra.mxu0 0.0
  %1307 = vmatpush.xpose.msra.mxu0 0.0
  %1308 = vmatpush.xpose.msra.mxu0 0.0
  %1309 = vmatpush.xpose.msra.mxu0 %v1292
  %1310 = vmatmul.f32.gmra.mxu0 %v1290
  %v1311 = vpop.f32.mrf.mxu0
  %v1312 = vadd.f32 0.0, %v1311
  %1313 = vdwg.mxu0
  %v1314 = vmul.f32 %v1312, 0.35355338
  %v1315 = vadd.f32 %v1314, %v267
  %v1316 = vsel %vm241, %v1315, -inf
  %1317 = vmax.xlane.f32.xlu0 %v1316
  %v1318 = vpop.xlane.xlu0 %1317
  %v1319 = vsub.f32 %v1315, %v1318
  %v1320 = vmul.f32 %v1319, 1.442695
  %v1321 = vpow.pop %v1320
  %v1322 = vsel %vm241, %v1321, 0.0
  %1323 = vadd.xlane.f32.xlu0 %v1322
  %v1324 = vpop.xlane.xlu0 %1323
  %v1325 = vrcp.pop %v1324
  %v1326 = vmul.f32 %v1321, %v1325
  %1327 = vrot.lane.b32.xlu0 %v1070, 40
  %v1328 = vpop.permute.xlu0 %1327
  %v1331 = vsel %vm241, %v1326, 0
  %1333 = vmatpush.msra.mxu0 0.0
  %1334 = vmatpush.msra.mxu0 0.0
  %1335 = vmatpush.msra.mxu0 0.0
  %1336 = vmatpush.msra.mxu0 0.0
  %1337 = vmatpush.msra.mxu0 0.0
  %1338 = vmatpush.msra.mxu0 0.0
  %1339 = vmatpush.msra.mxu0 0.0
  %1340 = vmatpush.msra.mxu0 0.0
  %1341 = vmatpush.msra.mxu0 0.0
  %1342 = vmatpush.msra.mxu0 0.0
  %1343 = vmatpush.msra.mxu0 0.0
  %1344 = vmatpush.msra.mxu0 0.0
  %1345 = vmatpush.msra.mxu0 0.0
  %1346 = vmatpush.msra.mxu0 0.0
  %1347 = vmatpush.msra.mxu0 0.0
  %1348 = vmatpush.msra.mxu0 %v1328
  %1349 = vmatmul.f32.gmra.mxu0 %v1331
  %v1350 = vpop.f32.mrf.mxu0
  %v1351 = vadd.f32 0.0, %v1350
  %1352 = vdwg.mxu0
  %1354 = vrot.lane.b32.xlu0 %v1351, 24
  %v1355 = vpop.permute.xlu0 %1354
  %1357 = vst.msk [vmem:[#allocation2] sm:$0xff] %vm524, %v1355
  %1359 = vrot.lane.b32.xlu0 %v1073, 96
  %v1360 = vpop.permute.xlu0 %1359
  %v1361 = vsel %vm241, %v1073, 0
  %v1363 = vsel %vm241, %v1360, 0
  %1365 = vmatpush.xpose.msra.mxu0 0.0
  %1366 = vmatpush.xpose.msra.mxu0 0.0
  %1367 = vmatpush.xpose.msra.mxu0 0.0
  %1368 = vmatpush.xpose.msra.mxu0 0.0
  %1369 = vmatpush.xpose.msra.mxu0 0.0
  %1370 = vmatpush.xpose.msra.mxu0 0.0
  %1371 = vmatpush.xpose.msra.mxu0 0.0
  %1372 = vmatpush.xpose.msra.mxu0 0.0
  %1373 = vmatpush.xpose.msra.mxu0 0.0
  %1374 = vmatpush.xpose.msra.mxu0 0.0
  %1375 = vmatpush.xpose.msra.mxu0 0.0
  %1376 = vmatpush.xpose.msra.mxu0 0.0
  %1377 = vmatpush.xpose.msra.mxu0 0.0
  %1378 = vmatpush.xpose.msra.mxu0 0.0
  %1379 = vmatpush.xpose.msra.mxu0 0.0
  %1380 = vmatpush.xpose.msra.mxu0 %v1363
  %1381 = vmatmul.f32.gmra.mxu0 %v1361
  %v1382 = vpop.f32.mrf.mxu0
  %v1383 = vadd.f32 0.0, %v1382
  %1384 = vdwg.mxu0
  %v1385 = vmul.f32 %v1383, 0.35355338
  %v1386 = vadd.f32 %v1385, %v554
  %v1387 = vsel %vm241, %v1386, -inf
  %1388 = vmax.xlane.f32.xlu0 %v1387
  %v1389 = vpop.xlane.xlu0 %1388
  %v1390 = vsub.f32 %v1386, %v1389
  %v1391 = vmul.f32 %v1390, 1.442695
  %v1392 = vpow.pop %v1391
  %v1393 = vsel %vm241, %v1392, 0.0
  %1394 = vadd.xlane.f32.xlu0 %v1393
  %v1395 = vpop.xlane.xlu0 %1394
  %v1396 = vrcp.pop %v1395
  %v1397 = vmul.f32 %v1392, %v1396
  %1398 = vrot.lane.b32.xlu0 %v1073, 64
  %v1399 = vpop.permute.xlu0 %1398
  %v1402 = vsel %vm241, %v1397, 0
  %1404 = vmatpush.msra.mxu0 0.0
  %1405 = vmatpush.msra.mxu0 0.0
  %1406 = vmatpush.msra.mxu0 0.0
  %1407 = vmatpush.msra.mxu0 0.0
  %1408 = vmatpush.msra.mxu0 0.0
  %1409 = vmatpush.msra.mxu0 0.0
  %1410 = vmatpush.msra.mxu0 0.0
  %1411 = vmatpush.msra.mxu0 0.0
  %1412 = vmatpush.msra.mxu0 0.0
  %1413 = vmatpush.msra.mxu0 0.0
  %1414 = vmatpush.msra.mxu0 0.0
  %1415 = vmatpush.msra.mxu0 0.0
  %1416 = vmatpush.msra.mxu0 0.0
  %1417 = vmatpush.msra.mxu0 0.0
  %1418 = vmatpush.msra.mxu0 0.0
  %1419 = vmatpush.msra.mxu0 %v1399
  %1420 = vmatmul.f32.gmra.mxu0 %v1402
  %v1421 = vpop.f32.mrf.mxu0
  %v1422 = vadd.f32 0.0, %v1421
  %1423 = vdwg.mxu0
  %1424 = vst.msk [vmem:[#allocation2 + $0x8] sm:$0xff] %vm241, %v1422
  %1425 = vrot.lane.b32.xlu0 %v1073, 120
  %v1426 = vpop.permute.xlu0 %1425
  %1427 = vrot.lane.b32.xlu0 %v1073, 88
  %v1428 = vpop.permute.xlu0 %1427
  %v1429 = vsel %vm241, %v1426, 0
  %v1431 = vsel %vm241, %v1428, 0
  %1433 = vmatpush.xpose.msra.mxu0 0.0
  %1434 = vmatpush.xpose.msra.mxu0 0.0
  %1435 = vmatpush.xpose.msra.mxu0 0.0
  %1436 = vmatpush.xpose.msra.mxu0 0.0
  %1437 = vmatpush.xpose.msra.mxu0 0.0
  %1438 = vmatpush.xpose.msra.mxu0 0.0
  %1439 = vmatpush.xpose.msra.mxu0 0.0
  %1440 = vmatpush.xpose.msra.mxu0 0.0
  %1441 = vmatpush.xpose.msra.mxu0 0.0
  %1442 = vmatpush.xpose.msra.mxu0 0.0
  %1443 = vmatpush.xpose.msra.mxu0 0.0
  %1444 = vmatpush.xpose.msra.mxu0 0.0
  %1445 = vmatpush.xpose.msra.mxu0 0.0
  %1446 = vmatpush.xpose.msra.mxu0 0.0
  %1447 = vmatpush.xpose.msra.mxu0 0.0
  %1448 = vmatpush.xpose.msra.mxu0 %v1431
  %1449 = vmatmul.f32.gmra.mxu0 %v1429
  %v1450 = vpop.f32.mrf.mxu0
  %v1451 = vadd.f32 0.0, %v1450
  %1452 = vdwg.mxu0
  %v1453 = vmul.f32 %v1451, 0.35355338
  %v1454 = vadd.f32 %v1453, %v554
  %v1455 = vsel %vm241, %v1454, -inf
  %1456 = vmax.xlane.f32.xlu0 %v1455
  %v1457 = vpop.xlane.xlu0 %1456
  %v1458 = vsub.f32 %v1454, %v1457
  %v1459 = vmul.f32 %v1458, 1.442695
  %v1460 = vpow.pop %v1459
  %v1461 = vsel %vm241, %v1460, 0.0
  %1462 = vadd.xlane.f32.xlu0 %v1461
  %v1463 = vpop.xlane.xlu0 %1462
  %v1464 = vrcp.pop %v1463
  %v1465 = vmul.f32 %v1460, %v1464
  %1466 = vrot.lane.b32.xlu0 %v1073, 56
  %v1467 = vpop.permute.xlu0 %1466
  %v1470 = vsel %vm241, %v1465, 0
  %1472 = vmatpush.msra.mxu0 0.0
  %1473 = vmatpush.msra.mxu0 0.0
  %1474 = vmatpush.msra.mxu0 0.0
  %1475 = vmatpush.msra.mxu0 0.0
  %1476 = vmatpush.msra.mxu0 0.0
  %1477 = vmatpush.msra.mxu0 0.0
  %1478 = vmatpush.msra.mxu0 0.0
  %1479 = vmatpush.msra.mxu0 0.0
  %1480 = vmatpush.msra.mxu0 0.0
  %1481 = vmatpush.msra.mxu0 0.0
  %1482 = vmatpush.msra.mxu0 0.0
  %1483 = vmatpush.msra.mxu0 0.0
  %1484 = vmatpush.msra.mxu0 0.0
  %1485 = vmatpush.msra.mxu0 0.0
  %1486 = vmatpush.msra.mxu0 0.0
  %1487 = vmatpush.msra.mxu0 %v1467
  %1488 = vmatmul.f32.gmra.mxu0 %v1470
  %v1489 = vpop.f32.mrf.mxu0
  %v1490 = vadd.f32 0.0, %v1489
  %1491 = vdwg.mxu0
  %1493 = vrot.lane.b32.xlu0 %v1490, 8
  %v1494 = vpop.permute.xlu0 %1493
  %1496 = vst.msk [vmem:[#allocation2 + $0x8] sm:$0xff] %vm378, %v1494
  %1497 = vrot.lane.b32.xlu0 %v1073, 112
  %v1498 = vpop.permute.xlu0 %1497
  %1499 = vrot.lane.b32.xlu0 %v1073, 80
  %v1500 = vpop.permute.xlu0 %1499
  %v1501 = vsel %vm241, %v1498, 0
  %v1503 = vsel %vm241, %v1500, 0
  %1505 = vmatpush.xpose.msra.mxu0 0.0
  %1506 = vmatpush.xpose.msra.mxu0 0.0
  %1507 = vmatpush.xpose.msra.mxu0 0.0
  %1508 = vmatpush.xpose.msra.mxu0 0.0
  %1509 = vmatpush.xpose.msra.mxu0 0.0
  %1510 = vmatpush.xpose.msra.mxu0 0.0
  %1511 = vmatpush.xpose.msra.mxu0 0.0
  %1512 = vmatpush.xpose.msra.mxu0 0.0
  %1513 = vmatpush.xpose.msra.mxu0 0.0
  %1514 = vmatpush.xpose.msra.mxu0 0.0
  %1515 = vmatpush.xpose.msra.mxu0 0.0
  %1516 = vmatpush.xpose.msra.mxu0 0.0
  %1517 = vmatpush.xpose.msra.mxu0 0.0
  %1518 = vmatpush.xpose.msra.mxu0 0.0
  %1519 = vmatpush.xpose.msra.mxu0 0.0
  %1520 = vmatpush.xpose.msra.mxu0 %v1503
  %1521 = vmatmul.f32.gmra.mxu0 %v1501
  %v1522 = vpop.f32.mrf.mxu0
  %v1523 = vadd.f32 0.0, %v1522
  %1524 = vdwg.mxu0
  %v1525 = vmul.f32 %v1523, 0.35355338
  %v1526 = vadd.f32 %v1525, %v554
  %v1527 = vsel %vm241, %v1526, -inf
  %1528 = vmax.xlane.f32.xlu0 %v1527
  %v1529 = vpop.xlane.xlu0 %1528
  %v1530 = vsub.f32 %v1526, %v1529
  %v1531 = vmul.f32 %v1530, 1.442695
  %v1532 = vpow.pop %v1531
  %v1533 = vsel %vm241, %v1532, 0.0
  %1534 = vadd.xlane.f32.xlu0 %v1533
  %v1535 = vpop.xlane.xlu0 %1534
  %v1536 = vrcp.pop %v1535
  %v1537 = vmul.f32 %v1532, %v1536
  %1538 = vrot.lane.b32.xlu0 %v1073, 48
  %v1539 = vpop.permute.xlu0 %1538
  %v1542 = vsel %vm241, %v1537, 0
  %1544 = vmatpush.msra.mxu0 0.0
  %1545 = vmatpush.msra.mxu0 0.0
  %1546 = vmatpush.msra.mxu0 0.0
  %1547 = vmatpush.msra.mxu0 0.0
  %1548 = vmatpush.msra.mxu0 0.0
  %1549 = vmatpush.msra.mxu0 0.0
  %1550 = vmatpush.msra.mxu0 0.0
  %1551 = vmatpush.msra.mxu0 0.0
  %1552 = vmatpush.msra.mxu0 0.0
  %1553 = vmatpush.msra.mxu0 0.0
  %1554 = vmatpush.msra.mxu0 0.0
  %1555 = vmatpush.msra.mxu0 0.0
  %1556 = vmatpush.msra.mxu0 0.0
  %1557 = vmatpush.msra.mxu0 0.0
  %1558 = vmatpush.msra.mxu0 0.0
  %1559 = vmatpush.msra.mxu0 %v1539
  %1560 = vmatmul.f32.gmra.mxu0 %v1542
  %v1561 = vpop.f32.mrf.mxu0
  %v1562 = vadd.f32 0.0, %v1561
  %1563 = vdwg.mxu0
  %1565 = vrot.lane.b32.xlu0 %v1562, 16
  %v1566 = vpop.permute.xlu0 %1565
  %1568 = vst.msk [vmem:[#allocation2 + $0x8] sm:$0xff] %vm451, %v1566
  %1569 = vrot.lane.b32.xlu0 %v1073, 104
  %v1570 = vpop.permute.xlu0 %1569
  %1571 = vrot.lane.b32.xlu0 %v1073, 72
  %v1572 = vpop.permute.xlu0 %1571
  %v1573 = vsel %vm241, %v1570, 0
  %v1575 = vsel %vm241, %v1572, 0
  %1577 = vmatpush.xpose.msra.mxu0 0.0
  %1578 = vmatpush.xpose.msra.mxu0 0.0
  %1579 = vmatpush.xpose.msra.mxu0 0.0
  %1580 = vmatpush.xpose.msra.mxu0 0.0
  %1581 = vmatpush.xpose.msra.mxu0 0.0
  %1582 = vmatpush.xpose.msra.mxu0 0.0
  %1583 = vmatpush.xpose.msra.mxu0 0.0
  %1584 = vmatpush.xpose.msra.mxu0 0.0
  %1585 = vmatpush.xpose.msra.mxu0 0.0
  %1586 = vmatpush.xpose.msra.mxu0 0.0
  %1587 = vmatpush.xpose.msra.mxu0 0.0
  %1588 = vmatpush.xpose.msra.mxu0 0.0
  %1589 = vmatpush.xpose.msra.mxu0 0.0
  %1590 = vmatpush.xpose.msra.mxu0 0.0
  %1591 = vmatpush.xpose.msra.mxu0 0.0
  %1592 = vmatpush.xpose.msra.mxu0 %v1575
  %1593 = vmatmul.f32.gmra.mxu0 %v1573
  %v1594 = vpop.f32.mrf.mxu0
  %v1595 = vadd.f32 0.0, %v1594
  %1596 = vdwg.mxu0
  %v1597 = vmul.f32 %v1595, 0.35355338
  %v1598 = vadd.f32 %v1597, %v554
  %v1599 = vsel %vm241, %v1598, -inf
  %1600 = vmax.xlane.f32.xlu0 %v1599
  %v1601 = vpop.xlane.xlu0 %1600
  %v1602 = vsub.f32 %v1598, %v1601
  %v1603 = vmul.f32 %v1602, 1.442695
  %v1604 = vpow.pop %v1603
  %v1605 = vsel %vm241, %v1604, 0.0
  %1606 = vadd.xlane.f32.xlu0 %v1605
  %v1607 = vpop.xlane.xlu0 %1606
  %v1608 = vrcp.pop %v1607
  %v1609 = vmul.f32 %v1604, %v1608
  %1610 = vrot.lane.b32.xlu0 %v1073, 40
  %v1611 = vpop.permute.xlu0 %1610
  %v1614 = vsel %vm241, %v1609, 0
  %1616 = vmatpush.msra.mxu0 0.0
  %1617 = vmatpush.msra.mxu0 0.0
  %1618 = vmatpush.msra.mxu0 0.0
  %1619 = vmatpush.msra.mxu0 0.0
  %1620 = vmatpush.msra.mxu0 0.0
  %1621 = vmatpush.msra.mxu0 0.0
  %1622 = vmatpush.msra.mxu0 0.0
  %1623 = vmatpush.msra.mxu0 0.0
  %1624 = vmatpush.msra.mxu0 0.0
  %1625 = vmatpush.msra.mxu0 0.0
  %1626 = vmatpush.msra.mxu0 0.0
  %1627 = vmatpush.msra.mxu0 0.0
  %1628 = vmatpush.msra.mxu0 0.0
  %1629 = vmatpush.msra.mxu0 0.0
  %1630 = vmatpush.msra.mxu0 0.0
  %1631 = vmatpush.msra.mxu0 %v1611
  %1632 = vmatmul.f32.gmra.mxu0 %v1614
  %v1633 = vpop.f32.mrf.mxu0
  %v1634 = vadd.f32 0.0, %v1633
  %1635 = vdwg.mxu0
  %1637 = vrot.lane.b32.xlu0 %v1634, 24
  %v1638 = vpop.permute.xlu0 %1637
  %1640 = vst.msk [vmem:[#allocation2 + $0x8] sm:$0xff] %vm524, %v1638
  %v1641 = vld [vmem:[#allocation2] sm:$0xff]
  %v1642 = vld [vmem:[#allocation2 + $0x8] sm:$0xff]
  %v1644 = vsel %vm208, %v1641, 0
  %v1647 = vsel %vm208, %v1642, 0
  %1649 = vmatpush.msra.mxu0 0.0
  %1650 = vmatpush.msra.mxu0 0.0
  %1651 = vmatpush.msra.mxu0 0.0
  %1652 = vmatpush.msra.mxu0 0.0
  %1653 = vmatpush.msra.mxu0 0.0
  %1654 = vmatpush.msra.mxu0 0.0
  %1655 = vmatpush.msra.mxu0 0.0
  %1656 = vmatpush.msra.mxu0 0.0
  %1657 = vmatpush.msra.mxu0 0.0
  %1658 = vmatpush.msra.mxu0 0.0
  %1659 = vmatpush.msra.mxu0 0.0
  %1660 = vmatpush.msra.mxu0 0.0
  %1661 = vmatpush.msra.mxu0 %v185
  %1662 = vmatpush.msra.mxu0 %v184
  %1663 = vmatpush.msra.mxu0 %v183
  %1664 = vmatpush.msra.mxu0 %v182
  %1665 = vmatmul.f32.gmra.mxu0 %v1644
  %v1666 = vpop.f32.mrf.mxu0
  %v1667 = vadd.f32 %v813, %v1666
  %1668 = vmatmul.f32.gmra.mxu0 %v1647
  %v1669 = vpop.f32.mrf.mxu0
  %v1670 = vadd.f32 %v813, %v1669
  %1671 = vdwg.mxu0
  %v1672 = vadd.f32 %v1667, %v1044
  %v1673 = vadd.f32 %v1670, %v1045
  %v1674 = vsel %vm208, %v1672, 0.0
  %1675 = vadd.xlane.f32.xlu0 %v1674
  %v1676 = vpop.xlane.xlu0 %1675
  %v1677 = vsel %vm208, %v1673, 0.0
  %1678 = vadd.xlane.f32.xlu0 %v1677
  %v1679 = vpop.xlane.xlu0 %1678
  %v1680 = vmul.f32 %v1676, %v858
  %v1681 = vmul.f32 %v1679, %v858
  %v1682 = vsub.f32 %v1672, %v1680
  %v1683 = vsub.f32 %v1673, %v1681
  %v1684 = vmul.f32 %v1682, %v1682
  %v1685 = vmul.f32 %v1683, %v1683
  %v1686 = vsel %vm208, %v1684, 0.0
  %1687 = vadd.xlane.f32.xlu0 %v1686
  %v1688 = vpop.xlane.xlu0 %1687
  %v1689 = vsel %vm208, %v1685, 0.0
  %1690 = vadd.xlane.f32.xlu0 %v1689
  %v1691 = vpop.xlane.xlu0 %1690
  %v1692 = vmul.f32 %v1688, %v858
  %v1693 = vmul.f32 %v1691, %v858
  %v1694 = vadd.f32 %v1692, 1e-12
  %v1695 = vadd.f32 %v1693, 1e-12
  %v1696 = vrsqrt.pop %v1694
  %v1697 = vmul.f32 %v1696, %v1694
  %v1698 = vmul.f32 %v1697, %v1696
  %v1699 = vmul.f32 0.5, %v1698
  %v1700 = vsub.f32 1.5, %v1699
  %v1701 = vmul.f32 %v1696, %v1700
  %vm1702 = vweird.f32 %v1694
  %vm1703 = vweird.f32 %v1696
  %vm1704 = vmor %vm1702, %vm1703
  %v1705 = vsel %vm1704, %v1696, %v1701
  %v1706 = vrsqrt.pop %v1695
  %v1707 = vmul.f32 %v1706, %v1695
  %v1708 = vmul.f32 %v1707, %v1706
  %v1709 = vmul.f32 0.5, %v1708
  %v1710 = vsub.f32 1.5, %v1709
  %v1711 = vmul.f32 %v1706, %v1710
  %vm1712 = vweird.f32 %v1695
  %vm1713 = vweird.f32 %v1706
  %vm1714 = vmor %vm1712, %vm1713
  %v1715 = vsel %vm1714, %v1706, %v1711
  %v1716 = vmul.f32 %v1682, %v1705
  %v1717 = vmul.f32 %v1683, %v1715
  %v1718 = vmul.f32 %v1716, %v898
  %v1719 = vmul.f32 %v1717, %v898
  %v1720 = vadd.f32 %v1718, %v903
  %v1721 = vadd.f32 %v1719, %v903
  %v1723 = vsel %vm208, %v1720, 0
  %v1726 = vsel %vm208, %v1721, 0
  %1728 = vmatpush.msra.mxu0 0.0
  %1729 = vmatpush.msra.mxu0 0.0
  %1730 = vmatpush.msra.mxu0 0.0
  %1731 = vmatpush.msra.mxu0 0.0
  %1732 = vmatpush.msra.mxu0 0.0
  %1733 = vmatpush.msra.mxu0 0.0
  %1734 = vmatpush.msra.mxu0 0.0
  %1735 = vmatpush.msra.mxu0 0.0
  %1736 = vmatpush.msra.mxu0 0.0
  %1737 = vmatpush.msra.mxu0 0.0
  %1738 = vmatpush.msra.mxu0 0.0
  %1739 = vmatpush.msra.mxu0 0.0
  %1740 = vmatpush.msra.mxu0 %v192
  %1741 = vmatpush.msra.mxu0 %v191
  %1742 = vmatpush.msra.mxu0 %v190
  %1743 = vmatpush.msra.mxu0 %v189
  %1744 = vmatmul.f32.gmra.mxu0 %v1723
  %v1745 = vpop.f32.mrf.mxu0
  %v1746 = vadd.f32 %v908, %v1745
  %1747 = vmatmul.f32.gmra.mxu0 %v1726
  %v1748 = vpop.f32.mrf.mxu0
  %v1749 = vadd.f32 %v908, %v1748
  %1750 = vdwg.mxu0
  %v1751 = vmul.f32 %v1746, 0.5
  %v1752 = vmul.f32 %v1749, 0.5
  %v1753 = vmul.f32 %v1746, 0.044715
  %v1754 = vmul.f32 %v1749, 0.044715
  %v1755 = vmul.f32 %v1753, %v1746
  %v1756 = vmul.f32 %v1754, %v1749
  %v1757 = vmul.f32 %v1755, %v1746
  %v1758 = vmul.f32 %v1756, %v1749
  %v1759 = vadd.f32 %v1746, %v1757
  %v1760 = vadd.f32 %v1749, %v1758
  %v1761 = vmul.f32 %v1759, 0.7978846
  %v1762 = vmul.f32 %v1760, 0.7978846
  %v1763 = vtanh.pop %v1761
  %v1764 = vtanh.pop %v1762
  %v1765 = vadd.f32 %v1763, 1.0
  %v1766 = vadd.f32 %v1764, 1.0
  %v1767 = vmul.f32 %v1751, %v1765
  %v1768 = vmul.f32 %v1752, %v1766
  %v1770 = vsel %vm960, %v1767, 0
  %v1773 = vsel %vm960, %v1768, 0
  %1775 = vmatpush.msra.mxu0 0.0
  %1776 = vmatpush.msra.mxu0 0.0
  %1777 = vmatpush.msra.mxu0 0.0
  %1778 = vmatpush.msra.mxu0 0.0
  %1779 = vmatpush.msra.mxu0 0.0
  %1780 = vmatpush.msra.mxu0 0.0
  %1781 = vmatpush.msra.mxu0 0.0
  %1782 = vmatpush.msra.mxu0 0.0
  %1783 = vmatpush.msra.mxu0 %v201
  %1784 = vmatpush.msra.mxu0 %v200
  %1785 = vmatpush.msra.mxu0 %v199
  %1786 = vmatpush.msra.mxu0 %v198
  %1787 = vmatpush.msra.mxu0 %v197
  %1788 = vmatpush.msra.mxu0 %v196
  %1789 = vmatpush.msra.mxu0 %v195
  %1790 = vmatpush.msra.mxu0 %v194
  %1791 = vmatmul.f32.gmra.mxu0 %v1770
  %v1792 = vpop.f32.mrf.mxu0
  %v1793 = vadd.f32 %v958, %v1792
  %1794 = vmatmul.f32.gmra.mxu0 %v1773
  %v1795 = vpop.f32.mrf.mxu0
  %v1796 = vadd.f32 %v958, %v1795
  %1797 = vdwg.mxu0
  %v1798 = vadd.f32 %v1793, %v1720
  %v1799 = vadd.f32 %v1796, %v1721
  %v1800 = vsel %vm208, %v1798, 0.0
  %1801 = vadd.xlane.f32.xlu0 %v1800
  %v1802 = vpop.xlane.xlu0 %1801
  %v1803 = vsel %vm208, %v1799, 0.0
  %1804 = vadd.xlane.f32.xlu0 %v1803
  %v1805 = vpop.xlane.xlu0 %1804
  %v1806 = vmul.f32 %v1802, %v858
  %v1807 = vmul.f32 %v1805, %v858
  %v1808 = vsub.f32 %v1798, %v1806
  %v1809 = vsub.f32 %v1799, %v1807
  %v1810 = vmul.f32 %v1808, %v1808
  %v1811 = vmul.f32 %v1809, %v1809
  %v1812 = vsel %vm208, %v1810, 0.0
  %1813 = vadd.xlane.f32.xlu0 %v1812
  %v1814 = vpop.xlane.xlu0 %1813
  %v1815 = vsel %vm208, %v1811, 0.0
  %1816 = vadd.xlane.f32.xlu0 %v1815
  %v1817 = vpop.xlane.xlu0 %1816
  %v1818 = vmul.f32 %v1814, %v858
  %v1819 = vmul.f32 %v1817, %v858
  %v1820 = vadd.f32 %v1818, 1e-12
  %v1821 = vadd.f32 %v1819, 1e-12
  %v1822 = vrsqrt.pop %v1820
  %v1823 = vmul.f32 %v1822, %v1820
  %v1824 = vmul.f32 %v1823, %v1822
  %v1825 = vmul.f32 0.5, %v1824
  %v1826 = vsub.f32 1.5, %v1825
  %v1827 = vmul.f32 %v1822, %v1826
  %vm1828 = vweird.f32 %v1820
  %vm1829 = vweird.f32 %v1822
  %vm1830 = vmor %vm1828, %vm1829
  %v1831 = vsel %vm1830, %v1822, %v1827
  %v1832 = vrsqrt.pop %v1821
  %v1833 = vmul.f32 %v1832, %v1821
  %v1834 = vmul.f32 %v1833, %v1832
  %v1835 = vmul.f32 0.5, %v1834
  %v1836 = vsub.f32 1.5, %v1835
  %v1837 = vmul.f32 %v1832, %v1836
  %vm1838 = vweird.f32 %v1821
  %vm1839 = vweird.f32 %v1832
  %vm1840 = vmor %vm1838, %vm1839
  %v1841 = vsel %vm1840, %v1832, %v1837
  %v1842 = vmul.f32 %v1808, %v1831
  %v1843 = vmul.f32 %v1809, %v1841
  %v1844 = vmul.f32 %v1842, %v1037
  %v1845 = vmul.f32 %v1843, %v1037
  %v1846 = vadd.f32 %v1844, %v1042
  %v1847 = vadd.f32 %v1845, %v1042
  %v1848 = vld [vmem:[%s18] sm:$0xff]
  %v1849 = vld [vmem:[%s18 + $0x8] sm:$0xff]
  %v1850 = vld [vmem:[%s18 + $0x10] sm:$0xff]
  %v1851 = vld [vmem:[%s18 + $0x18] sm:$0xff]
  %v1852 = vld [vmem:[%s19] sm:$0x1]
  %v1853 = vld [vmem:[%s20] sm:$0x1]
  %v1854 = vld [vmem:[#allocation3] sm:$0x1]
  %v1856 = vsel %vm208, %v1846, 0
  %1858 = vmatpush.msra.mxu0 0.0
  %1859 = vmatpush.msra.mxu0 0.0
  %1860 = vmatpush.msra.mxu0 0.0
  %1861 = vmatpush.msra.mxu0 0.0
  %1862 = vmatpush.msra.mxu0 0.0
  %1863 = vmatpush.msra.mxu0 0.0
  %1864 = vmatpush.msra.mxu0 0.0
  %1865 = vmatpush.msra.mxu0 0.0
  %1866 = vmatpush.msra.mxu0 0.0
  %1867 = vmatpush.msra.mxu0 0.0
  %1868 = vmatpush.msra.mxu0 0.0
  %1869 = vmatpush.msra.mxu0 0.0
  %1870 = vmatpush.msra.mxu0 %v1851
  %1871 = vmatpush.msra.mxu0 %v1850
  %1872 = vmatpush.msra.mxu0 %v1849
  %1873 = vmatpush.msra.mxu0 %v1848
  %1874 = vmatmul.f32.gmra.mxu0 %v1856
  %v1875 = vpop.f32.mrf.mxu0
  %v1876 = vadd.f32 %v1852, %v1875
  %1877 = vdwg.mxu0
  %v1878 = vtanh.pop %v1876
  %v1879 = vmul.f32 %v1878, %v1853
  %vm1880 = vcmask 253952
  %v1881 = vsel %vm1880, %v1879, 0.0
  %1882 = vadd.xlane.f32.xlu0 %v1881
  %v1883 = vpop.xlane.xlu0 %1882
  %v1884 = vadd.f32 %v1883, %v1854
  %vm1885 = vcmask 0
  %1886 = vst.msk [vmem:[%s22] sm:$0x1] %vm1885, %v1884
  %v1888 = vsel %vm208, %v1847, 0
  %1890 = vmatpush.msra.mxu0 0.0
  %1891 = vmatpush.msra.mxu0 0.0
  %1892 = vmatpush.msra.mxu0 0.0
  %1893 = vmatpush.msra.mxu0 0.0
  %1894 = vmatpush.msra.mxu0 0.0
  %1895 = vmatpush.msra.mxu0 0.0
  %1896 = vmatpush.msra.mxu0 0.0
  %1897 = vmatpush.msra.mxu0 0.0
  %1898 = vmatpush.msra.mxu0 0.0
  %1899 = vmatpush.msra.mxu0 0.0
  %1900 = vmatpush.msra.mxu0 0.0
  %1901 = vmatpush.msra.mxu0 0.0
  %1902 = vmatpush.msra.mxu0 %v1851
  %1903 = vmatpush.msra.mxu0 %v1850
  %1904 = vmatpush.msra.mxu0 %v1849
  %1905 = vmatpush.msra.mxu0 %v1848
  %1906 = vmatmul.f32.gmra.mxu0 %v1888
  %v1907 = vpop.f32.mrf.mxu0
  %v1908 = vadd.f32 %v1852, %v1907
  %1909 = vdwg.mxu0
  %v1910 = vtanh.pop %v1908
  %v1911 = vmul.f32 %v1910, %v1853
  %v1912 = vsel %vm1880, %v1911, 0.0
  %1913 = vadd.xlane.f32.xlu0 %v1912
  %v1914 = vpop.xlane.xlu0 %1913
  %v1915 = vadd.f32 %v1914, %v1854
  %1916 = vst.msk [vmem:[%s22 + $0x1] sm:$0x1] %vm1885, %v1915
  // Predicated region
  $region90: #{pair_model_forward.1} parent=0 // pred_check
    _
  $region91: #{pair_model_forward.1} parent=0 // pred_check_branch
    %1918 = sbr.rel (0) target = $region93
  $region92: #{pair_model_forward.1} parent=0 // pred_region
    _
  $region93: #{pair_model_forward.1} parent=0 // pred_fallthru
    _
  // Predicated region
  $region94: #{pair_model_forward.1} parent=0 // pred_check
    _
  $region95: #{pair_model_forward.1} parent=0 // pred_check_branch
    %1920 = sbr.rel (0) target = $region97
  $region96: #{pair_model_forward.1} parent=0 // pred_region
    _
  $region97: #{pair_model_forward.1} parent=0 // pred_fallthru
    _

</llo_original>
